<compile_context>
chip_gen: v6e
topology: v6e:2x2x1
jax: 0.10.0
libtpu: 0.0.40
codegen_flags: <defaults>
</compile_context>

<pallas_src>
import functools
import math

import numpy as np
import jax
import jax.numpy as jnp
from jax.experimental import pallas as pl
from jax.experimental.pallas import tpu as pltpu

SPATIAL = 7
TOKENS = SPATIAL * SPATIAL
LN_EPS = 1e-5
BN_EPS = 1e-5


# ---------------------------------------------------------------------------
# Constant 3x3 shift matrices (encode padding=1); built once on the host.
# Tap index t = ky*3 + kx, offset (dy, dx) = (ky-1, kx-1), matching the
# conv-weight tap ordering below.
# ---------------------------------------------------------------------------
def _make_shift_mats(side):
    n = side * side
    mats = np.zeros((9, n, n), np.float32)
    offsets = [(dy, dx) for dy in (-1, 0, 1) for dx in (-1, 0, 1)]
    for t, (dy, dx) in enumerate(offsets):
        for y in range(side):
            for x in range(side):
                sy, sx = y + dy, x + dx
                if 0 <= sy < side and 0 <= sx < side:
                    mats[t, y * side + x, sy * side + sx] = 1.0
    return jnp.asarray(mats)


# ---------------------------------------------------------------------------
# Fused Gate kernel: one grid step == one batch element, all in VMEM.
# ---------------------------------------------------------------------------
def _gate_kernel(h, d_k,
                 obs_ref, instr_ref,
                 wq_ref, bq_ref, wk_ref, bk_ref, wv_ref, bv_ref, wo_ref, bo_ref,
                 lnw_ref, lnb_ref, smat_ref, wtap_ref, btap_ref,
                 out_ref):
    f32 = jnp.float32
    obs = obs_ref[...]                      # [T, C]  query tokens (7x7 flattened)
    ins = instr_ref[...]                    # [L, C]  key/value tokens
    T, C = obs.shape
    c_out = out_ref.shape[-1]

    # ---- multi-head attention: Q/K/V projections (MXU) --------------------
    q = jnp.dot(obs, wq_ref[...], preferred_element_type=f32) + bq_ref[...]
    k = jnp.dot(ins, wk_ref[...], preferred_element_type=f32) + bk_ref[...]
    v = jnp.dot(ins, wv_ref[...], preferred_element_type=f32) + bv_ref[...]

    wo = wo_ref[...]
    inv_sqrt_dk = 1.0 / math.sqrt(d_k)

    # Per-head attention; the output projection is accumulated per head
    # (concat_h(o_h) @ Wo == sum_h o_h @ Wo[h*d_k:(h+1)*d_k, :]) which avoids
    # any in-kernel concatenation along the lane axis.
    proj = jnp.zeros((T, C), f32)
    for i in range(h):                      # h is a small static int -> unrolled
        lo, hi = i * d_k, (i + 1) * d_k
        qh, kh, vh = q[:, lo:hi], k[:, lo:hi], v[:, lo:hi]
        s = jnp.einsum("qd,kd->qk", qh, kh, preferred_element_type=f32) * inv_sqrt_dk
        s = s - jnp.max(s, axis=-1, keepdims=True)               # stable softmax
        p = jnp.exp(s)
        p = p * pl.reciprocal(jnp.sum(p, axis=-1, keepdims=True), approx=True)
        # TODO(synk): attention nn.Dropout(p=0.1) treated as identity (eval mode).
        oh = jnp.dot(p, vh, preferred_element_type=f32)           # [T, d_k]
        proj = proj + jnp.dot(oh, wo[lo:hi, :], preferred_element_type=f32)
    proj = proj + bo_ref[...]

    # ---- LayerNorm over the whole [7,7,C] slab of this batch element ------
    n_elems = float(T * C)
    mu = jnp.sum(jnp.sum(proj, axis=0, keepdims=True), axis=1, keepdims=True) / n_elems
    cen = proj - mu
    var = jnp.sum(jnp.sum(cen * cen, axis=0, keepdims=True), axis=1, keepdims=True) / n_elems
    y = cen * jax.lax.rsqrt(var + LN_EPS)
    y = y * lnw_ref[...] + lnb_ref[...]

    # ---- residual ----------------------------------------------------------
    x = y + obs                                                   # [T, C]

    # ---- transition: 3x3 pad-1 conv (+ folded eval-mode BatchNorm) + ReLU --
    # TODO(synk): BatchNorm2d training-mode batch statistics not implemented;
    # eval-mode running stats are folded into wtap/btap outside the kernel.
    acc = jnp.zeros((T, c_out), f32)
    for t in range(9):                                            # static tap loop
        xs = jnp.dot(smat_ref[t], x, preferred_element_type=f32)  # spatially shifted rows
        acc = acc + jnp.dot(xs, wtap_ref[t], preferred_element_type=f32)
    acc = jnp.maximum(acc + btap_ref[...], 0.0)

    out_ref[...] = acc                                            # [T, C_out]


def _gate_pallas(obs_flat, instr, prep, h):
    B, T, C = obs_flat.shape
    L = instr.shape[1]
    c_out = prep["wtap"].shape[-1]
    d_k = C // h

    per_batch = lambda b: (b, 0, 0)
    rep2 = lambda b: (0, 0)
    rep3 = lambda b: (0, 0, 0)

    flops_per_b = (
        2 * T * C * C                                  # Q projection
        + 2 * 2 * L * C * C                            # K, V projections
        + h * (4 * T * L * d_k + 2 * T * d_k * C)      # scores, P@V, out-proj
        + 9 * (2 * T * T * C + 2 * T * C * c_out)      # conv shift taps
    )
    cost = pl.CostEstimate(
        flops=B * flops_per_b,
        transcendentals=B * (h * T * L + 2),
        bytes_accessed=4 * (obs_flat.size + instr.size + B * T * c_out
                            + 4 * C * C + 4 * C + 2 * T * C
                            + 9 * T * T + 9 * C * c_out + c_out),
    )

    return pl.pallas_call(
        functools.partial(_gate_kernel, h, d_k),
        out_shape=jax.ShapeDtypeStruct((B, T, c_out), jnp.float32),
        grid=(B,),
        in_specs=[
            pl.BlockSpec((None, T, C), per_batch),     # obs tokens (per batch)
            pl.BlockSpec((None, L, C), per_batch),     # instr tokens (per batch)
            pl.BlockSpec((C, C), rep2),                # Wq
            pl.BlockSpec((1, C), rep2),                # bq
            pl.BlockSpec((C, C), rep2),                # Wk
            pl.BlockSpec((1, C), rep2),                # bk
            pl.BlockSpec((C, C), rep2),                # Wv
            pl.BlockSpec((1, C), rep2),                # bv
            pl.BlockSpec((C, C), rep2),                # Wo
            pl.BlockSpec((1, C), rep2),                # bo
            pl.BlockSpec((T, C), rep2),                # LayerNorm weight [49, C]
            pl.BlockSpec((T, C), rep2),                # LayerNorm bias   [49, C]
            pl.BlockSpec((9, T, T), rep3),             # conv shift matrices
            pl.BlockSpec((9, C, c_out), rep3),         # conv taps (BN scale folded)
            pl.BlockSpec((1, c_out), rep2),            # conv + BN bias
        ],
        out_specs=pl.BlockSpec((None, T, c_out), per_batch),
        compiler_params=pltpu.CompilerParams(dimension_semantics=("parallel",)),
        cost_estimate=cost,
    )(obs_flat, instr,
      prep["wq"], prep["bq"], prep["wk"], prep["bk"],
      prep["wv"], prep["bv"], prep["wo"], prep["bo"],
      prep["ln_w"], prep["ln_b"], prep["smat"], prep["wtap"], prep["btap"])


def gate_forward(obs, instr, prep, *, h):
    """obs: [B, 7, 7, C] (query), instr: [B, L, C] (key/value) -> [B, C_out, 7, 7]."""
    B, H, W, C = obs.shape
    assert (H, W) == (SPATIAL, SPATIAL)
    obs_flat = obs.reshape(B, H * W, C)                 # free, row-major
    out = _gate_pallas(obs_flat, instr, prep, h)        # [B, 49, C_out]
    # Final NHWC->NCHW permute of the tiny output left to XLA (~12 KB).
    return jnp.transpose(out, (0, 2, 1)).reshape(B, out.shape[-1], H, W)


# ---------------------------------------------------------------------------
# Parameter handling (PyTorch layouts -> kernel-ready, done ONCE off the hot path)
# ---------------------------------------------------------------------------
def prepare_gate_params(raw):
    c_out, c_in, _, _ = raw["conv_w"].shape
    scale = raw["bn_g"] / jnp.sqrt(raw["bn_v"] + BN_EPS)              # [C_out]
    shift = raw["bn_b"] + (raw["conv_b"] - raw["bn_m"]) * scale       # [C_out]
    # taps: [kh, kw, C_in, C_out] -> [9, C_in, C_out], BN scale folded per out-channel
    wtap = (jnp.transpose(raw["conv_w"], (2, 3, 1, 0)).reshape(9, c_in, c_out)
            * scale[None, None, :])
    prep = {
        "wq": raw["wq"].T, "bq": raw["bq"][None, :],
        "wk": raw["wk"].T, "bk": raw["bk"][None, :],
        "wv": raw["wv"].T, "bv": raw["bv"][None, :],
        "wo": raw["wo"].T, "bo": raw["bo"][None, :],
        "ln_w": raw["ln_w"].reshape(TOKENS, -1),
        "ln_b": raw["ln_b"].reshape(TOKENS, -1),
        "smat": _make_shift_mats(SPATIAL),
        "wtap": wtap,
        "btap": shift[None, :],
    }
    return {k: jnp.asarray(v, jnp.float32) for k, v in prep.items()}


def init_gate_params(key, h, in_channels, out_channels):
    assert out_channels % h == 0
    # Gate's Conv2d/BatchNorm2d only type-check when in_channels == out_channels
    # (the conv consumes the attention+residual map, which has out_channels).
    assert in_channels == out_channels
    C = out_channels
    kq, kk, kv, ko, kc = jax.random.split(key, 5)

    def uniform_init(k, fan_in, w_shape, b_shape):
        kw, kb = jax.random.split(k)
        bound = 1.0 / math.sqrt(fan_in)
        return (jax.random.uniform(kw, w_shape, jnp.float32, -bound, bound),
                jax.random.uniform(kb, b_shape, jnp.float32, -bound, bound))

    raw = {}
    for name, k in zip("qkvo", (kq, kk, kv, ko)):
        raw[f"w{name}"], raw[f"b{name}"] = uniform_init(k, C, (C, C), (C,))
    raw["ln_w"] = jnp.ones((SPATIAL, SPATIAL, C), jnp.float32)
    raw["ln_b"] = jnp.zeros((SPATIAL, SPATIAL, C), jnp.float32)
    raw["conv_w"], raw["conv_b"] = uniform_init(
        kc, in_channels * 9, (out_channels, in_channels, 3, 3), (out_channels,))
    raw["bn_g"] = jnp.ones((out_channels,), jnp.float32)
    raw["bn_b"] = jnp.zeros((out_channels,), jnp.float32)
    raw["bn_m"] = jnp.zeros((out_channels,), jnp.float32)   # eval-mode running stats
    raw["bn_v"] = jnp.ones((out_channels,), jnp.float32)
    return raw


# ---------------------------------------------------------------------------
# Pure-JAX reference (eval-mode PyTorch semantics) for a correctness check.
# ---------------------------------------------------------------------------
def gate_reference(obs, instr, raw, h):
    B, H, W, C = obs.shape
    d_k = C // h

    def linear(x, w, b):                      # PyTorch Linear: x @ W^T + b
        return x @ w.T + b

    def split(x):
        return x.reshape(B, -1, h, d_k).transpose(0, 2, 1, 3)

    q = split(linear(obs.reshape(B, -1, C), raw["wq"], raw["bq"]))
    k = split(linear(instr, raw["wk"], raw["bk"]))
    v = split(linear(instr, raw["wv"], raw["bv"]))
    scores = jnp.einsum("bhqd,bhkd->bhqk", q, k) / math.sqrt(d_k)
    p = jax.nn.softmax(scores, axis=-1)
    ctx = jnp.einsum("bhqk,bhkd->bhqd", p, v).transpose(0, 2, 1, 3).reshape(B, -1, C)
    x = linear(ctx, raw["wo"], raw["bo"]).reshape(B, H, W, C)

    mu = x.mean(axis=(1, 2, 3), keepdims=True)
    var = ((x - mu) ** 2).mean(axis=(1, 2, 3), keepdims=True)
    x = (x - mu) / jnp.sqrt(var + LN_EPS) * raw["ln_w"] + raw["ln_b"]
    x = (x + obs).transpose(0, 3, 1, 2)                           # NCHW

    y = jax.lax.conv_general_dilated(
        x, raw["conv_w"], window_strides=(1, 1), padding=((1, 1), (1, 1)),
        dimension_numbers=("NCHW", "OIHW", "NCHW"))
    y = y + raw["conv_b"][None, :, None, None]
    scale = raw["bn_g"] / jnp.sqrt(raw["bn_v"] + BN_EPS)
    y = (y - raw["bn_m"][None, :, None, None]) * scale[None, :, None, None] \
        + raw["bn_b"][None, :, None, None]
    return jnp.maximum(y, 0.0)


if __name__ == "__main__":
    key = jax.random.PRNGKey(0)
    pkey, okey, ikey = jax.random.split(key, 3)

    h = 4
    in_channels = out_channels = 32        # attention d_model == conv channels
    batch, instr_len = 2, 8

    raw = init_gate_params(pkey, h, in_channels, out_channels)
    prep = prepare_gate_params(raw)

    obs = jax.random.normal(okey, (batch, SPATIAL, SPATIAL, out_channels), jnp.float32)
    instr = jax.random.normal(ikey, (batch, instr_len, out_channels), jnp.float32)

    fwd = jax.jit(gate_forward, static_argnames=("h",))
    out = jax.block_until_ready(fwd(obs, instr, prep, h=h))

    assert out.shape == (batch, out_channels, SPATIAL, SPATIAL), out.shape
    assert bool(jnp.all(jnp.isfinite(out)))
    assert bool(jnp.all(out >= 0.0))       # final ReLU

    # Correctness check vs. a pure-JAX reference (loose tol because the kernel
    # softmax uses the EUP approximate reciprocal; real bugs would be O(1)).
    ref = gate_reference(obs, instr, raw, h)
    err = float(jnp.max(jnp.abs(out - ref)))
    assert err < 5e-2, f"max |kernel - reference| = {err}"

    print("KERNEL_OK")
</pallas_src>

<mosaic_0001>
module attributes {stable_mosaic.version = 11 : i64} {
  func.func @_gate_kernel(%arg0: i32, %arg1: memref<1x49x32xf32, #tpu.memory_space<vmem>>, %arg2: memref<1x8x32xf32, #tpu.memory_space<vmem>>, %arg3: memref<32x32xf32, #tpu.memory_space<vmem>>, %arg4: memref<1x32xf32, #tpu.memory_space<vmem>>, %arg5: memref<32x32xf32, #tpu.memory_space<vmem>>, %arg6: memref<1x32xf32, #tpu.memory_space<vmem>>, %arg7: memref<32x32xf32, #tpu.memory_space<vmem>>, %arg8: memref<1x32xf32, #tpu.memory_space<vmem>>, %arg9: memref<32x32xf32, #tpu.memory_space<vmem>>, %arg10: memref<1x32xf32, #tpu.memory_space<vmem>>, %arg11: memref<49x32xf32, #tpu.memory_space<vmem>>, %arg12: memref<49x32xf32, #tpu.memory_space<vmem>>, %arg13: memref<9x49x49xf32, #tpu.memory_space<vmem>>, %arg14: memref<9x32x32xf32, #tpu.memory_space<vmem>>, %arg15: memref<1x32xf32, #tpu.memory_space<vmem>>, %arg16: memref<1x49x32xf32, #tpu.memory_space<vmem>>) attributes {dimension_semantics = [#tpu.dimension_semantics<parallel>], iteration_bounds = array<i64: 2>, scalar_prefetch = 0 : i64, scratch_operands = 0 : i64, tpu.core_type = #tpu.core_type<tc>, window_params = [{transform_indices = @transform_0, window_bounds = array<i64: 1, 49, 32>}, {transform_indices = @transform_1, window_bounds = array<i64: 1, 8, 32>}, {pipeline_mode = #tpu.pipeline_mode<synchronous>, transform_indices = @transform_2, window_bounds = array<i64: 32, 32>}, {pipeline_mode = #tpu.pipeline_mode<synchronous>, transform_indices = @transform_3, window_bounds = array<i64: 1, 32>}, {pipeline_mode = #tpu.pipeline_mode<synchronous>, transform_indices = @transform_4, window_bounds = array<i64: 32, 32>}, {pipeline_mode = #tpu.pipeline_mode<synchronous>, transform_indices = @transform_5, window_bounds = array<i64: 1, 32>}, {pipeline_mode = #tpu.pipeline_mode<synchronous>, transform_indices = @transform_6, window_bounds = array<i64: 32, 32>}, {pipeline_mode = #tpu.pipeline_mode<synchronous>, transform_indices = @transform_7, window_bounds = array<i64: 1, 32>}, {pipeline_mode = #tpu.pipeline_mode<synchronous>, transform_indices = @transform_8, window_bounds = array<i64: 32, 32>}, {pipeline_mode = #tpu.pipeline_mode<synchronous>, transform_indices = @transform_9, window_bounds = array<i64: 1, 32>}, {pipeline_mode = #tpu.pipeline_mode<synchronous>, transform_indices = @transform_10, window_bounds = array<i64: 49, 32>}, {pipeline_mode = #tpu.pipeline_mode<synchronous>, transform_indices = @transform_11, window_bounds = array<i64: 49, 32>}, {pipeline_mode = #tpu.pipeline_mode<synchronous>, transform_indices = @transform_12, window_bounds = array<i64: 9, 49, 49>}, {pipeline_mode = #tpu.pipeline_mode<synchronous>, transform_indices = @transform_13, window_bounds = array<i64: 9, 32, 32>}, {pipeline_mode = #tpu.pipeline_mode<synchronous>, transform_indices = @transform_14, window_bounds = array<i64: 1, 32>}, {transform_indices = @transform_15, window_bounds = array<i64: 1, 49, 32>}]} {
    %c0 = arith.constant 0 : index
    %c0_0 = arith.constant 0 : index
    %c0_1 = arith.constant 0 : index
    %0 = vector.load %arg1[%c0, %c0_0, %c0_1] : memref<1x49x32xf32, #tpu.memory_space<vmem>>, vector<1x49x32xf32>
    %1 = vector.shape_cast %0 : vector<1x49x32xf32> to vector<49x32xf32>
    %c0_2 = arith.constant 0 : index
    %c0_3 = arith.constant 0 : index
    %c0_4 = arith.constant 0 : index
    %2 = vector.load %arg2[%c0_2, %c0_3, %c0_4] : memref<1x8x32xf32, #tpu.memory_space<vmem>>, vector<1x8x32xf32>
    %3 = vector.shape_cast %2 : vector<1x8x32xf32> to vector<8x32xf32>
    %c0_5 = arith.constant 0 : index
    %c0_6 = arith.constant 0 : index
    %4 = vector.load %arg3[%c0_5, %c0_6] : memref<32x32xf32, #tpu.memory_space<vmem>>, vector<32x32xf32>
    %cst = arith.constant dense<0.000000e+00> : vector<49x32xf32>
    %5 = tpu.matmul %1, %4, %cst {dimension_numbers = #tpu.dot_dimension_numbers<[1], [0], [0], [1], [0, 0, 1, 1], [], []>} : vector<49x32xf32>, vector<32x32xf32>, vector<49x32xf32> -> vector<49x32xf32>
    %c0_7 = arith.constant 0 : index
    %c0_8 = arith.constant 0 : index
    %6 = vector.load %arg4[%c0_7, %c0_8] : memref<1x32xf32, #tpu.memory_space<vmem>>, vector<1x32xf32>
    %7 = vector.broadcast %6 : vector<1x32xf32> to vector<49x32xf32>
    %8 = arith.addf %5, %7 : vector<49x32xf32>
    %c0_9 = arith.constant 0 : index
    %c0_10 = arith.constant 0 : index
    %9 = vector.load %arg5[%c0_9, %c0_10] : memref<32x32xf32, #tpu.memory_space<vmem>>, vector<32x32xf32>
    %cst_11 = arith.constant dense<0.000000e+00> : vector<8x32xf32>
    %10 = tpu.matmul %3, %9, %cst_11 {dimension_numbers = #tpu.dot_dimension_numbers<[1], [0], [0], [1], [0, 0, 1, 1], [], []>} : vector<8x32xf32>, vector<32x32xf32>, vector<8x32xf32> -> vector<8x32xf32>
    %c0_12 = arith.constant 0 : index
    %c0_13 = arith.constant 0 : index
    %11 = vector.load %arg6[%c0_12, %c0_13] : memref<1x32xf32, #tpu.memory_space<vmem>>, vector<1x32xf32>
    %12 = vector.broadcast %11 : vector<1x32xf32> to vector<8x32xf32>
    %13 = arith.addf %10, %12 : vector<8x32xf32>
    %c0_14 = arith.constant 0 : index
    %c0_15 = arith.constant 0 : index
    %14 = vector.load %arg7[%c0_14, %c0_15] : memref<32x32xf32, #tpu.memory_space<vmem>>, vector<32x32xf32>
    %cst_16 = arith.constant dense<0.000000e+00> : vector<8x32xf32>
    %15 = tpu.matmul %3, %14, %cst_16 {dimension_numbers = #tpu.dot_dimension_numbers<[1], [0], [0], [1], [0, 0, 1, 1], [], []>} : vector<8x32xf32>, vector<32x32xf32>, vector<8x32xf32> -> vector<8x32xf32>
    %c0_17 = arith.constant 0 : index
    %c0_18 = arith.constant 0 : index
    %16 = vector.load %arg8[%c0_17, %c0_18] : memref<1x32xf32, #tpu.memory_space<vmem>>, vector<1x32xf32>
    %17 = vector.broadcast %16 : vector<1x32xf32> to vector<8x32xf32>
    %18 = arith.addf %15, %17 : vector<8x32xf32>
    %c0_19 = arith.constant 0 : index
    %c0_20 = arith.constant 0 : index
    %19 = vector.load %arg9[%c0_19, %c0_20] : memref<32x32xf32, #tpu.memory_space<vmem>>, vector<32x32xf32>
    %cst_21 = arith.constant 0.000000e+00 : f32
    %20 = vector.broadcast %cst_21 : f32 to vector<49x32xf32>
    %21 = vector.extract_strided_slice %8 {offsets = [0, 0], sizes = [49, 8], strides = [1, 1]} : vector<49x32xf32> to vector<49x8xf32>
    %22 = vector.extract_strided_slice %13 {offsets = [0, 0], sizes = [8, 8], strides = [1, 1]} : vector<8x32xf32> to vector<8x8xf32>
    %23 = vector.extract_strided_slice %18 {offsets = [0, 0], sizes = [8, 8], strides = [1, 1]} : vector<8x32xf32> to vector<8x8xf32>
    "tpu.trace_start"() <{level = 10 : i32, message = "qd,kd->qk"}> : () -> ()
    %cst_22 = arith.constant dense<0.000000e+00> : vector<49x8xf32>
    %24 = tpu.matmul %21, %22, %cst_22 {dimension_numbers = #tpu.dot_dimension_numbers<[1], [1], [0], [0], [0, 0, 1, 0], [], []>} : vector<49x8xf32>, vector<8x8xf32>, vector<49x8xf32> -> vector<49x8xf32>
    "tpu.trace_stop"() : () -> ()
    %cst_23 = arith.constant 0.353553385 : f32
    %25 = vector.broadcast %cst_23 : f32 to vector<49x8xf32>
    %26 = arith.mulf %24, %25 : vector<49x8xf32>
    %cst_24 = arith.constant dense<0xFF800000> : vector<49xf32>
    %27 = vector.multi_reduction <maximumf>, %26, %cst_24 [1] : vector<49x8xf32> to vector<49xf32>
    %28 = vector.shape_cast %27 : vector<49xf32> to vector<49x1xf32>
    %29 = vector.broadcast %28 : vector<49x1xf32> to vector<49x8xf32>
    %30 = arith.subf %26, %29 : vector<49x8xf32>
    %31 = math.exp %30 : vector<49x8xf32>
    %cst_25 = arith.constant dense<0.000000e+00> : vector<49xf32>
    %32 = vector.multi_reduction <add>, %31, %cst_25 [1] : vector<49x8xf32> to vector<49xf32>
    %33 = vector.shape_cast %32 : vector<49xf32> to vector<49x1xf32>
    %34 = tpu.reciprocal %33 {approx = true} : vector<49x1xf32> -> vector<49x1xf32>
    %35 = vector.broadcast %34 : vector<49x1xf32> to vector<49x8xf32>
    %36 = arith.mulf %31, %35 : vector<49x8xf32>
    %cst_26 = arith.constant dense<0.000000e+00> : vector<49x8xf32>
    %37 = tpu.matmul %36, %23, %cst_26 {dimension_numbers = #tpu.dot_dimension_numbers<[1], [0], [0], [1], [0, 0, 1, 1], [], []>} : vector<49x8xf32>, vector<8x8xf32>, vector<49x8xf32> -> vector<49x8xf32>
    %38 = vector.extract_strided_slice %19 {offsets = [0, 0], sizes = [8, 32], strides = [1, 1]} : vector<32x32xf32> to vector<8x32xf32>
    %cst_27 = arith.constant dense<0.000000e+00> : vector<49x32xf32>
    %39 = tpu.matmul %37, %38, %cst_27 {dimension_numbers = #tpu.dot_dimension_numbers<[1], [0], [0], [1], [0, 0, 1, 1], [], []>} : vector<49x8xf32>, vector<8x32xf32>, vector<49x32xf32> -> vector<49x32xf32>
    %40 = arith.addf %20, %39 : vector<49x32xf32>
    %41 = vector.extract_strided_slice %8 {offsets = [0, 8], sizes = [49, 8], strides = [1, 1]} : vector<49x32xf32> to vector<49x8xf32>
    %42 = vector.extract_strided_slice %13 {offsets = [0, 8], sizes = [8, 8], strides = [1, 1]} : vector<8x32xf32> to vector<8x8xf32>
    %43 = vector.extract_strided_slice %18 {offsets = [0, 8], sizes = [8, 8], strides = [1, 1]} : vector<8x32xf32> to vector<8x8xf32>
    "tpu.trace_start"() <{level = 10 : i32, message = "qd,kd->qk"}> : () -> ()
    %cst_28 = arith.constant dense<0.000000e+00> : vector<49x8xf32>
    %44 = tpu.matmul %41, %42, %cst_28 {dimension_numbers = #tpu.dot_dimension_numbers<[1], [1], [0], [0], [0, 0, 1, 0], [], []>} : vector<49x8xf32>, vector<8x8xf32>, vector<49x8xf32> -> vector<49x8xf32>
    "tpu.trace_stop"() : () -> ()
    %cst_29 = arith.constant 0.353553385 : f32
    %45 = vector.broadcast %cst_29 : f32 to vector<49x8xf32>
    %46 = arith.mulf %44, %45 : vector<49x8xf32>
    %cst_30 = arith.constant dense<0xFF800000> : vector<49xf32>
    %47 = vector.multi_reduction <maximumf>, %46, %cst_30 [1] : vector<49x8xf32> to vector<49xf32>
    %48 = vector.shape_cast %47 : vector<49xf32> to vector<49x1xf32>
    %49 = vector.broadcast %48 : vector<49x1xf32> to vector<49x8xf32>
    %50 = arith.subf %46, %49 : vector<49x8xf32>
    %51 = math.exp %50 : vector<49x8xf32>
    %cst_31 = arith.constant dense<0.000000e+00> : vector<49xf32>
    %52 = vector.multi_reduction <add>, %51, %cst_31 [1] : vector<49x8xf32> to vector<49xf32>
    %53 = vector.shape_cast %52 : vector<49xf32> to vector<49x1xf32>
    %54 = tpu.reciprocal %53 {approx = true} : vector<49x1xf32> -> vector<49x1xf32>
    %55 = vector.broadcast %54 : vector<49x1xf32> to vector<49x8xf32>
    %56 = arith.mulf %51, %55 : vector<49x8xf32>
    %cst_32 = arith.constant dense<0.000000e+00> : vector<49x8xf32>
    %57 = tpu.matmul %56, %43, %cst_32 {dimension_numbers = #tpu.dot_dimension_numbers<[1], [0], [0], [1], [0, 0, 1, 1], [], []>} : vector<49x8xf32>, vector<8x8xf32>, vector<49x8xf32> -> vector<49x8xf32>
    %58 = vector.extract_strided_slice %19 {offsets = [8, 0], sizes = [8, 32], strides = [1, 1]} : vector<32x32xf32> to vector<8x32xf32>
    %cst_33 = arith.constant dense<0.000000e+00> : vector<49x32xf32>
    %59 = tpu.matmul %57, %58, %cst_33 {dimension_numbers = #tpu.dot_dimension_numbers<[1], [0], [0], [1], [0, 0, 1, 1], [], []>} : vector<49x8xf32>, vector<8x32xf32>, vector<49x32xf32> -> vector<49x32xf32>
    %60 = arith.addf %40, %59 : vector<49x32xf32>
    %61 = vector.extract_strided_slice %8 {offsets = [0, 16], sizes = [49, 8], strides = [1, 1]} : vector<49x32xf32> to vector<49x8xf32>
    %62 = vector.extract_strided_slice %13 {offsets = [0, 16], sizes = [8, 8], strides = [1, 1]} : vector<8x32xf32> to vector<8x8xf32>
    %63 = vector.extract_strided_slice %18 {offsets = [0, 16], sizes = [8, 8], strides = [1, 1]} : vector<8x32xf32> to vector<8x8xf32>
    "tpu.trace_start"() <{level = 10 : i32, message = "qd,kd->qk"}> : () -> ()
    %cst_34 = arith.constant dense<0.000000e+00> : vector<49x8xf32>
    %64 = tpu.matmul %61, %62, %cst_34 {dimension_numbers = #tpu.dot_dimension_numbers<[1], [1], [0], [0], [0, 0, 1, 0], [], []>} : vector<49x8xf32>, vector<8x8xf32>, vector<49x8xf32> -> vector<49x8xf32>
    "tpu.trace_stop"() : () -> ()
    %cst_35 = arith.constant 0.353553385 : f32
    %65 = vector.broadcast %cst_35 : f32 to vector<49x8xf32>
    %66 = arith.mulf %64, %65 : vector<49x8xf32>
    %cst_36 = arith.constant dense<0xFF800000> : vector<49xf32>
    %67 = vector.multi_reduction <maximumf>, %66, %cst_36 [1] : vector<49x8xf32> to vector<49xf32>
    %68 = vector.shape_cast %67 : vector<49xf32> to vector<49x1xf32>
    %69 = vector.broadcast %68 : vector<49x1xf32> to vector<49x8xf32>
    %70 = arith.subf %66, %69 : vector<49x8xf32>
    %71 = math.exp %70 : vector<49x8xf32>
    %cst_37 = arith.constant dense<0.000000e+00> : vector<49xf32>
    %72 = vector.multi_reduction <add>, %71, %cst_37 [1] : vector<49x8xf32> to vector<49xf32>
    %73 = vector.shape_cast %72 : vector<49xf32> to vector<49x1xf32>
    %74 = tpu.reciprocal %73 {approx = true} : vector<49x1xf32> -> vector<49x1xf32>
    %75 = vector.broadcast %74 : vector<49x1xf32> to vector<49x8xf32>
    %76 = arith.mulf %71, %75 : vector<49x8xf32>
    %cst_38 = arith.constant dense<0.000000e+00> : vector<49x8xf32>
    %77 = tpu.matmul %76, %63, %cst_38 {dimension_numbers = #tpu.dot_dimension_numbers<[1], [0], [0], [1], [0, 0, 1, 1], [], []>} : vector<49x8xf32>, vector<8x8xf32>, vector<49x8xf32> -> vector<49x8xf32>
    %78 = vector.extract_strided_slice %19 {offsets = [16, 0], sizes = [8, 32], strides = [1, 1]} : vector<32x32xf32> to vector<8x32xf32>
    %cst_39 = arith.constant dense<0.000000e+00> : vector<49x32xf32>
    %79 = tpu.matmul %77, %78, %cst_39 {dimension_numbers = #tpu.dot_dimension_numbers<[1], [0], [0], [1], [0, 0, 1, 1], [], []>} : vector<49x8xf32>, vector<8x32xf32>, vector<49x32xf32> -> vector<49x32xf32>
    %80 = arith.addf %60, %79 : vector<49x32xf32>
    %81 = vector.extract_strided_slice %8 {offsets = [0, 24], sizes = [49, 8], strides = [1, 1]} : vector<49x32xf32> to vector<49x8xf32>
    %82 = vector.extract_strided_slice %13 {offsets = [0, 24], sizes = [8, 8], strides = [1, 1]} : vector<8x32xf32> to vector<8x8xf32>
    %83 = vector.extract_strided_slice %18 {offsets = [0, 24], sizes = [8, 8], strides = [1, 1]} : vector<8x32xf32> to vector<8x8xf32>
    "tpu.trace_start"() <{level = 10 : i32, message = "qd,kd->qk"}> : () -> ()
    %cst_40 = arith.constant dense<0.000000e+00> : vector<49x8xf32>
    %84 = tpu.matmul %81, %82, %cst_40 {dimension_numbers = #tpu.dot_dimension_numbers<[1], [1], [0], [0], [0, 0, 1, 0], [], []>} : vector<49x8xf32>, vector<8x8xf32>, vector<49x8xf32> -> vector<49x8xf32>
    "tpu.trace_stop"() : () -> ()
    %cst_41 = arith.constant 0.353553385 : f32
    %85 = vector.broadcast %cst_41 : f32 to vector<49x8xf32>
    %86 = arith.mulf %84, %85 : vector<49x8xf32>
    %cst_42 = arith.constant dense<0xFF800000> : vector<49xf32>
    %87 = vector.multi_reduction <maximumf>, %86, %cst_42 [1] : vector<49x8xf32> to vector<49xf32>
    %88 = vector.shape_cast %87 : vector<49xf32> to vector<49x1xf32>
    %89 = vector.broadcast %88 : vector<49x1xf32> to vector<49x8xf32>
    %90 = arith.subf %86, %89 : vector<49x8xf32>
    %91 = math.exp %90 : vector<49x8xf32>
    %cst_43 = arith.constant dense<0.000000e+00> : vector<49xf32>
    %92 = vector.multi_reduction <add>, %91, %cst_43 [1] : vector<49x8xf32> to vector<49xf32>
    %93 = vector.shape_cast %92 : vector<49xf32> to vector<49x1xf32>
    %94 = tpu.reciprocal %93 {approx = true} : vector<49x1xf32> -> vector<49x1xf32>
    %95 = vector.broadcast %94 : vector<49x1xf32> to vector<49x8xf32>
    %96 = arith.mulf %91, %95 : vector<49x8xf32>
    %cst_44 = arith.constant dense<0.000000e+00> : vector<49x8xf32>
    %97 = tpu.matmul %96, %83, %cst_44 {dimension_numbers = #tpu.dot_dimension_numbers<[1], [0], [0], [1], [0, 0, 1, 1], [], []>} : vector<49x8xf32>, vector<8x8xf32>, vector<49x8xf32> -> vector<49x8xf32>
    %98 = vector.extract_strided_slice %19 {offsets = [24, 0], sizes = [8, 32], strides = [1, 1]} : vector<32x32xf32> to vector<8x32xf32>
    %cst_45 = arith.constant dense<0.000000e+00> : vector<49x32xf32>
    %99 = tpu.matmul %97, %98, %cst_45 {dimension_numbers = #tpu.dot_dimension_numbers<[1], [0], [0], [1], [0, 0, 1, 1], [], []>} : vector<49x8xf32>, vector<8x32xf32>, vector<49x32xf32> -> vector<49x32xf32>
    %100 = arith.addf %80, %99 : vector<49x32xf32>
    %c0_46 = arith.constant 0 : index
    %c0_47 = arith.constant 0 : index
    %101 = vector.load %arg10[%c0_46, %c0_47] : memref<1x32xf32, #tpu.memory_space<vmem>>, vector<1x32xf32>
    %102 = vector.broadcast %101 : vector<1x32xf32> to vector<49x32xf32>
    %103 = arith.addf %100, %102 : vector<49x32xf32>
    %cst_48 = arith.constant dense<0.000000e+00> : vector<32xf32>
    %104 = vector.multi_reduction <add>, %103, %cst_48 [0] : vector<49x32xf32> to vector<32xf32>
    %105 = vector.shape_cast %104 : vector<32xf32> to vector<1x32xf32>
    %cst_49 = arith.constant dense<0.000000e+00> : vector<1xf32>
    %106 = vector.multi_reduction <add>, %105, %cst_49 [1] : vector<1x32xf32> to vector<1xf32>
    %107 = vector.shape_cast %106 : vector<1xf32> to vector<1x1xf32>
    %cst_50 = arith.constant 1.568000e+03 : f32
    %108 = vector.broadcast %cst_50 : f32 to vector<1x1xf32>
    %109 = arith.divf %107, %108 : vector<1x1xf32>
    %110 = vector.broadcast %109 : vector<1x1xf32> to vector<49x32xf32>
    %111 = arith.subf %103, %110 : vector<49x32xf32>
    %112 = arith.mulf %111, %111 : vector<49x32xf32>
    %cst_51 = arith.constant dense<0.000000e+00> : vector<32xf32>
    %113 = vector.multi_reduction <add>, %112, %cst_51 [0] : vector<49x32xf32> to vector<32xf32>
    %114 = vector.shape_cast %113 : vector<32xf32> to vector<1x32xf32>
    %cst_52 = arith.constant dense<0.000000e+00> : vector<1xf32>
    %115 = vector.multi_reduction <add>, %114, %cst_52 [1] : vector<1x32xf32> to vector<1xf32>
    %116 = vector.shape_cast %115 : vector<1xf32> to vector<1x1xf32>
    %cst_53 = arith.constant 1.568000e+03 : f32
    %117 = vector.broadcast %cst_53 : f32 to vector<1x1xf32>
    %118 = arith.divf %116, %117 : vector<1x1xf32>
    %cst_54 = arith.constant 9.99999974E-6 : f32
    %119 = vector.broadcast %cst_54 : f32 to vector<1x1xf32>
    %120 = arith.addf %118, %119 : vector<1x1xf32>
    %121 = math.rsqrt %120 : vector<1x1xf32>
    %122 = vector.broadcast %121 : vector<1x1xf32> to vector<49x32xf32>
    %123 = arith.mulf %111, %122 : vector<49x32xf32>
    %c0_55 = arith.constant 0 : index
    %c0_56 = arith.constant 0 : index
    %124 = vector.load %arg11[%c0_55, %c0_56] : memref<49x32xf32, #tpu.memory_space<vmem>>, vector<49x32xf32>
    %125 = arith.mulf %123, %124 : vector<49x32xf32>
    %c0_57 = arith.constant 0 : index
    %c0_58 = arith.constant 0 : index
    %126 = vector.load %arg12[%c0_57, %c0_58] : memref<49x32xf32, #tpu.memory_space<vmem>>, vector<49x32xf32>
    %127 = arith.addf %125, %126 : vector<49x32xf32>
    %128 = arith.addf %127, %1 : vector<49x32xf32>
    %cst_59 = arith.constant 0.000000e+00 : f32
    %129 = vector.broadcast %cst_59 : f32 to vector<49x32xf32>
    %c0_60 = arith.constant 0 : index
    %c0_61 = arith.constant 0 : index
    %c0_62 = arith.constant 0 : index
    %130 = vector.load %arg13[%c0_60, %c0_61, %c0_62] : memref<9x49x49xf32, #tpu.memory_space<vmem>>, vector<1x49x49xf32>
    %131 = vector.shape_cast %130 : vector<1x49x49xf32> to vector<49x49xf32>
    %cst_63 = arith.constant dense<0.000000e+00> : vector<49x32xf32>
    %132 = tpu.matmul %131, %128, %cst_63 {dimension_numbers = #tpu.dot_dimension_numbers<[1], [0], [0], [1], [0, 0, 1, 1], [], []>} : vector<49x49xf32>, vector<49x32xf32>, vector<49x32xf32> -> vector<49x32xf32>
    %c0_64 = arith.constant 0 : index
    %c0_65 = arith.constant 0 : index
    %c0_66 = arith.constant 0 : index
    %133 = vector.load %arg14[%c0_64, %c0_65, %c0_66] : memref<9x32x32xf32, #tpu.memory_space<vmem>>, vector<1x32x32xf32>
    %134 = vector.shape_cast %133 : vector<1x32x32xf32> to vector<32x32xf32>
    %cst_67 = arith.constant dense<0.000000e+00> : vector<49x32xf32>
    %135 = tpu.matmul %132, %134, %cst_67 {dimension_numbers = #tpu.dot_dimension_numbers<[1], [0], [0], [1], [0, 0, 1, 1], [], []>} : vector<49x32xf32>, vector<32x32xf32>, vector<49x32xf32> -> vector<49x32xf32>
    %136 = arith.addf %129, %135 : vector<49x32xf32>
    %c1 = arith.constant 1 : index
    %c0_68 = arith.constant 0 : index
    %c0_69 = arith.constant 0 : index
    %137 = vector.load %arg13[%c1, %c0_68, %c0_69] : memref<9x49x49xf32, #tpu.memory_space<vmem>>, vector<1x49x49xf32>
    %138 = vector.shape_cast %137 : vector<1x49x49xf32> to vector<49x49xf32>
    %cst_70 = arith.constant dense<0.000000e+00> : vector<49x32xf32>
    %139 = tpu.matmul %138, %128, %cst_70 {dimension_numbers = #tpu.dot_dimension_numbers<[1], [0], [0], [1], [0, 0, 1, 1], [], []>} : vector<49x49xf32>, vector<49x32xf32>, vector<49x32xf32> -> vector<49x32xf32>
    %c1_71 = arith.constant 1 : index
    %c0_72 = arith.constant 0 : index
    %c0_73 = arith.constant 0 : index
    %140 = vector.load %arg14[%c1_71, %c0_72, %c0_73] : memref<9x32x32xf32, #tpu.memory_space<vmem>>, vector<1x32x32xf32>
    %141 = vector.shape_cast %140 : vector<1x32x32xf32> to vector<32x32xf32>
    %cst_74 = arith.constant dense<0.000000e+00> : vector<49x32xf32>
    %142 = tpu.matmul %139, %141, %cst_74 {dimension_numbers = #tpu.dot_dimension_numbers<[1], [0], [0], [1], [0, 0, 1, 1], [], []>} : vector<49x32xf32>, vector<32x32xf32>, vector<49x32xf32> -> vector<49x32xf32>
    %143 = arith.addf %136, %142 : vector<49x32xf32>
    %c2 = arith.constant 2 : index
    %c0_75 = arith.constant 0 : index
    %c0_76 = arith.constant 0 : index
    %144 = vector.load %arg13[%c2, %c0_75, %c0_76] : memref<9x49x49xf32, #tpu.memory_space<vmem>>, vector<1x49x49xf32>
    %145 = vector.shape_cast %144 : vector<1x49x49xf32> to vector<49x49xf32>
    %cst_77 = arith.constant dense<0.000000e+00> : vector<49x32xf32>
    %146 = tpu.matmul %145, %128, %cst_77 {dimension_numbers = #tpu.dot_dimension_numbers<[1], [0], [0], [1], [0, 0, 1, 1], [], []>} : vector<49x49xf32>, vector<49x32xf32>, vector<49x32xf32> -> vector<49x32xf32>
    %c2_78 = arith.constant 2 : index
    %c0_79 = arith.constant 0 : index
    %c0_80 = arith.constant 0 : index
    %147 = vector.load %arg14[%c2_78, %c0_79, %c0_80] : memref<9x32x32xf32, #tpu.memory_space<vmem>>, vector<1x32x32xf32>
    %148 = vector.shape_cast %147 : vector<1x32x32xf32> to vector<32x32xf32>
    %cst_81 = arith.constant dense<0.000000e+00> : vector<49x32xf32>
    %149 = tpu.matmul %146, %148, %cst_81 {dimension_numbers = #tpu.dot_dimension_numbers<[1], [0], [0], [1], [0, 0, 1, 1], [], []>} : vector<49x32xf32>, vector<32x32xf32>, vector<49x32xf32> -> vector<49x32xf32>
    %150 = arith.addf %143, %149 : vector<49x32xf32>
    %c3 = arith.constant 3 : index
    %c0_82 = arith.constant 0 : index
    %c0_83 = arith.constant 0 : index
    %151 = vector.load %arg13[%c3, %c0_82, %c0_83] : memref<9x49x49xf32, #tpu.memory_space<vmem>>, vector<1x49x49xf32>
    %152 = vector.shape_cast %151 : vector<1x49x49xf32> to vector<49x49xf32>
    %cst_84 = arith.constant dense<0.000000e+00> : vector<49x32xf32>
    %153 = tpu.matmul %152, %128, %cst_84 {dimension_numbers = #tpu.dot_dimension_numbers<[1], [0], [0], [1], [0, 0, 1, 1], [], []>} : vector<49x49xf32>, vector<49x32xf32>, vector<49x32xf32> -> vector<49x32xf32>
    %c3_85 = arith.constant 3 : index
    %c0_86 = arith.constant 0 : index
    %c0_87 = arith.constant 0 : index
    %154 = vector.load %arg14[%c3_85, %c0_86, %c0_87] : memref<9x32x32xf32, #tpu.memory_space<vmem>>, vector<1x32x32xf32>
    %155 = vector.shape_cast %154 : vector<1x32x32xf32> to vector<32x32xf32>
    %cst_88 = arith.constant dense<0.000000e+00> : vector<49x32xf32>
    %156 = tpu.matmul %153, %155, %cst_88 {dimension_numbers = #tpu.dot_dimension_numbers<[1], [0], [0], [1], [0, 0, 1, 1], [], []>} : vector<49x32xf32>, vector<32x32xf32>, vector<49x32xf32> -> vector<49x32xf32>
    %157 = arith.addf %150, %156 : vector<49x32xf32>
    %c4 = arith.constant 4 : index
    %c0_89 = arith.constant 0 : index
    %c0_90 = arith.constant 0 : index
    %158 = vector.load %arg13[%c4, %c0_89, %c0_90] : memref<9x49x49xf32, #tpu.memory_space<vmem>>, vector<1x49x49xf32>
    %159 = vector.shape_cast %158 : vector<1x49x49xf32> to vector<49x49xf32>
    %cst_91 = arith.constant dense<0.000000e+00> : vector<49x32xf32>
    %160 = tpu.matmul %159, %128, %cst_91 {dimension_numbers = #tpu.dot_dimension_numbers<[1], [0], [0], [1], [0, 0, 1, 1], [], []>} : vector<49x49xf32>, vector<49x32xf32>, vector<49x32xf32> -> vector<49x32xf32>
    %c4_92 = arith.constant 4 : index
    %c0_93 = arith.constant 0 : index
    %c0_94 = arith.constant 0 : index
    %161 = vector.load %arg14[%c4_92, %c0_93, %c0_94] : memref<9x32x32xf32, #tpu.memory_space<vmem>>, vector<1x32x32xf32>
    %162 = vector.shape_cast %161 : vector<1x32x32xf32> to vector<32x32xf32>
    %cst_95 = arith.constant dense<0.000000e+00> : vector<49x32xf32>
    %163 = tpu.matmul %160, %162, %cst_95 {dimension_numbers = #tpu.dot_dimension_numbers<[1], [0], [0], [1], [0, 0, 1, 1], [], []>} : vector<49x32xf32>, vector<32x32xf32>, vector<49x32xf32> -> vector<49x32xf32>
    %164 = arith.addf %157, %163 : vector<49x32xf32>
    %c5 = arith.constant 5 : index
    %c0_96 = arith.constant 0 : index
    %c0_97 = arith.constant 0 : index
    %165 = vector.load %arg13[%c5, %c0_96, %c0_97] : memref<9x49x49xf32, #tpu.memory_space<vmem>>, vector<1x49x49xf32>
    %166 = vector.shape_cast %165 : vector<1x49x49xf32> to vector<49x49xf32>
    %cst_98 = arith.constant dense<0.000000e+00> : vector<49x32xf32>
    %167 = tpu.matmul %166, %128, %cst_98 {dimension_numbers = #tpu.dot_dimension_numbers<[1], [0], [0], [1], [0, 0, 1, 1], [], []>} : vector<49x49xf32>, vector<49x32xf32>, vector<49x32xf32> -> vector<49x32xf32>
    %c5_99 = arith.constant 5 : index
    %c0_100 = arith.constant 0 : index
    %c0_101 = arith.constant 0 : index
    %168 = vector.load %arg14[%c5_99, %c0_100, %c0_101] : memref<9x32x32xf32, #tpu.memory_space<vmem>>, vector<1x32x32xf32>
    %169 = vector.shape_cast %168 : vector<1x32x32xf32> to vector<32x32xf32>
    %cst_102 = arith.constant dense<0.000000e+00> : vector<49x32xf32>
    %170 = tpu.matmul %167, %169, %cst_102 {dimension_numbers = #tpu.dot_dimension_numbers<[1], [0], [0], [1], [0, 0, 1, 1], [], []>} : vector<49x32xf32>, vector<32x32xf32>, vector<49x32xf32> -> vector<49x32xf32>
    %171 = arith.addf %164, %170 : vector<49x32xf32>
    %c6 = arith.constant 6 : index
    %c0_103 = arith.constant 0 : index
    %c0_104 = arith.constant 0 : index
    %172 = vector.load %arg13[%c6, %c0_103, %c0_104] : memref<9x49x49xf32, #tpu.memory_space<vmem>>, vector<1x49x49xf32>
    %173 = vector.shape_cast %172 : vector<1x49x49xf32> to vector<49x49xf32>
    %cst_105 = arith.constant dense<0.000000e+00> : vector<49x32xf32>
    %174 = tpu.matmul %173, %128, %cst_105 {dimension_numbers = #tpu.dot_dimension_numbers<[1], [0], [0], [1], [0, 0, 1, 1], [], []>} : vector<49x49xf32>, vector<49x32xf32>, vector<49x32xf32> -> vector<49x32xf32>
    %c6_106 = arith.constant 6 : index
    %c0_107 = arith.constant 0 : index
    %c0_108 = arith.constant 0 : index
    %175 = vector.load %arg14[%c6_106, %c0_107, %c0_108] : memref<9x32x32xf32, #tpu.memory_space<vmem>>, vector<1x32x32xf32>
    %176 = vector.shape_cast %175 : vector<1x32x32xf32> to vector<32x32xf32>
    %cst_109 = arith.constant dense<0.000000e+00> : vector<49x32xf32>
    %177 = tpu.matmul %174, %176, %cst_109 {dimension_numbers = #tpu.dot_dimension_numbers<[1], [0], [0], [1], [0, 0, 1, 1], [], []>} : vector<49x32xf32>, vector<32x32xf32>, vector<49x32xf32> -> vector<49x32xf32>
    %178 = arith.addf %171, %177 : vector<49x32xf32>
    %c7 = arith.constant 7 : index
    %c0_110 = arith.constant 0 : index
    %c0_111 = arith.constant 0 : index
    %179 = vector.load %arg13[%c7, %c0_110, %c0_111] : memref<9x49x49xf32, #tpu.memory_space<vmem>>, vector<1x49x49xf32>
    %180 = vector.shape_cast %179 : vector<1x49x49xf32> to vector<49x49xf32>
    %cst_112 = arith.constant dense<0.000000e+00> : vector<49x32xf32>
    %181 = tpu.matmul %180, %128, %cst_112 {dimension_numbers = #tpu.dot_dimension_numbers<[1], [0], [0], [1], [0, 0, 1, 1], [], []>} : vector<49x49xf32>, vector<49x32xf32>, vector<49x32xf32> -> vector<49x32xf32>
    %c7_113 = arith.constant 7 : index
    %c0_114 = arith.constant 0 : index
    %c0_115 = arith.constant 0 : index
    %182 = vector.load %arg14[%c7_113, %c0_114, %c0_115] : memref<9x32x32xf32, #tpu.memory_space<vmem>>, vector<1x32x32xf32>
    %183 = vector.shape_cast %182 : vector<1x32x32xf32> to vector<32x32xf32>
    %cst_116 = arith.constant dense<0.000000e+00> : vector<49x32xf32>
    %184 = tpu.matmul %181, %183, %cst_116 {dimension_numbers = #tpu.dot_dimension_numbers<[1], [0], [0], [1], [0, 0, 1, 1], [], []>} : vector<49x32xf32>, vector<32x32xf32>, vector<49x32xf32> -> vector<49x32xf32>
    %185 = arith.addf %178, %184 : vector<49x32xf32>
    %c8 = arith.constant 8 : index
    %c0_117 = arith.constant 0 : index
    %c0_118 = arith.constant 0 : index
    %186 = vector.load %arg13[%c8, %c0_117, %c0_118] : memref<9x49x49xf32, #tpu.memory_space<vmem>>, vector<1x49x49xf32>
    %187 = vector.shape_cast %186 : vector<1x49x49xf32> to vector<49x49xf32>
    %cst_119 = arith.constant dense<0.000000e+00> : vector<49x32xf32>
    %188 = tpu.matmul %187, %128, %cst_119 {dimension_numbers = #tpu.dot_dimension_numbers<[1], [0], [0], [1], [0, 0, 1, 1], [], []>} : vector<49x49xf32>, vector<49x32xf32>, vector<49x32xf32> -> vector<49x32xf32>
    %c8_120 = arith.constant 8 : index
    %c0_121 = arith.constant 0 : index
    %c0_122 = arith.constant 0 : index
    %189 = vector.load %arg14[%c8_120, %c0_121, %c0_122] : memref<9x32x32xf32, #tpu.memory_space<vmem>>, vector<1x32x32xf32>
    %190 = vector.shape_cast %189 : vector<1x32x32xf32> to vector<32x32xf32>
    %cst_123 = arith.constant dense<0.000000e+00> : vector<49x32xf32>
    %191 = tpu.matmul %188, %190, %cst_123 {dimension_numbers = #tpu.dot_dimension_numbers<[1], [0], [0], [1], [0, 0, 1, 1], [], []>} : vector<49x32xf32>, vector<32x32xf32>, vector<49x32xf32> -> vector<49x32xf32>
    %192 = arith.addf %185, %191 : vector<49x32xf32>
    %c0_124 = arith.constant 0 : index
    %c0_125 = arith.constant 0 : index
    %193 = vector.load %arg15[%c0_124, %c0_125] : memref<1x32xf32, #tpu.memory_space<vmem>>, vector<1x32xf32>
    %194 = vector.broadcast %193 : vector<1x32xf32> to vector<49x32xf32>
    %195 = arith.addf %192, %194 : vector<49x32xf32>
    %cst_126 = arith.constant 0.000000e+00 : f32
    %196 = vector.broadcast %cst_126 : f32 to vector<49x32xf32>
    %197 = arith.maximumf %195, %196 : vector<49x32xf32>
    %c0_127 = arith.constant 0 : index
    %c0_128 = arith.constant 0 : index
    %c0_129 = arith.constant 0 : index
    %198 = vector.load %arg16[%c0_127, %c0_128, %c0_129] : memref<1x49x32xf32, #tpu.memory_space<vmem>>, vector<1x49x32xf32>
    %199 = vector.shape_cast %198 : vector<1x49x32xf32> to vector<49x32xf32>
    %200 = vector.shape_cast %197 : vector<49x32xf32> to vector<1x49x32xf32>
    tpu.vector_store %arg16[%c0_127, %c0_128, %c0_129], %200 {strides = array<i32>} : memref<1x49x32xf32, #tpu.memory_space<vmem>>, vector<1x49x32xf32>,
    return
  }
  func.func @transform_0(%arg0: i32) -> (i32, i32, i32) {
    %c0_i32 = arith.constant 0 : i32
    %c0_i32_0 = arith.constant 0 : i32
    %c0_i32_1 = arith.constant 0 : i32
    return %arg0, %c0_i32, %c0_i32_0 : i32, i32, i32
  }
  func.func @transform_1(%arg0: i32) -> (i32, i32, i32) {
    %c0_i32 = arith.constant 0 : i32
    %c0_i32_0 = arith.constant 0 : i32
    %c0_i32_1 = arith.constant 0 : i32
    return %arg0, %c0_i32, %c0_i32_0 : i32, i32, i32
  }
  func.func @transform_2(%arg0: i32) -> (i32, i32) {
    %c0_i32 = arith.constant 0 : i32
    %c0_i32_0 = arith.constant 0 : i32
    %c0_i32_1 = arith.constant 0 : i32
    return %c0_i32, %c0_i32_0 : i32, i32
  }
  func.func @transform_3(%arg0: i32) -> (i32, i32) {
    %c0_i32 = arith.constant 0 : i32
    %c0_i32_0 = arith.constant 0 : i32
    %c0_i32_1 = arith.constant 0 : i32
    return %c0_i32, %c0_i32_0 : i32, i32
  }
  func.func @transform_4(%arg0: i32) -> (i32, i32) {
    %c0_i32 = arith.constant 0 : i32
    %c0_i32_0 = arith.constant 0 : i32
    %c0_i32_1 = arith.constant 0 : i32
    return %c0_i32, %c0_i32_0 : i32, i32
  }
  func.func @transform_5(%arg0: i32) -> (i32, i32) {
    %c0_i32 = arith.constant 0 : i32
    %c0_i32_0 = arith.constant 0 : i32
    %c0_i32_1 = arith.constant 0 : i32
    return %c0_i32, %c0_i32_0 : i32, i32
  }
  func.func @transform_6(%arg0: i32) -> (i32, i32) {
    %c0_i32 = arith.constant 0 : i32
    %c0_i32_0 = arith.constant 0 : i32
    %c0_i32_1 = arith.constant 0 : i32
    return %c0_i32, %c0_i32_0 : i32, i32
  }
  func.func @transform_7(%arg0: i32) -> (i32, i32) {
    %c0_i32 = arith.constant 0 : i32
    %c0_i32_0 = arith.constant 0 : i32
    %c0_i32_1 = arith.constant 0 : i32
    return %c0_i32, %c0_i32_0 : i32, i32
  }
  func.func @transform_8(%arg0: i32) -> (i32, i32) {
    %c0_i32 = arith.constant 0 : i32
    %c0_i32_0 = arith.constant 0 : i32
    %c0_i32_1 = arith.constant 0 : i32
    return %c0_i32, %c0_i32_0 : i32, i32
  }
  func.func @transform_9(%arg0: i32) -> (i32, i32) {
    %c0_i32 = arith.constant 0 : i32
    %c0_i32_0 = arith.constant 0 : i32
    %c0_i32_1 = arith.constant 0 : i32
    return %c0_i32, %c0_i32_0 : i32, i32
  }
  func.func @transform_10(%arg0: i32) -> (i32, i32) {
    %c0_i32 = arith.constant 0 : i32
    %c0_i32_0 = arith.constant 0 : i32
    %c0_i32_1 = arith.constant 0 : i32
    return %c0_i32, %c0_i32_0 : i32, i32
  }
  func.func @transform_11(%arg0: i32) -> (i32, i32) {
    %c0_i32 = arith.constant 0 : i32
    %c0_i32_0 = arith.constant 0 : i32
    %c0_i32_1 = arith.constant 0 : i32
    return %c0_i32, %c0_i32_0 : i32, i32
  }
  func.func @transform_12(%arg0: i32) -> (i32, i32, i32) {
    %c0_i32 = arith.constant 0 : i32
    %c0_i32_0 = arith.constant 0 : i32
    %c0_i32_1 = arith.constant 0 : i32
    %c0_i32_2 = arith.constant 0 : i32
    return %c0_i32, %c0_i32_0, %c0_i32_1 : i32, i32, i32
  }
  func.func @transform_13(%arg0: i32) -> (i32, i32, i32) {
    %c0_i32 = arith.constant 0 : i32
    %c0_i32_0 = arith.constant 0 : i32
    %c0_i32_1 = arith.constant 0 : i32
    %c0_i32_2 = arith.constant 0 : i32
    return %c0_i32, %c0_i32_0, %c0_i32_1 : i32, i32, i32
  }
  func.func @transform_14(%arg0: i32) -> (i32, i32) {
    %c0_i32 = arith.constant 0 : i32
    %c0_i32_0 = arith.constant 0 : i32
    %c0_i32_1 = arith.constant 0 : i32
    return %c0_i32, %c0_i32_0 : i32, i32
  }
  func.func @transform_15(%arg0: i32) -> (i32, i32, i32) {
    %c0_i32 = arith.constant 0 : i32
    %c0_i32_0 = arith.constant 0 : i32
    %c0_i32_1 = arith.constant 0 : i32
    return %arg0, %c0_i32, %c0_i32_0 : i32, i32, i32
  }
}

</mosaic_0001>

<llo_original>
// kernel: gate_forward.1
$region0: #{gate_forward.1}
  #allocation0 [shape = 'u32[]', space=smem, size = 0x4, offset = 0x4, fixed_abs, tag = 'smem constant byte address 0x4 - core index']
  #allocation1 [shape = 'u32[144,128]{1,0:T(1,128)}', space=vmem, size = 0x12000, scoped, tag = 'internal scratch']
  %s0 = inlined_call_operand.vmem [shape: f32[2,49,32], index: 0, kind: input, shape index: {}]
  %s1 = inlined_call_operand.vmem [shape: f32[2,8,32], index: 1, kind: input, shape index: {}]
  %s2 = inlined_call_operand.vmem [shape: f32[32,32], index: 2, kind: input, shape index: {}]
  %s3 = inlined_call_operand.vmem [shape: f32[1,32], index: 3, kind: input, shape index: {}]
  %s4 = inlined_call_operand.vmem [shape: f32[32,32], index: 4, kind: input, shape index: {}]
  %s5 = inlined_call_operand.vmem [shape: f32[1,32], index: 5, kind: input, shape index: {}]
  %s6 = inlined_call_operand.vmem [shape: f32[32,32], index: 6, kind: input, shape index: {}]
  %s7 = inlined_call_operand.vmem [shape: f32[1,32], index: 7, kind: input, shape index: {}]
  %s8 = inlined_call_operand.hbm [shape: f32[32,32], index: 8, kind: input, shape index: {}]
  %s9 = inlined_call_operand.vmem [shape: f32[1,32], index: 9, kind: input, shape index: {}]
  %s10 = inlined_call_operand.vmem [shape: f32[49,32], index: 10, kind: input, shape index: {}]
  %s11 = inlined_call_operand.vmem [shape: f32[49,32], index: 11, kind: input, shape index: {}]
  %s12 = inlined_call_operand.hbm [shape: f32[9,49,49], index: 12, kind: input, shape index: {}]
  %s13 = inlined_call_operand.vmem [shape: f32[9,32,32], index: 13, kind: input, shape index: {}]
  %s14 = inlined_call_operand.vmem [shape: f32[1,32], index: 14, kind: input, shape index: {}]
  %s15 = inlined_call_operand.vmem [shape: f32[2,49,32], index: 15, kind: output, shape index: {}]
  %s16 = sld [smem:[#allocation0]]
  $region101: #{gate_forward.1} parent=0
    _
  %s18 = ssub.s32 1, %s16
  %s19 = scalar_select 0, %s18, %s16
  $region1: #{gate_forward.1} parent=0
    #allocation2 [shape = 'u8[16384]{0}', space=vmem, size = 0x4000, scoped, tag = 'input window, operand 8, single buffered']
    #allocation3 [shape = 's32[2]{0}', space=sflag, size = 0x8, scoped, tag = 'scoped memory for gate_forward.1']
    #allocation4 [shape = 'u8[258048]{0}', space=vmem, size = 0x3f000, scoped, tag = 'input window, operand 12, single buffered']
    #allocation5 [shape = 's32[1]{0}', space=sflag, size = 0x4, scoped, tag = 'scoped memory for gate_forward.1']
    %20 = vsyncpa [#allocation3], 0
    %21 = vsyncpa [#allocation5], 0
    loop: start=0, step=1, limit=4
    $region2: #{gate_forward.1} parent=1 // loop_pre_header
      _
    $region3: #{gate_forward.1} parent=1 // loop_header
      %s23 = sphi 0, %s27
      %p24 = scmp.ge.s32.totalorder %s23, 4
      %s33 = sphi 0, %s35
      %s36 = sphi 0, %s33
      %s37 = sphi 0, %s36
      %s53 = sphi 0, %s37
      %s59 = sphi 0, %s61
      %s62 = sphi 0, %s59
      %s63 = sphi 0, %s62
      %s79 = sphi 0, %s63
      %s83 = sphi 0, %s83
      %s85 = sphi 0, %s83
      %s86 = sphi 0, %s85
      %s100 = sphi 0, %s86
      %s104 = sphi 0, %s104
      %s106 = sphi 0, %s104
      %s107 = sphi 0, %s106
      %s121 = sphi 0, %s107
      %s125 = sphi 0, %s125
      %s127 = sphi 0, %s125
      %s128 = sphi 0, %s127
      %s142 = sphi 0, %s128
      %s146 = sphi 0, %s146
      %s148 = sphi 0, %s146
      %s149 = sphi 0, %s148
      %s163 = sphi 0, %s149
      %s167 = sphi 0, %s167
      %s169 = sphi 0, %s167
      %s170 = sphi 0, %s169
      %s184 = sphi 0, %s170
      %s188 = sphi 0, %s188
      %s190 = sphi 0, %s188
      %s191 = sphi 0, %s190
      %s205 = sphi 0, %s191
      %s209 = sphi 0, %s209
      %s211 = sphi 0, %s209
      %s212 = sphi 0, %s211
      %s226 = sphi 0, %s212
      %s230 = sphi 0, %s230
      %s232 = sphi 0, %s230
      %s233 = sphi 0, %s232
      %s247 = sphi 0, %s233
      %s251 = sphi 0, %s251
      %s253 = sphi 0, %s251
      %s254 = sphi 0, %s253
      %s268 = sphi 0, %s254
      %s272 = sphi 0, %s272
      %s274 = sphi 0, %s272
      %s275 = sphi 0, %s274
      %s289 = sphi 0, %s275
      %s293 = sphi 0, %s293
      %s295 = sphi 0, %s293
      %s296 = sphi 0, %s295
      %s310 = sphi 0, %s296
      %s314 = sphi 0, %s314
      %s316 = sphi 0, %s314
      %s317 = sphi 0, %s316
      %s331 = sphi 0, %s317
      %s335 = sphi 0, %s335
      %s337 = sphi 0, %s335
      %s338 = sphi 0, %s337
      %s352 = sphi 0, %s338
      %s358 = sphi 0, %s360
      %s361 = sphi 0, %s358
      %s362 = sphi 0, %s361
      %s378 = sphi 0, %s362
    $region4: #{gate_forward.1} parent=1 // loop_header_branch
      %26 = sbr.rel (%p24) target = $region8
    $region5: #{gate_forward.1} parent=1 // loop_body
      %s28 = ssub.s32 %s23, 1
      %s29 = ssub.s32 %s23, 2
      %s30 = sadd.s32 %s23, 1
      %s31 = ssub.s32 %s23, %s30
      %p32 = scmp.eq.s32.totalorder %s31, 0
      %s34 = sadd.s32 %s33, 1
      %s35 = scalar_select %p32, %s33, %s34
      %p38 = pneg %p32
      %p39 = scmp.eq.s32.totalorder %s23, 1
      %p40 = por %p38, %p39
      %p41 = scmp.ne.s32.totalorder %s33, %s36
      %p42 = scmp.eq.s32.totalorder %s23, 0
      %p43 = por %p41, %p42
      %p44 = scmp.ne.s32.totalorder %s33, %s36
      %p45 = scmp.eq.s32.totalorder %s28, 1
      %p46 = por %p44, %p45
      %p47 = scmp.ne.s32.totalorder %s36, %s37
      %p48 = scmp.eq.s32.totalorder %s28, 0
      %p49 = por %p47, %p48
      %p50 = scmp.ne.s32.totalorder %s36, %s37
      %p51 = scmp.eq.s32.totalorder %s29, 1
      %p52 = por %p50, %p51
      %p54 = scmp.ne.s32.totalorder %s37, %s53
      %p55 = scmp.eq.s32.totalorder %s29, 0
      %p56 = por %p54, %p55
      %s57 = ssub.s32 %s23, %s30
      %p58 = scmp.eq.s32.totalorder %s57, 0
      %s60 = sadd.s32 %s59, 1
      %s61 = scalar_select %p58, %s59, %s60
      %p64 = pneg %p58
      %p65 = scmp.eq.s32.totalorder %s23, 1
      %p66 = por %p64, %p65
      %p67 = scmp.ne.s32.totalorder %s59, %s62
      %p68 = scmp.eq.s32.totalorder %s23, 0
      %p69 = por %p67, %p68
      %p70 = scmp.ne.s32.totalorder %s59, %s62
      %p71 = scmp.eq.s32.totalorder %s28, 1
      %p72 = por %p70, %p71
      %p73 = scmp.ne.s32.totalorder %s62, %s63
      %p74 = scmp.eq.s32.totalorder %s28, 0
      %p75 = por %p73, %p74
      %p76 = scmp.ne.s32.totalorder %s62, %s63
      %p77 = scmp.eq.s32.totalorder %s29, 1
      %p78 = por %p76, %p77
      %p80 = scmp.ne.s32.totalorder %s63, %s79
      %p81 = scmp.eq.s32.totalorder %s29, 0
      %p82 = por %p80, %p81
      %s84 = sadd.s32 %s83, 1
      %p87 = scmp.eq.s32.totalorder %s23, 1
      %p88 = scmp.ne.s32.totalorder %s83, %s85
      %p89 = scmp.eq.s32.totalorder %s23, 0
      %p90 = por %p88, %p89
      %p91 = scmp.ne.s32.totalorder %s83, %s85
      %p92 = scmp.eq.s32.totalorder %s28, 1
      %p93 = por %p91, %p92
      %p94 = scmp.ne.s32.totalorder %s85, %s86
      %p95 = scmp.eq.s32.totalorder %s28, 0
      %p96 = por %p94, %p95
      %p97 = scmp.ne.s32.totalorder %s85, %s86
      %p98 = scmp.eq.s32.totalorder %s29, 1
      %p99 = por %p97, %p98
      %p101 = scmp.ne.s32.totalorder %s86, %s100
      %p102 = scmp.eq.s32.totalorder %s29, 0
      %p103 = por %p101, %p102
      %s105 = sadd.s32 %s104, 1
      %p108 = scmp.eq.s32.totalorder %s23, 1
      %p109 = scmp.ne.s32.totalorder %s104, %s106
      %p110 = scmp.eq.s32.totalorder %s23, 0
      %p111 = por %p109, %p110
      %p112 = scmp.ne.s32.totalorder %s104, %s106
      %p113 = scmp.eq.s32.totalorder %s28, 1
      %p114 = por %p112, %p113
      %p115 = scmp.ne.s32.totalorder %s106, %s107
      %p116 = scmp.eq.s32.totalorder %s28, 0
      %p117 = por %p115, %p116
      %p118 = scmp.ne.s32.totalorder %s106, %s107
      %p119 = scmp.eq.s32.totalorder %s29, 1
      %p120 = por %p118, %p119
      %p122 = scmp.ne.s32.totalorder %s107, %s121
      %p123 = scmp.eq.s32.totalorder %s29, 0
      %p124 = por %p122, %p123
      %s126 = sadd.s32 %s125, 1
      %p129 = scmp.eq.s32.totalorder %s23, 1
      %p130 = scmp.ne.s32.totalorder %s125, %s127
      %p131 = scmp.eq.s32.totalorder %s23, 0
      %p132 = por %p130, %p131
      %p133 = scmp.ne.s32.totalorder %s125, %s127
      %p134 = scmp.eq.s32.totalorder %s28, 1
      %p135 = por %p133, %p134
      %p136 = scmp.ne.s32.totalorder %s127, %s128
      %p137 = scmp.eq.s32.totalorder %s28, 0
      %p138 = por %p136, %p137
      %p139 = scmp.ne.s32.totalorder %s127, %s128
      %p140 = scmp.eq.s32.totalorder %s29, 1
      %p141 = por %p139, %p140
      %p143 = scmp.ne.s32.totalorder %s128, %s142
      %p144 = scmp.eq.s32.totalorder %s29, 0
      %p145 = por %p143, %p144
      %s147 = sadd.s32 %s146, 1
      %p150 = scmp.eq.s32.totalorder %s23, 1
      %p151 = scmp.ne.s32.totalorder %s146, %s148
      %p152 = scmp.eq.s32.totalorder %s23, 0
      %p153 = por %p151, %p152
      %p154 = scmp.ne.s32.totalorder %s146, %s148
      %p155 = scmp.eq.s32.totalorder %s28, 1
      %p156 = por %p154, %p155
      %p157 = scmp.ne.s32.totalorder %s148, %s149
      %p158 = scmp.eq.s32.totalorder %s28, 0
      %p159 = por %p157, %p158
      %p160 = scmp.ne.s32.totalorder %s148, %s149
      %p161 = scmp.eq.s32.totalorder %s29, 1
      %p162 = por %p160, %p161
      %p164 = scmp.ne.s32.totalorder %s149, %s163
      %p165 = scmp.eq.s32.totalorder %s29, 0
      %p166 = por %p164, %p165
      %s168 = sadd.s32 %s167, 1
      %p171 = scmp.eq.s32.totalorder %s23, 1
      %p172 = scmp.ne.s32.totalorder %s167, %s169
      %p173 = scmp.eq.s32.totalorder %s23, 0
      %p174 = por %p172, %p173
      %p175 = scmp.ne.s32.totalorder %s167, %s169
      %p176 = scmp.eq.s32.totalorder %s28, 1
      %p177 = por %p175, %p176
      %p178 = scmp.ne.s32.totalorder %s169, %s170
      %p179 = scmp.eq.s32.totalorder %s28, 0
      %p180 = por %p178, %p179
      %p181 = scmp.ne.s32.totalorder %s169, %s170
      %p182 = scmp.eq.s32.totalorder %s29, 1
      %p183 = por %p181, %p182
      %p185 = scmp.ne.s32.totalorder %s170, %s184
      %p186 = scmp.eq.s32.totalorder %s29, 0
      %p187 = por %p185, %p186
      %s189 = sadd.s32 %s188, 1
      %p192 = scmp.eq.s32.totalorder %s23, 1
      %p193 = scmp.ne.s32.totalorder %s188, %s190
      %p194 = scmp.eq.s32.totalorder %s23, 0
      %p195 = por %p193, %p194
      %p196 = scmp.ne.s32.totalorder %s188, %s190
      %p197 = scmp.eq.s32.totalorder %s28, 1
      %p198 = por %p196, %p197
      %p199 = scmp.ne.s32.totalorder %s190, %s191
      %p200 = scmp.eq.s32.totalorder %s28, 0
      %p201 = por %p199, %p200
      %p202 = scmp.ne.s32.totalorder %s190, %s191
      %p203 = scmp.eq.s32.totalorder %s29, 1
      %p204 = por %p202, %p203
      %p206 = scmp.ne.s32.totalorder %s191, %s205
      %p207 = scmp.eq.s32.totalorder %s29, 0
      %p208 = por %p206, %p207
      %s210 = sadd.s32 %s209, 1
      %p213 = scmp.eq.s32.totalorder %s23, 1
      %p214 = scmp.ne.s32.totalorder %s209, %s211
      %p215 = scmp.eq.s32.totalorder %s23, 0
      %p216 = por %p214, %p215
      %p217 = scmp.ne.s32.totalorder %s209, %s211
      %p218 = scmp.eq.s32.totalorder %s28, 1
      %p219 = por %p217, %p218
      %p220 = scmp.ne.s32.totalorder %s211, %s212
      %p221 = scmp.eq.s32.totalorder %s28, 0
      %p222 = por %p220, %p221
      %p223 = scmp.ne.s32.totalorder %s211, %s212
      %p224 = scmp.eq.s32.totalorder %s29, 1
      %p225 = por %p223, %p224
      %p227 = scmp.ne.s32.totalorder %s212, %s226
      %p228 = scmp.eq.s32.totalorder %s29, 0
      %p229 = por %p227, %p228
      %s231 = sadd.s32 %s230, 1
      %p234 = scmp.eq.s32.totalorder %s23, 1
      %p235 = scmp.ne.s32.totalorder %s230, %s232
      %p236 = scmp.eq.s32.totalorder %s23, 0
      %p237 = por %p235, %p236
      %p238 = scmp.ne.s32.totalorder %s230, %s232
      %p239 = scmp.eq.s32.totalorder %s28, 1
      %p240 = por %p238, %p239
      %p241 = scmp.ne.s32.totalorder %s232, %s233
      %p242 = scmp.eq.s32.totalorder %s28, 0
      %p243 = por %p241, %p242
      %p244 = scmp.ne.s32.totalorder %s232, %s233
      %p245 = scmp.eq.s32.totalorder %s29, 1
      %p246 = por %p244, %p245
      %p248 = scmp.ne.s32.totalorder %s233, %s247
      %p249 = scmp.eq.s32.totalorder %s29, 0
      %p250 = por %p248, %p249
      %s252 = sadd.s32 %s251, 1
      %p255 = scmp.eq.s32.totalorder %s23, 1
      %p256 = scmp.ne.s32.totalorder %s251, %s253
      %p257 = scmp.eq.s32.totalorder %s23, 0
      %p258 = por %p256, %p257
      %p259 = scmp.ne.s32.totalorder %s251, %s253
      %p260 = scmp.eq.s32.totalorder %s28, 1
      %p261 = por %p259, %p260
      %p262 = scmp.ne.s32.totalorder %s253, %s254
      %p263 = scmp.eq.s32.totalorder %s28, 0
      %p264 = por %p262, %p263
      %p265 = scmp.ne.s32.totalorder %s253, %s254
      %p266 = scmp.eq.s32.totalorder %s29, 1
      %p267 = por %p265, %p266
      %p269 = scmp.ne.s32.totalorder %s254, %s268
      %p270 = scmp.eq.s32.totalorder %s29, 0
      %p271 = por %p269, %p270
      %s273 = sadd.s32 %s272, 1
      %p276 = scmp.eq.s32.totalorder %s23, 1
      %p277 = scmp.ne.s32.totalorder %s272, %s274
      %p278 = scmp.eq.s32.totalorder %s23, 0
      %p279 = por %p277, %p278
      %p280 = scmp.ne.s32.totalorder %s272, %s274
      %p281 = scmp.eq.s32.totalorder %s28, 1
      %p282 = por %p280, %p281
      %p283 = scmp.ne.s32.totalorder %s274, %s275
      %p284 = scmp.eq.s32.totalorder %s28, 0
      %p285 = por %p283, %p284
      %p286 = scmp.ne.s32.totalorder %s274, %s275
      %p287 = scmp.eq.s32.totalorder %s29, 1
      %p288 = por %p286, %p287
      %p290 = scmp.ne.s32.totalorder %s275, %s289
      %p291 = scmp.eq.s32.totalorder %s29, 0
      %p292 = por %p290, %p291
      %s294 = sadd.s32 %s293, 1
      %p297 = scmp.eq.s32.totalorder %s23, 1
      %p298 = scmp.ne.s32.totalorder %s293, %s295
      %p299 = scmp.eq.s32.totalorder %s23, 0
      %p300 = por %p298, %p299
      %p301 = scmp.ne.s32.totalorder %s293, %s295
      %p302 = scmp.eq.s32.totalorder %s28, 1
      %p303 = por %p301, %p302
      %p304 = scmp.ne.s32.totalorder %s295, %s296
      %p305 = scmp.eq.s32.totalorder %s28, 0
      %p306 = por %p304, %p305
      %p307 = scmp.ne.s32.totalorder %s295, %s296
      %p308 = scmp.eq.s32.totalorder %s29, 1
      %p309 = por %p307, %p308
      %p311 = scmp.ne.s32.totalorder %s296, %s310
      %p312 = scmp.eq.s32.totalorder %s29, 0
      %p313 = por %p311, %p312
      %s315 = sadd.s32 %s314, 1
      %p318 = scmp.eq.s32.totalorder %s23, 1
      %p319 = scmp.ne.s32.totalorder %s314, %s316
      %p320 = scmp.eq.s32.totalorder %s23, 0
      %p321 = por %p319, %p320
      %p322 = scmp.ne.s32.totalorder %s314, %s316
      %p323 = scmp.eq.s32.totalorder %s28, 1
      %p324 = por %p322, %p323
      %p325 = scmp.ne.s32.totalorder %s316, %s317
      %p326 = scmp.eq.s32.totalorder %s28, 0
      %p327 = por %p325, %p326
      %p328 = scmp.ne.s32.totalorder %s316, %s317
      %p329 = scmp.eq.s32.totalorder %s29, 1
      %p330 = por %p328, %p329
      %p332 = scmp.ne.s32.totalorder %s317, %s331
      %p333 = scmp.eq.s32.totalorder %s29, 0
      %p334 = por %p332, %p333
      %s336 = sadd.s32 %s335, 1
      %p339 = scmp.eq.s32.totalorder %s23, 1
      %p340 = scmp.ne.s32.totalorder %s335, %s337
      %p341 = scmp.eq.s32.totalorder %s23, 0
      %p342 = por %p340, %p341
      %p343 = scmp.ne.s32.totalorder %s335, %s337
      %p344 = scmp.eq.s32.totalorder %s28, 1
      %p345 = por %p343, %p344
      %p346 = scmp.ne.s32.totalorder %s337, %s338
      %p347 = scmp.eq.s32.totalorder %s28, 0
      %p348 = por %p346, %p347
      %p349 = scmp.ne.s32.totalorder %s337, %s338
      %p350 = scmp.eq.s32.totalorder %s29, 1
      %p351 = por %p349, %p350
      %p353 = scmp.ne.s32.totalorder %s338, %s352
      %p354 = scmp.eq.s32.totalorder %s29, 0
      %p355 = por %p353, %p354
      %s356 = ssub.s32 %s23, %s30
      %p357 = scmp.eq.s32.totalorder %s356, 0
      %s359 = sadd.s32 %s358, 1
      %s360 = scalar_select %p357, %s358, %s359
      %p363 = pneg %p357
      %p364 = scmp.eq.s32.totalorder %s23, 1
      %p365 = por %p363, %p364
      %p366 = scmp.ne.s32.totalorder %s358, %s361
      %p367 = scmp.eq.s32.totalorder %s23, 0
      %p368 = por %p366, %p367
      %p369 = scmp.ne.s32.totalorder %s358, %s361
      %p370 = scmp.eq.s32.totalorder %s28, 1
      %p371 = por %p369, %p370
      %p372 = scmp.ne.s32.totalorder %s361, %s362
      %p373 = scmp.eq.s32.totalorder %s28, 0
      %p374 = por %p372, %p373
      %p375 = scmp.ne.s32.totalorder %s361, %s362
      %p376 = scmp.eq.s32.totalorder %s29, 1
      %p377 = por %p375, %p376
      %p379 = scmp.ne.s32.totalorder %s362, %s378
      %p380 = scmp.eq.s32.totalorder %s29, 0
      %p381 = por %p379, %p380
      %p382 = scmp.le.s32.totalorder 1, %s23
      %p383 = scmp.lt.s32.totalorder %s23, 3
      %p384 = pnand %p382, %p383
      %p385 = pneg %p384
      // Predicated region
      $region9: #{gate_forward.1} parent=5 // pred_check
        _
      $region10: #{gate_forward.1} parent=5 // pred_check_branch
        %387 = sbr.rel (%p384) target = $region12
      $region11: #{gate_forward.1} parent=5 // pred_region
        %s388 = ssub.s32 %s23, 1
        // Predicated region
        $region13: #{gate_forward.1} parent=11 // pred_check
          %p389 = pneg %p96
        $region14: #{gate_forward.1} parent=11 // pred_check_branch
          %391 = sbr.rel (%p389) target = $region16
        $region15: #{gate_forward.1} parent=11 // pred_region
          _
        $region16: #{gate_forward.1} parent=11 // pred_fallthru
          _
        // Predicated region
        $region17: #{gate_forward.1} parent=11 // pred_check
          %p392 = pneg %p117
        $region18: #{gate_forward.1} parent=11 // pred_check_branch
          %394 = sbr.rel (%p392) target = $region20
        $region19: #{gate_forward.1} parent=11 // pred_region
          _
        $region20: #{gate_forward.1} parent=11 // pred_fallthru
          _
        // Predicated region
        $region21: #{gate_forward.1} parent=11 // pred_check
          %p395 = pneg %p138
        $region22: #{gate_forward.1} parent=11 // pred_check_branch
          %397 = sbr.rel (%p395) target = $region24
        $region23: #{gate_forward.1} parent=11 // pred_region
          _
        $region24: #{gate_forward.1} parent=11 // pred_fallthru
          _
        // Predicated region
        $region25: #{gate_forward.1} parent=11 // pred_check
          %p398 = pneg %p159
        $region26: #{gate_forward.1} parent=11 // pred_check_branch
          %400 = sbr.rel (%p398) target = $region28
        $region27: #{gate_forward.1} parent=11 // pred_region
          _
        $region28: #{gate_forward.1} parent=11 // pred_fallthru
          _
        // Predicated region
        $region29: #{gate_forward.1} parent=11 // pred_check
          %p401 = pneg %p180
        $region30: #{gate_forward.1} parent=11 // pred_check_branch
          %403 = sbr.rel (%p401) target = $region32
        $region31: #{gate_forward.1} parent=11 // pred_region
          _
        $region32: #{gate_forward.1} parent=11 // pred_fallthru
          _
        // Predicated region
        $region33: #{gate_forward.1} parent=11 // pred_check
          %p404 = pneg %p201
        $region34: #{gate_forward.1} parent=11 // pred_check_branch
          %406 = sbr.rel (%p404) target = $region36
        $region35: #{gate_forward.1} parent=11 // pred_region
          _
        $region36: #{gate_forward.1} parent=11 // pred_fallthru
          _
        // Predicated region
        $region37: #{gate_forward.1} parent=11 // pred_check
          %p407 = pneg %p222
        $region38: #{gate_forward.1} parent=11 // pred_check_branch
          %409 = sbr.rel (%p407) target = $region40
        $region39: #{gate_forward.1} parent=11 // pred_region
          %s411 = ssub.s32 512, 512
          %412 = vsyncadd [#allocation3], %s411
          %s413 = sshll.u32 [#allocation2], 4
          %s414 = int_to_ptr.vmem [resolvable:$true] %s413
          %419 = dma.hbm_to_vmem [thread:$0]  %s8, 512, %s414, [#allocation3], 128, 128, 8
        $region40: #{gate_forward.1} parent=11 // pred_fallthru
          _
        // Predicated region
        $region41: #{gate_forward.1} parent=11 // pred_check
          %p420 = pneg %p243
        $region42: #{gate_forward.1} parent=11 // pred_check_branch
          %422 = sbr.rel (%p420) target = $region44
        $region43: #{gate_forward.1} parent=11 // pred_region
          _
        $region44: #{gate_forward.1} parent=11 // pred_fallthru
          _
        // Predicated region
        $region45: #{gate_forward.1} parent=11 // pred_check
          %p423 = pneg %p264
        $region46: #{gate_forward.1} parent=11 // pred_check_branch
          %425 = sbr.rel (%p423) target = $region48
        $region47: #{gate_forward.1} parent=11 // pred_region
          _
        $region48: #{gate_forward.1} parent=11 // pred_fallthru
          _
        // Predicated region
        $region49: #{gate_forward.1} parent=11 // pred_check
          %p426 = pneg %p285
        $region50: #{gate_forward.1} parent=11 // pred_check_branch
          %428 = sbr.rel (%p426) target = $region52
        $region51: #{gate_forward.1} parent=11 // pred_region
          _
        $region52: #{gate_forward.1} parent=11 // pred_fallthru
          _
        // Predicated region
        $region53: #{gate_forward.1} parent=11 // pred_check
          %p429 = pneg %p306
        $region54: #{gate_forward.1} parent=11 // pred_check_branch
          %431 = sbr.rel (%p429) target = $region56
        $region55: #{gate_forward.1} parent=11 // pred_region
          %s433 = ssub.s32 8064, 8064
          %434 = vsyncadd [#allocation5], %s433
          %s435 = sshll.u32 [#allocation4], 4
          %s436 = int_to_ptr.vmem [resolvable:$true] %s435
          %441 = dma.hbm_to_vmem [thread:$0]  %s12, 8064, %s436, [#allocation5], 128, 128, 8
        $region56: #{gate_forward.1} parent=11 // pred_fallthru
          _
        // Predicated region
        $region57: #{gate_forward.1} parent=11 // pred_check
          %p442 = pneg %p327
        $region58: #{gate_forward.1} parent=11 // pred_check_branch
          %444 = sbr.rel (%p442) target = $region60
        $region59: #{gate_forward.1} parent=11 // pred_region
          _
        $region60: #{gate_forward.1} parent=11 // pred_fallthru
          _
        // Predicated region
        $region61: #{gate_forward.1} parent=11 // pred_check
          %p445 = pneg %p348
        $region62: #{gate_forward.1} parent=11 // pred_check_branch
          %447 = sbr.rel (%p445) target = $region64
        $region63: #{gate_forward.1} parent=11 // pred_region
          _
        $region64: #{gate_forward.1} parent=11 // pred_fallthru
          _
      $region12: #{gate_forward.1} parent=5 // pred_fallthru
        _
      %p448 = scmp.lt.s32.totalorder %s23, 2
      // Predicated region
      $region65: #{gate_forward.1} parent=5 // pred_check
        %p449 = pneg %p448
      $region66: #{gate_forward.1} parent=5 // pred_check_branch
        %451 = sbr.rel (%p449) target = $region68
      $region67: #{gate_forward.1} parent=5 // pred_region
        // Predicated region
        $region69: #{gate_forward.1} parent=67 // pred_check
          %p452 = pneg %p43
        $region70: #{gate_forward.1} parent=67 // pred_check_branch
          %454 = sbr.rel (%p452) target = $region72
        $region71: #{gate_forward.1} parent=67 // pred_region
          %p455 = scmp.lt.s32.totalorder %s23, 1
          %s456 = scalar_select %p455, %s23, 1
          %s457 = smul.addr %s456, 7
          %s458 = smul.addr %s457, 8
          %s459 = scalar_lea.vmem %s0, %s458
        $region72: #{gate_forward.1} parent=67 // pred_fallthru
          _
        // Predicated region
        $region73: #{gate_forward.1} parent=67 // pred_check
          %p460 = pneg %p69
        $region74: #{gate_forward.1} parent=67 // pred_check_branch
          %462 = sbr.rel (%p460) target = $region76
        $region75: #{gate_forward.1} parent=67 // pred_region
          %p463 = scmp.lt.s32.totalorder %s23, 1
          %s464 = scalar_select %p463, %s23, 1
          %s465 = smul.addr %s464, 8
          %s466 = scalar_lea.vmem %s1, %s465
        $region76: #{gate_forward.1} parent=67 // pred_fallthru
          _
      $region68: #{gate_forward.1} parent=5 // pred_fallthru
        _
      %p467 = scmp.le.s32.totalorder 1, %s23
      %p468 = scmp.lt.s32.totalorder %s23, 3
      %p469 = pnand %p467, %p468
      %p470 = pneg %p469
      // Predicated region
      $region77: #{gate_forward.1} parent=5 // pred_check
        _
      $region78: #{gate_forward.1} parent=5 // pred_check_branch
        %472 = sbr.rel (%p469) target = $region80
      $region79: #{gate_forward.1} parent=5 // pred_region
        %s473 = ssub.s32 %s23, 1
        // Predicated region
        $region81: #{gate_forward.1} parent=79 // pred_check
          %p474 = pneg %p222
        $region82: #{gate_forward.1} parent=79 // pred_check_branch
          %476 = sbr.rel (%p474) target = $region84
        $region83: #{gate_forward.1} parent=79 // pred_region
          %477 = dma.done [#allocation3], 512
        $region84: #{gate_forward.1} parent=79 // pred_fallthru
          _
        // Predicated region
        $region85: #{gate_forward.1} parent=79 // pred_check
          %p478 = pneg %p306
        $region86: #{gate_forward.1} parent=79 // pred_check_branch
          %480 = sbr.rel (%p478) target = $region88
        $region87: #{gate_forward.1} parent=79 // pred_region
          %481 = dma.done [#allocation5], 8064
        $region88: #{gate_forward.1} parent=79 // pred_fallthru
          _
        %p482 = scmp.lt.s32.totalorder %s28, 1
        %s483 = scalar_select %p482, %s28, 1
        %s484 = smul.addr %s483, 7
        %s485 = smul.addr %s484, 8
        %s486 = scalar_lea.vmem %s0, %s485
        %p487 = pneg %p49
        %p488 = pneg %p46
        %p489 = scmp.lt.s32.totalorder %s28, 1
        %s490 = scalar_select %p489, %s28, 1
        %s491 = smul.addr %s490, 8
        %s492 = scalar_lea.vmem %s1, %s491
        %p493 = pneg %p75
        %p494 = pneg %p72
        %p495 = pneg %p96
        %p496 = pneg %p93
        %p497 = pneg %p117
        %p498 = pneg %p114
        %p499 = pneg %p138
        %p500 = pneg %p135
        %p501 = pneg %p159
        %p502 = pneg %p156
        %p503 = pneg %p180
        %p504 = pneg %p177
        %p505 = pneg %p201
        %p506 = pneg %p198
        %p507 = pneg %p222
        %p508 = pneg %p219
        %p509 = pneg %p243
        %p510 = pneg %p240
        %p511 = pneg %p264
        %p512 = pneg %p261
        %p513 = pneg %p285
        %p514 = pneg %p282
        %p515 = pneg %p306
        %p516 = pneg %p303
        %p517 = pneg %p327
        %p518 = pneg %p324
        %p519 = pneg %p348
        %p520 = pneg %p345
        %p521 = pneg %p374
        %p522 = pneg %p371
        %p523 = scmp.lt.s32.totalorder %s28, 1
        %s524 = scalar_select %p523, %s28, 1
        %s525 = smul.addr %s524, 7
        %s526 = smul.addr %s525, 8
        %s527 = scalar_lea.vmem %s15, %s526
        %p528 = scmp.lt.s32.totalorder %s28, 1
        %s529 = scalar_select %p528, %s28, 1
        %s530 = smul.addr %s529, 7
        %s531 = smul.addr %s530, 8
        %s532 = scalar_lea.vmem %s0, %s531
        %p533 = scmp.lt.s32.totalorder %s28, 1
        %s534 = scalar_select %p533, %s28, 1
        %s535 = smul.addr %s534, 8
        %s536 = scalar_lea.vmem %s1, %s535
        %p537 = scmp.lt.s32.totalorder %s28, 1
        %s538 = scalar_select %p537, %s28, 1
        %s539 = smul.addr %s538, 7
        %s540 = smul.addr %s539, 8
        %s541 = scalar_lea.vmem %s15, %s540
        %v542 = vld [vmem:[%s532] sm:$0xff]
        %v543 = vld [vmem:[%s532 + $0x8] sm:$0xff]
        %v544 = vld [vmem:[%s532 + $0x10] sm:$0xff]
        %v545 = vld [vmem:[%s532 + $0x18] sm:$0xff]
        %v546 = vld [vmem:[%s532 + $0x20] sm:$0xff]
        %v547 = vld [vmem:[%s532 + $0x28] sm:$0xff]
        %v548 = vld [vmem:[%s532 + $0x30] sm:$0x1]
        %v549 = vld [vmem:[%s536] sm:$0xff]
        %v550 = vld [vmem:[%s2] sm:$0xff]
        %v551 = vld [vmem:[%s2 + $0x8] sm:$0xff]
        %v552 = vld [vmem:[%s2 + $0x10] sm:$0xff]
        %v553 = vld [vmem:[%s2 + $0x18] sm:$0xff]
        %v554 = vld [vmem:[%s3] sm:$0x1]
        %v556 = vlaneseq
        %v557 = vshrl.u32 %v556, 7
        %v558 = vsub.s32 0, %v557
        %v559 = vrot.slane %v554, %v558
        %vm561 = vcmask 261120
        %v563 = vsel %vm561, %v542, 0
        %v566 = vsel %vm561, %v543, 0
        %v569 = vsel %vm561, %v544, 0
        %v572 = vsel %vm561, %v545, 0
        %v575 = vsel %vm561, %v546, 0
        %v578 = vsel %vm561, %v547, 0
        %v581 = vsel %vm561, %v548, 0
        %583 = vmatprep.subr.mxu0 0.0
        %584 = vmatpush1.msra.mxu0 0.0
        %585 = vmatprep.subr.mxu0 0.0
        %586 = vmatpush1.msra.mxu0 0.0
        %587 = vmatprep.subr.mxu0 0.0
        %588 = vmatpush1.msra.mxu0 0.0
        %589 = vmatprep.subr.mxu0 0.0
        %590 = vmatpush1.msra.mxu0 0.0
        %591 = vmatprep.subr.mxu0 0.0
        %592 = vmatpush1.msra.mxu0 0.0
        %593 = vmatprep.subr.mxu0 0.0
        %594 = vmatpush1.msra.mxu0 0.0
        %595 = vmatprep.subr.mxu0 0.0
        %596 = vmatpush1.msra.mxu0 0.0
        %597 = vmatprep.subr.mxu0 0.0
        %598 = vmatpush1.msra.mxu0 0.0
        %599 = vmatprep.subr.mxu0 0.0
        %600 = vmatpush1.msra.mxu0 0.0
        %601 = vmatprep.subr.mxu0 0.0
        %602 = vmatpush1.msra.mxu0 0.0
        %603 = vmatprep.subr.mxu0 0.0
        %604 = vmatpush1.msra.mxu0 0.0
        %605 = vmatprep.subr.mxu0 0.0
        %606 = vmatpush1.msra.mxu0 0.0
        %607 = vmatprep.subr.mxu0 0.0
        %608 = vmatpush1.msra.mxu0 %v553
        %609 = vmatprep.subr.mxu0 0.0
        %610 = vmatpush1.msra.mxu0 %v552
        %611 = vmatprep.subr.mxu0 0.0
        %612 = vmatpush1.msra.mxu0 %v551
        %613 = vmatprep.subr.mxu0 0.0
        %614 = vmatpush1.msra.mxu0 %v550
        %615 = vmatprep.subr.mxu0 0.0
        %616 = vmatpush2.msra.mxu0 0.0
        %617 = vmatprep.subr.mxu0 0.0
        %618 = vmatpush2.msra.mxu0 0.0
        %619 = vmatprep.subr.mxu0 0.0
        %620 = vmatpush2.msra.mxu0 0.0
        %621 = vmatprep.subr.mxu0 0.0
        %622 = vmatpush2.msra.mxu0 0.0
        %623 = vmatprep.subr.mxu0 0.0
        %624 = vmatpush2.msra.mxu0 0.0
        %625 = vmatprep.subr.mxu0 0.0
        %626 = vmatpush2.msra.mxu0 0.0
        %627 = vmatprep.subr.mxu0 0.0
        %628 = vmatpush2.msra.mxu0 0.0
        %629 = vmatprep.subr.mxu0 0.0
        %630 = vmatpush2.msra.mxu0 0.0
        %631 = vmatprep.subr.mxu0 0.0
        %632 = vmatpush2.msra.mxu0 0.0
        %633 = vmatprep.subr.mxu0 0.0
        %634 = vmatpush2.msra.mxu0 0.0
        %635 = vmatprep.subr.mxu0 0.0
        %636 = vmatpush2.msra.mxu0 0.0
        %637 = vmatprep.subr.mxu0 0.0
        %638 = vmatpush2.msra.mxu0 0.0
        %639 = vmatprep.subr.mxu0 0.0
        %640 = vmatpush2.msra.mxu0 0.0
        %641 = vmatprep.subr.mxu0 0.0
        %642 = vmatpush2.msra.mxu0 0.0
        %643 = vmatprep.subr.mxu0 0.0
        %644 = vmatpush2.msra.mxu0 0.0
        %645 = vmatprep.subr.mxu0 0.0
        %646 = vmatpush2.msra.mxu0 0.0
        %647 = vmatprep.mubr.f32.mxu0 0.0
        %648 = vmatmul.mubr.f32.gmra.mxu0 %v563
        %v649 = vpop.f32.mrf.mxu0
        %v650 = vadd.f32 %v559, %v649
        %v651 = vpop.f32.mrf.mxu0
        %652 = vmatprep.mubr.f32.mxu0 0.0
        %653 = vmatmul.mubr.f32.gmra.mxu0 %v566
        %v654 = vpop.f32.mrf.mxu0
        %v655 = vadd.f32 %v559, %v654
        %v656 = vpop.f32.mrf.mxu0
        %657 = vmatprep.mubr.f32.mxu0 0.0
        %658 = vmatmul.mubr.f32.gmra.mxu0 %v569
        %v659 = vpop.f32.mrf.mxu0
        %v660 = vadd.f32 %v559, %v659
        %v661 = vpop.f32.mrf.mxu0
        %662 = vmatprep.mubr.f32.mxu0 0.0
        %663 = vmatmul.mubr.f32.gmra.mxu0 %v572
        %v664 = vpop.f32.mrf.mxu0
        %v665 = vadd.f32 %v559, %v664
        %v666 = vpop.f32.mrf.mxu0
        %667 = vmatprep.mubr.f32.mxu0 0.0
        %668 = vmatmul.mubr.f32.gmra.mxu0 %v575
        %v669 = vpop.f32.mrf.mxu0
        %v670 = vadd.f32 %v559, %v669
        %v671 = vpop.f32.mrf.mxu0
        %672 = vmatprep.mubr.f32.mxu0 0.0
        %673 = vmatmul.mubr.f32.gmra.mxu0 %v578
        %v674 = vpop.f32.mrf.mxu0
        %v675 = vadd.f32 %v559, %v674
        %v676 = vpop.f32.mrf.mxu0
        %677 = vmatprep.mubr.f32.mxu0 0.0
        %678 = vmatmul.mubr.f32.gmra.mxu0 %v581
        %v679 = vpop.f32.mrf.mxu0
        %v680 = vadd.f32 %v559, %v679
        %v681 = vpop.f32.mrf.mxu0
        %682 = vdwg.mxu0
        %v683 = vld [vmem:[%s4] sm:$0xff]
        %v684 = vld [vmem:[%s4 + $0x8] sm:$0xff]
        %v685 = vld [vmem:[%s4 + $0x10] sm:$0xff]
        %v686 = vld [vmem:[%s4 + $0x18] sm:$0xff]
        %v687 = vld [vmem:[%s5] sm:$0x1]
        %v689 = vlaneseq
        %v690 = vshrl.u32 %v689, 7
        %v691 = vsub.s32 0, %v690
        %v692 = vrot.slane %v687, %v691
        %v695 = vsel %vm561, %v549, 0
        %697 = vmatprep.subr.mxu0 0.0
        %698 = vmatpush1.msra.mxu0 0.0
        %699 = vmatprep.subr.mxu0 0.0
        %700 = vmatpush1.msra.mxu0 0.0
        %701 = vmatprep.subr.mxu0 0.0
        %702 = vmatpush1.msra.mxu0 0.0
        %703 = vmatprep.subr.mxu0 0.0
        %704 = vmatpush1.msra.mxu0 0.0
        %705 = vmatprep.subr.mxu0 0.0
        %706 = vmatpush1.msra.mxu0 0.0
        %707 = vmatprep.subr.mxu0 0.0
        %708 = vmatpush1.msra.mxu0 0.0
        %709 = vmatprep.subr.mxu0 0.0
        %710 = vmatpush1.msra.mxu0 0.0
        %711 = vmatprep.subr.mxu0 0.0
        %712 = vmatpush1.msra.mxu0 0.0
        %713 = vmatprep.subr.mxu0 0.0
        %714 = vmatpush1.msra.mxu0 0.0
        %715 = vmatprep.subr.mxu0 0.0
        %716 = vmatpush1.msra.mxu0 0.0
        %717 = vmatprep.subr.mxu0 0.0
        %718 = vmatpush1.msra.mxu0 0.0
        %719 = vmatprep.subr.mxu0 0.0
        %720 = vmatpush1.msra.mxu0 0.0
        %721 = vmatprep.subr.mxu0 0.0
        %722 = vmatpush1.msra.mxu0 %v686
        %723 = vmatprep.subr.mxu0 0.0
        %724 = vmatpush1.msra.mxu0 %v685
        %725 = vmatprep.subr.mxu0 0.0
        %726 = vmatpush1.msra.mxu0 %v684
        %727 = vmatprep.subr.mxu0 0.0
        %728 = vmatpush1.msra.mxu0 %v683
        %729 = vmatprep.subr.mxu0 0.0
        %730 = vmatpush2.msra.mxu0 0.0
        %731 = vmatprep.subr.mxu0 0.0
        %732 = vmatpush2.msra.mxu0 0.0
        %733 = vmatprep.subr.mxu0 0.0
        %734 = vmatpush2.msra.mxu0 0.0
        %735 = vmatprep.subr.mxu0 0.0
        %736 = vmatpush2.msra.mxu0 0.0
        %737 = vmatprep.subr.mxu0 0.0
        %738 = vmatpush2.msra.mxu0 0.0
        %739 = vmatprep.subr.mxu0 0.0
        %740 = vmatpush2.msra.mxu0 0.0
        %741 = vmatprep.subr.mxu0 0.0
        %742 = vmatpush2.msra.mxu0 0.0
        %743 = vmatprep.subr.mxu0 0.0
        %744 = vmatpush2.msra.mxu0 0.0
        %745 = vmatprep.subr.mxu0 0.0
        %746 = vmatpush2.msra.mxu0 0.0
        %747 = vmatprep.subr.mxu0 0.0
        %748 = vmatpush2.msra.mxu0 0.0
        %749 = vmatprep.subr.mxu0 0.0
        %750 = vmatpush2.msra.mxu0 0.0
        %751 = vmatprep.subr.mxu0 0.0
        %752 = vmatpush2.msra.mxu0 0.0
        %753 = vmatprep.subr.mxu0 0.0
        %754 = vmatpush2.msra.mxu0 0.0
        %755 = vmatprep.subr.mxu0 0.0
        %756 = vmatpush2.msra.mxu0 0.0
        %757 = vmatprep.subr.mxu0 0.0
        %758 = vmatpush2.msra.mxu0 0.0
        %759 = vmatprep.subr.mxu0 0.0
        %760 = vmatpush2.msra.mxu0 0.0
        %761 = vmatprep.mubr.f32.mxu0 0.0
        %762 = vmatmul.mubr.f32.gmra.mxu0 %v695
        %v763 = vpop.f32.mrf.mxu0
        %v764 = vadd.f32 %v692, %v763
        %v765 = vpop.f32.mrf.mxu0
        %766 = vdwg.mxu0
        %v767 = vld [vmem:[%s6] sm:$0xff]
        %v768 = vld [vmem:[%s6 + $0x8] sm:$0xff]
        %v769 = vld [vmem:[%s6 + $0x10] sm:$0xff]
        %v770 = vld [vmem:[%s6 + $0x18] sm:$0xff]
        %v771 = vld [vmem:[%s7] sm:$0x1]
        %v773 = vlaneseq
        %v774 = vshrl.u32 %v773, 7
        %v775 = vsub.s32 0, %v774
        %v776 = vrot.slane %v771, %v775
        %778 = vmatprep.subr.mxu0 0.0
        %779 = vmatpush1.msra.mxu0 0.0
        %780 = vmatprep.subr.mxu0 0.0
        %781 = vmatpush1.msra.mxu0 0.0
        %782 = vmatprep.subr.mxu0 0.0
        %783 = vmatpush1.msra.mxu0 0.0
        %784 = vmatprep.subr.mxu0 0.0
        %785 = vmatpush1.msra.mxu0 0.0
        %786 = vmatprep.subr.mxu0 0.0
        %787 = vmatpush1.msra.mxu0 0.0
        %788 = vmatprep.subr.mxu0 0.0
        %789 = vmatpush1.msra.mxu0 0.0
        %790 = vmatprep.subr.mxu0 0.0
        %791 = vmatpush1.msra.mxu0 0.0
        %792 = vmatprep.subr.mxu0 0.0
        %793 = vmatpush1.msra.mxu0 0.0
        %794 = vmatprep.subr.mxu0 0.0
        %795 = vmatpush1.msra.mxu0 0.0
        %796 = vmatprep.subr.mxu0 0.0
        %797 = vmatpush1.msra.mxu0 0.0
        %798 = vmatprep.subr.mxu0 0.0
        %799 = vmatpush1.msra.mxu0 0.0
        %800 = vmatprep.subr.mxu0 0.0
        %801 = vmatpush1.msra.mxu0 0.0
        %802 = vmatprep.subr.mxu0 0.0
        %803 = vmatpush1.msra.mxu0 %v770
        %804 = vmatprep.subr.mxu0 0.0
        %805 = vmatpush1.msra.mxu0 %v769
        %806 = vmatprep.subr.mxu0 0.0
        %807 = vmatpush1.msra.mxu0 %v768
        %808 = vmatprep.subr.mxu0 0.0
        %809 = vmatpush1.msra.mxu0 %v767
        %810 = vmatprep.subr.mxu0 0.0
        %811 = vmatpush2.msra.mxu0 0.0
        %812 = vmatprep.subr.mxu0 0.0
        %813 = vmatpush2.msra.mxu0 0.0
        %814 = vmatprep.subr.mxu0 0.0
        %815 = vmatpush2.msra.mxu0 0.0
        %816 = vmatprep.subr.mxu0 0.0
        %817 = vmatpush2.msra.mxu0 0.0
        %818 = vmatprep.subr.mxu0 0.0
        %819 = vmatpush2.msra.mxu0 0.0
        %820 = vmatprep.subr.mxu0 0.0
        %821 = vmatpush2.msra.mxu0 0.0
        %822 = vmatprep.subr.mxu0 0.0
        %823 = vmatpush2.msra.mxu0 0.0
        %824 = vmatprep.subr.mxu0 0.0
        %825 = vmatpush2.msra.mxu0 0.0
        %826 = vmatprep.subr.mxu0 0.0
        %827 = vmatpush2.msra.mxu0 0.0
        %828 = vmatprep.subr.mxu0 0.0
        %829 = vmatpush2.msra.mxu0 0.0
        %830 = vmatprep.subr.mxu0 0.0
        %831 = vmatpush2.msra.mxu0 0.0
        %832 = vmatprep.subr.mxu0 0.0
        %833 = vmatpush2.msra.mxu0 0.0
        %834 = vmatprep.subr.mxu0 0.0
        %835 = vmatpush2.msra.mxu0 0.0
        %836 = vmatprep.subr.mxu0 0.0
        %837 = vmatpush2.msra.mxu0 0.0
        %838 = vmatprep.subr.mxu0 0.0
        %839 = vmatpush2.msra.mxu0 0.0
        %840 = vmatprep.subr.mxu0 0.0
        %841 = vmatpush2.msra.mxu0 0.0
        %842 = vmatprep.mubr.f32.mxu0 0.0
        %843 = vmatmul.mubr.f32.gmra.mxu0 %v695
        %v844 = vpop.f32.mrf.mxu0
        %v845 = vadd.f32 %v776, %v844
        %v846 = vpop.f32.mrf.mxu0
        %847 = vdwg.mxu0
        %v848 = vld [vmem:[#allocation2] sm:$0xff]
        %v849 = vld [vmem:[#allocation2 + $0x8] sm:$0xff]
        %v850 = vld [vmem:[#allocation2 + $0x10] sm:$0xff]
        %v851 = vld [vmem:[#allocation2 + $0x18] sm:$0xff]
        %vm852 = vcmask 64512
        %v854 = vsel %vm852, %v650, 0
        %v857 = vsel %vm852, %v655, 0
        %v860 = vsel %vm852, %v660, 0
        %v863 = vsel %vm852, %v665, 0
        %v866 = vsel %vm852, %v670, 0
        %v869 = vsel %vm852, %v675, 0
        %v872 = vsel %vm852, %v680, 0
        %v875 = vsel %vm852, %v764, 0
        %877 = vmatprep.subr.mxu0 0.0
        %878 = vmatpush1.xpose.msra.mxu0 0.0
        %879 = vmatprep.subr.mxu0 0.0
        %880 = vmatpush1.xpose.msra.mxu0 0.0
        %881 = vmatprep.subr.mxu0 0.0
        %882 = vmatpush1.xpose.msra.mxu0 0.0
        %883 = vmatprep.subr.mxu0 0.0
        %884 = vmatpush1.xpose.msra.mxu0 0.0
        %885 = vmatprep.subr.mxu0 0.0
        %886 = vmatpush1.xpose.msra.mxu0 0.0
        %887 = vmatprep.subr.mxu0 0.0
        %888 = vmatpush1.xpose.msra.mxu0 0.0
        %889 = vmatprep.subr.mxu0 0.0
        %890 = vmatpush1.xpose.msra.mxu0 0.0
        %891 = vmatprep.subr.mxu0 0.0
        %892 = vmatpush1.xpose.msra.mxu0 0.0
        %893 = vmatprep.subr.mxu0 0.0
        %894 = vmatpush1.xpose.msra.mxu0 0.0
        %895 = vmatprep.subr.mxu0 0.0
        %896 = vmatpush1.xpose.msra.mxu0 0.0
        %897 = vmatprep.subr.mxu0 0.0
        %898 = vmatpush1.xpose.msra.mxu0 0.0
        %899 = vmatprep.subr.mxu0 0.0
        %900 = vmatpush1.xpose.msra.mxu0 0.0
        %901 = vmatprep.subr.mxu0 0.0
        %902 = vmatpush1.xpose.msra.mxu0 0.0
        %903 = vmatprep.subr.mxu0 0.0
        %904 = vmatpush1.xpose.msra.mxu0 0.0
        %905 = vmatprep.subr.mxu0 0.0
        %906 = vmatpush1.xpose.msra.mxu0 0.0
        %907 = vmatprep.subr.mxu0 0.0
        %908 = vmatpush1.xpose.msra.mxu0 %v875
        %909 = vmatprep.subr.mxu0 0.0
        %910 = vmatpush2.xpose.msra.mxu0 0.0
        %911 = vmatprep.subr.mxu0 0.0
        %912 = vmatpush2.xpose.msra.mxu0 0.0
        %913 = vmatprep.subr.mxu0 0.0
        %914 = vmatpush2.xpose.msra.mxu0 0.0
        %915 = vmatprep.subr.mxu0 0.0
        %916 = vmatpush2.xpose.msra.mxu0 0.0
        %917 = vmatprep.subr.mxu0 0.0
        %918 = vmatpush2.xpose.msra.mxu0 0.0
        %919 = vmatprep.subr.mxu0 0.0
        %920 = vmatpush2.xpose.msra.mxu0 0.0
        %921 = vmatprep.subr.mxu0 0.0
        %922 = vmatpush2.xpose.msra.mxu0 0.0
        %923 = vmatprep.subr.mxu0 0.0
        %924 = vmatpush2.xpose.msra.mxu0 0.0
        %925 = vmatprep.subr.mxu0 0.0
        %926 = vmatpush2.xpose.msra.mxu0 0.0
        %927 = vmatprep.subr.mxu0 0.0
        %928 = vmatpush2.xpose.msra.mxu0 0.0
        %929 = vmatprep.subr.mxu0 0.0
        %930 = vmatpush2.xpose.msra.mxu0 0.0
        %931 = vmatprep.subr.mxu0 0.0
        %932 = vmatpush2.xpose.msra.mxu0 0.0
        %933 = vmatprep.subr.mxu0 0.0
        %934 = vmatpush2.xpose.msra.mxu0 0.0
        %935 = vmatprep.subr.mxu0 0.0
        %936 = vmatpush2.xpose.msra.mxu0 0.0
        %937 = vmatprep.subr.mxu0 0.0
        %938 = vmatpush2.xpose.msra.mxu0 0.0
        %939 = vmatprep.subr.mxu0 0.0
        %940 = vmatpush2.xpose.msra.mxu0 0.0
        %941 = vmatprep.mubr.f32.mxu0 0.0
        %942 = vmatmul.mubr.f32.gmra.mxu0 %v854
        %v943 = vpop.f32.mrf.mxu0
        %v944 = vadd.f32 0.0, %v943
        %v945 = vpop.f32.mrf.mxu0
        %946 = vmatprep.mubr.f32.mxu0 0.0
        %947 = vmatmul.mubr.f32.gmra.mxu0 %v857
        %v948 = vpop.f32.mrf.mxu0
        %v949 = vadd.f32 0.0, %v948
        %v950 = vpop.f32.mrf.mxu0
        %951 = vmatprep.mubr.f32.mxu0 0.0
        %952 = vmatmul.mubr.f32.gmra.mxu0 %v860
        %v953 = vpop.f32.mrf.mxu0
        %v954 = vadd.f32 0.0, %v953
        %v955 = vpop.f32.mrf.mxu0
        %956 = vmatprep.mubr.f32.mxu0 0.0
        %957 = vmatmul.mubr.f32.gmra.mxu0 %v863
        %v958 = vpop.f32.mrf.mxu0
        %v959 = vadd.f32 0.0, %v958
        %v960 = vpop.f32.mrf.mxu0
        %961 = vmatprep.mubr.f32.mxu0 0.0
        %962 = vmatmul.mubr.f32.gmra.mxu0 %v866
        %v963 = vpop.f32.mrf.mxu0
        %v964 = vadd.f32 0.0, %v963
        %v965 = vpop.f32.mrf.mxu0
        %966 = vmatprep.mubr.f32.mxu0 0.0
        %967 = vmatmul.mubr.f32.gmra.mxu0 %v869
        %v968 = vpop.f32.mrf.mxu0
        %v969 = vadd.f32 0.0, %v968
        %v970 = vpop.f32.mrf.mxu0
        %971 = vmatprep.mubr.f32.mxu0 0.0
        %972 = vmatmul.mubr.f32.gmra.mxu0 %v872
        %v973 = vpop.f32.mrf.mxu0
        %v974 = vadd.f32 0.0, %v973
        %v975 = vpop.f32.mrf.mxu0
        %976 = vdwg.mxu0
        %v977 = vmul.f32 %v944, 0.35355338
        %v978 = vmul.f32 %v949, 0.35355338
        %v979 = vmul.f32 %v954, 0.35355338
        %v980 = vmul.f32 %v959, 0.35355338
        %v981 = vmul.f32 %v964, 0.35355338
        %v982 = vmul.f32 %v969, 0.35355338
        %v983 = vmul.f32 %v974, 0.35355338
        %v984 = vsel %vm852, %v977, -inf
        %985 = vmax.xlane.f32.xlu0 %v984
        %v986 = vpop.xlane.xlu0 %985
        %v987 = vsel %vm852, %v978, -inf
        %988 = vmax.xlane.f32.xlu0 %v987
        %v989 = vpop.xlane.xlu0 %988
        %v990 = vsel %vm852, %v979, -inf
        %991 = vmax.xlane.f32.xlu0 %v990
        %v992 = vpop.xlane.xlu0 %991
        %v993 = vsel %vm852, %v980, -inf
        %994 = vmax.xlane.f32.xlu0 %v993
        %v995 = vpop.xlane.xlu0 %994
        %v996 = vsel %vm852, %v981, -inf
        %997 = vmax.xlane.f32.xlu0 %v996
        %v998 = vpop.xlane.xlu0 %997
        %v999 = vsel %vm852, %v982, -inf
        %1000 = vmax.xlane.f32.xlu0 %v999
        %v1001 = vpop.xlane.xlu0 %1000
        %vm1002 = vcmask 57344
        %v1003 = vsel %vm1002, %v983, -inf
        %1004 = vmax.xlane.f32.xlu0 %v1003
        %v1005 = vpop.xlane.xlu0 %1004
        %v1006 = vsub.f32 %v977, %v986
        %v1007 = vsub.f32 %v978, %v989
        %v1008 = vsub.f32 %v979, %v992
        %v1009 = vsub.f32 %v980, %v995
        %v1010 = vsub.f32 %v981, %v998
        %v1011 = vsub.f32 %v982, %v1001
        %v1012 = vsub.f32 %v983, %v1005
        %v1013 = vmul.f32 %v1006, 1.442695
        %v1014 = vpow.pop %v1013
        %v1015 = vmul.f32 %v1007, 1.442695
        %v1016 = vpow.pop %v1015
        %v1017 = vmul.f32 %v1008, 1.442695
        %v1018 = vpow.pop %v1017
        %v1019 = vmul.f32 %v1009, 1.442695
        %v1020 = vpow.pop %v1019
        %v1021 = vmul.f32 %v1010, 1.442695
        %v1022 = vpow.pop %v1021
        %v1023 = vmul.f32 %v1011, 1.442695
        %v1024 = vpow.pop %v1023
        %v1025 = vmul.f32 %v1012, 1.442695
        %v1026 = vpow.pop %v1025
        %v1027 = vsel %vm852, %v1014, 0.0
        %1028 = vadd.xlane.f32.xlu0 %v1027
        %v1029 = vpop.xlane.xlu0 %1028
        %v1030 = vsel %vm852, %v1016, 0.0
        %1031 = vadd.xlane.f32.xlu0 %v1030
        %v1032 = vpop.xlane.xlu0 %1031
        %v1033 = vsel %vm852, %v1018, 0.0
        %1034 = vadd.xlane.f32.xlu0 %v1033
        %v1035 = vpop.xlane.xlu0 %1034
        %v1036 = vsel %vm852, %v1020, 0.0
        %1037 = vadd.xlane.f32.xlu0 %v1036
        %v1038 = vpop.xlane.xlu0 %1037
        %v1039 = vsel %vm852, %v1022, 0.0
        %1040 = vadd.xlane.f32.xlu0 %v1039
        %v1041 = vpop.xlane.xlu0 %1040
        %v1042 = vsel %vm852, %v1024, 0.0
        %1043 = vadd.xlane.f32.xlu0 %v1042
        %v1044 = vpop.xlane.xlu0 %1043
        %v1045 = vsel %vm1002, %v1026, 0.0
        %1046 = vadd.xlane.f32.xlu0 %v1045
        %v1047 = vpop.xlane.xlu0 %1046
        %v1048 = vrcp.pop %v1029
        %v1049 = vrcp.pop %v1032
        %v1050 = vrcp.pop %v1035
        %v1051 = vrcp.pop %v1038
        %v1052 = vrcp.pop %v1041
        %v1053 = vrcp.pop %v1044
        %v1054 = vrcp.pop %v1047
        %v1055 = vmul.f32 %v1014, %v1048
        %v1056 = vmul.f32 %v1016, %v1049
        %v1057 = vmul.f32 %v1018, %v1050
        %v1058 = vmul.f32 %v1020, %v1051
        %v1059 = vmul.f32 %v1022, %v1052
        %v1060 = vmul.f32 %v1024, %v1053
        %v1061 = vmul.f32 %v1026, %v1054
        %v1063 = vsel %vm852, %v1055, 0
        %v1066 = vsel %vm852, %v1056, 0
        %v1069 = vsel %vm852, %v1057, 0
        %v1072 = vsel %vm852, %v1058, 0
        %v1075 = vsel %vm852, %v1059, 0
        %v1078 = vsel %vm852, %v1060, 0
        %v1081 = vsel %vm852, %v1061, 0
        %1083 = vmatprep.subr.mxu0 0.0
        %1084 = vmatpush1.msra.mxu0 0.0
        %1085 = vmatprep.subr.mxu0 0.0
        %1086 = vmatpush1.msra.mxu0 0.0
        %1087 = vmatprep.subr.mxu0 0.0
        %1088 = vmatpush1.msra.mxu0 0.0
        %1089 = vmatprep.subr.mxu0 0.0
        %1090 = vmatpush1.msra.mxu0 0.0
        %1091 = vmatprep.subr.mxu0 0.0
        %1092 = vmatpush1.msra.mxu0 0.0
        %1093 = vmatprep.subr.mxu0 0.0
        %1094 = vmatpush1.msra.mxu0 0.0
        %1095 = vmatprep.subr.mxu0 0.0
        %1096 = vmatpush1.msra.mxu0 0.0
        %1097 = vmatprep.subr.mxu0 0.0
        %1098 = vmatpush1.msra.mxu0 0.0
        %1099 = vmatprep.subr.mxu0 0.0
        %1100 = vmatpush1.msra.mxu0 0.0
        %1101 = vmatprep.subr.mxu0 0.0
        %1102 = vmatpush1.msra.mxu0 0.0
        %1103 = vmatprep.subr.mxu0 0.0
        %1104 = vmatpush1.msra.mxu0 0.0
        %1105 = vmatprep.subr.mxu0 0.0
        %1106 = vmatpush1.msra.mxu0 0.0
        %1107 = vmatprep.subr.mxu0 0.0
        %1108 = vmatpush1.msra.mxu0 0.0
        %1109 = vmatprep.subr.mxu0 0.0
        %1110 = vmatpush1.msra.mxu0 0.0
        %1111 = vmatprep.subr.mxu0 0.0
        %1112 = vmatpush1.msra.mxu0 0.0
        %1113 = vmatprep.subr.mxu0 0.0
        %1114 = vmatpush1.msra.mxu0 %v845
        %1115 = vmatprep.subr.mxu0 0.0
        %1116 = vmatpush2.msra.mxu0 0.0
        %1117 = vmatprep.subr.mxu0 0.0
        %1118 = vmatpush2.msra.mxu0 0.0
        %1119 = vmatprep.subr.mxu0 0.0
        %1120 = vmatpush2.msra.mxu0 0.0
        %1121 = vmatprep.subr.mxu0 0.0
        %1122 = vmatpush2.msra.mxu0 0.0
        %1123 = vmatprep.subr.mxu0 0.0
        %1124 = vmatpush2.msra.mxu0 0.0
        %1125 = vmatprep.subr.mxu0 0.0
        %1126 = vmatpush2.msra.mxu0 0.0
        %1127 = vmatprep.subr.mxu0 0.0
        %1128 = vmatpush2.msra.mxu0 0.0
        %1129 = vmatprep.subr.mxu0 0.0
        %1130 = vmatpush2.msra.mxu0 0.0
        %1131 = vmatprep.subr.mxu0 0.0
        %1132 = vmatpush2.msra.mxu0 0.0
        %1133 = vmatprep.subr.mxu0 0.0
        %1134 = vmatpush2.msra.mxu0 0.0
        %1135 = vmatprep.subr.mxu0 0.0
        %1136 = vmatpush2.msra.mxu0 0.0
        %1137 = vmatprep.subr.mxu0 0.0
        %1138 = vmatpush2.msra.mxu0 0.0
        %1139 = vmatprep.subr.mxu0 0.0
        %1140 = vmatpush2.msra.mxu0 0.0
        %1141 = vmatprep.subr.mxu0 0.0
        %1142 = vmatpush2.msra.mxu0 0.0
        %1143 = vmatprep.subr.mxu0 0.0
        %1144 = vmatpush2.msra.mxu0 0.0
        %1145 = vmatprep.subr.mxu0 0.0
        %1146 = vmatpush2.msra.mxu0 0.0
        %1147 = vmatprep.mubr.f32.mxu0 0.0
        %1148 = vmatmul.mubr.f32.gmra.mxu0 %v1063
        %v1149 = vpop.f32.mrf.mxu0
        %v1150 = vadd.f32 0.0, %v1149
        %v1151 = vpop.f32.mrf.mxu0
        %1152 = vmatprep.mubr.f32.mxu0 0.0
        %1153 = vmatmul.mubr.f32.gmra.mxu0 %v1066
        %v1154 = vpop.f32.mrf.mxu0
        %v1155 = vadd.f32 0.0, %v1154
        %v1156 = vpop.f32.mrf.mxu0
        %1157 = vmatprep.mubr.f32.mxu0 0.0
        %1158 = vmatmul.mubr.f32.gmra.mxu0 %v1069
        %v1159 = vpop.f32.mrf.mxu0
        %v1160 = vadd.f32 0.0, %v1159
        %v1161 = vpop.f32.mrf.mxu0
        %1162 = vmatprep.mubr.f32.mxu0 0.0
        %1163 = vmatmul.mubr.f32.gmra.mxu0 %v1072
        %v1164 = vpop.f32.mrf.mxu0
        %v1165 = vadd.f32 0.0, %v1164
        %v1166 = vpop.f32.mrf.mxu0
        %1167 = vmatprep.mubr.f32.mxu0 0.0
        %1168 = vmatmul.mubr.f32.gmra.mxu0 %v1075
        %v1169 = vpop.f32.mrf.mxu0
        %v1170 = vadd.f32 0.0, %v1169
        %v1171 = vpop.f32.mrf.mxu0
        %1172 = vmatprep.mubr.f32.mxu0 0.0
        %1173 = vmatmul.mubr.f32.gmra.mxu0 %v1078
        %v1174 = vpop.f32.mrf.mxu0
        %v1175 = vadd.f32 0.0, %v1174
        %v1176 = vpop.f32.mrf.mxu0
        %1177 = vmatprep.mubr.f32.mxu0 0.0
        %1178 = vmatmul.mubr.f32.gmra.mxu0 %v1081
        %v1179 = vpop.f32.mrf.mxu0
        %v1180 = vadd.f32 0.0, %v1179
        %v1181 = vpop.f32.mrf.mxu0
        %1182 = vdwg.mxu0
        %1183 = vrot.lane.b32.xlu0 %v650, 120
        %v1184 = vpop.permute.xlu0 %1183
        %1185 = vrot.lane.b32.xlu0 %v655, 120
        %v1186 = vpop.permute.xlu0 %1185
        %1187 = vrot.lane.b32.xlu0 %v660, 120
        %v1188 = vpop.permute.xlu0 %1187
        %1189 = vrot.lane.b32.xlu0 %v665, 120
        %v1190 = vpop.permute.xlu0 %1189
        %1191 = vrot.lane.b32.xlu0 %v670, 120
        %v1192 = vpop.permute.xlu0 %1191
        %1193 = vrot.lane.b32.xlu0 %v675, 120
        %v1194 = vpop.permute.xlu0 %1193
        %1195 = vrot.lane.b32.xlu0 %v680, 120
        %v1196 = vpop.permute.xlu0 %1195
        %1197 = vrot.lane.b32.xlu0 %v764, 120
        %v1198 = vpop.permute.xlu0 %1197
        %v1199 = vsel %vm852, %v1184, 0
        %v1201 = vsel %vm852, %v1186, 0
        %v1203 = vsel %vm852, %v1188, 0
        %v1205 = vsel %vm852, %v1190, 0
        %v1207 = vsel %vm852, %v1192, 0
        %v1209 = vsel %vm852, %v1194, 0
        %v1211 = vsel %vm852, %v1196, 0
        %v1213 = vsel %vm852, %v1198, 0
        %1215 = vmatprep.subr.mxu0 0.0
        %1216 = vmatpush1.xpose.msra.mxu0 0.0
        %1217 = vmatprep.subr.mxu0 0.0
        %1218 = vmatpush1.xpose.msra.mxu0 0.0
        %1219 = vmatprep.subr.mxu0 0.0
        %1220 = vmatpush1.xpose.msra.mxu0 0.0
        %1221 = vmatprep.subr.mxu0 0.0
        %1222 = vmatpush1.xpose.msra.mxu0 0.0
        %1223 = vmatprep.subr.mxu0 0.0
        %1224 = vmatpush1.xpose.msra.mxu0 0.0
        %1225 = vmatprep.subr.mxu0 0.0
        %1226 = vmatpush1.xpose.msra.mxu0 0.0
        %1227 = vmatprep.subr.mxu0 0.0
        %1228 = vmatpush1.xpose.msra.mxu0 0.0
        %1229 = vmatprep.subr.mxu0 0.0
        %1230 = vmatpush1.xpose.msra.mxu0 0.0
        %1231 = vmatprep.subr.mxu0 0.0
        %1232 = vmatpush1.xpose.msra.mxu0 0.0
        %1233 = vmatprep.subr.mxu0 0.0
        %1234 = vmatpush1.xpose.msra.mxu0 0.0
        %1235 = vmatprep.subr.mxu0 0.0
        %1236 = vmatpush1.xpose.msra.mxu0 0.0
        %1237 = vmatprep.subr.mxu0 0.0
        %1238 = vmatpush1.xpose.msra.mxu0 0.0
        %1239 = vmatprep.subr.mxu0 0.0
        %1240 = vmatpush1.xpose.msra.mxu0 0.0
        %1241 = vmatprep.subr.mxu0 0.0
        %1242 = vmatpush1.xpose.msra.mxu0 0.0
        %1243 = vmatprep.subr.mxu0 0.0
        %1244 = vmatpush1.xpose.msra.mxu0 0.0
        %1245 = vmatprep.subr.mxu0 0.0
        %1246 = vmatpush1.xpose.msra.mxu0 %v1213
        %1247 = vmatprep.subr.mxu0 0.0
        %1248 = vmatpush2.xpose.msra.mxu0 0.0
        %1249 = vmatprep.subr.mxu0 0.0
        %1250 = vmatpush2.xpose.msra.mxu0 0.0
        %1251 = vmatprep.subr.mxu0 0.0
        %1252 = vmatpush2.xpose.msra.mxu0 0.0
        %1253 = vmatprep.subr.mxu0 0.0
        %1254 = vmatpush2.xpose.msra.mxu0 0.0
        %1255 = vmatprep.subr.mxu0 0.0
        %1256 = vmatpush2.xpose.msra.mxu0 0.0
        %1257 = vmatprep.subr.mxu0 0.0
        %1258 = vmatpush2.xpose.msra.mxu0 0.0
        %1259 = vmatprep.subr.mxu0 0.0
        %1260 = vmatpush2.xpose.msra.mxu0 0.0
        %1261 = vmatprep.subr.mxu0 0.0
        %1262 = vmatpush2.xpose.msra.mxu0 0.0
        %1263 = vmatprep.subr.mxu0 0.0
        %1264 = vmatpush2.xpose.msra.mxu0 0.0
        %1265 = vmatprep.subr.mxu0 0.0
        %1266 = vmatpush2.xpose.msra.mxu0 0.0
        %1267 = vmatprep.subr.mxu0 0.0
        %1268 = vmatpush2.xpose.msra.mxu0 0.0
        %1269 = vmatprep.subr.mxu0 0.0
        %1270 = vmatpush2.xpose.msra.mxu0 0.0
        %1271 = vmatprep.subr.mxu0 0.0
        %1272 = vmatpush2.xpose.msra.mxu0 0.0
        %1273 = vmatprep.subr.mxu0 0.0
        %1274 = vmatpush2.xpose.msra.mxu0 0.0
        %1275 = vmatprep.subr.mxu0 0.0
        %1276 = vmatpush2.xpose.msra.mxu0 0.0
        %1277 = vmatprep.subr.mxu0 0.0
        %1278 = vmatpush2.xpose.msra.mxu0 0.0
        %1279 = vmatprep.mubr.f32.mxu0 0.0
        %1280 = vmatmul.mubr.f32.gmra.mxu0 %v1199
        %v1281 = vpop.f32.mrf.mxu0
        %v1282 = vadd.f32 0.0, %v1281
        %v1283 = vpop.f32.mrf.mxu0
        %1284 = vmatprep.mubr.f32.mxu0 0.0
        %1285 = vmatmul.mubr.f32.gmra.mxu0 %v1201
        %v1286 = vpop.f32.mrf.mxu0
        %v1287 = vadd.f32 0.0, %v1286
        %v1288 = vpop.f32.mrf.mxu0
        %1289 = vmatprep.mubr.f32.mxu0 0.0
        %1290 = vmatmul.mubr.f32.gmra.mxu0 %v1203
        %v1291 = vpop.f32.mrf.mxu0
        %v1292 = vadd.f32 0.0, %v1291
        %v1293 = vpop.f32.mrf.mxu0
        %1294 = vmatprep.mubr.f32.mxu0 0.0
        %1295 = vmatmul.mubr.f32.gmra.mxu0 %v1205
        %v1296 = vpop.f32.mrf.mxu0
        %v1297 = vadd.f32 0.0, %v1296
        %v1298 = vpop.f32.mrf.mxu0
        %1299 = vmatprep.mubr.f32.mxu0 0.0
        %1300 = vmatmul.mubr.f32.gmra.mxu0 %v1207
        %v1301 = vpop.f32.mrf.mxu0
        %v1302 = vadd.f32 0.0, %v1301
        %v1303 = vpop.f32.mrf.mxu0
        %1304 = vmatprep.mubr.f32.mxu0 0.0
        %1305 = vmatmul.mubr.f32.gmra.mxu0 %v1209
        %v1306 = vpop.f32.mrf.mxu0
        %v1307 = vadd.f32 0.0, %v1306
        %v1308 = vpop.f32.mrf.mxu0
        %1309 = vmatprep.mubr.f32.mxu0 0.0
        %1310 = vmatmul.mubr.f32.gmra.mxu0 %v1211
        %v1311 = vpop.f32.mrf.mxu0
        %v1312 = vadd.f32 0.0, %v1311
        %v1313 = vpop.f32.mrf.mxu0
        %1314 = vdwg.mxu0
        %v1315 = vmul.f32 %v1282, 0.35355338
        %v1316 = vmul.f32 %v1287, 0.35355338
        %v1317 = vmul.f32 %v1292, 0.35355338
        %v1318 = vmul.f32 %v1297, 0.35355338
        %v1319 = vmul.f32 %v1302, 0.35355338
        %v1320 = vmul.f32 %v1307, 0.35355338
        %v1321 = vmul.f32 %v1312, 0.35355338
        %v1322 = vsel %vm852, %v1315, -inf
        %1323 = vmax.xlane.f32.xlu0 %v1322
        %v1324 = vpop.xlane.xlu0 %1323
        %v1325 = vsel %vm852, %v1316, -inf
        %1326 = vmax.xlane.f32.xlu0 %v1325
        %v1327 = vpop.xlane.xlu0 %1326
        %v1328 = vsel %vm852, %v1317, -inf
        %1329 = vmax.xlane.f32.xlu0 %v1328
        %v1330 = vpop.xlane.xlu0 %1329
        %v1331 = vsel %vm852, %v1318, -inf
        %1332 = vmax.xlane.f32.xlu0 %v1331
        %v1333 = vpop.xlane.xlu0 %1332
        %v1334 = vsel %vm852, %v1319, -inf
        %1335 = vmax.xlane.f32.xlu0 %v1334
        %v1336 = vpop.xlane.xlu0 %1335
        %v1337 = vsel %vm852, %v1320, -inf
        %1338 = vmax.xlane.f32.xlu0 %v1337
        %v1339 = vpop.xlane.xlu0 %1338
        %v1340 = vsel %vm1002, %v1321, -inf
        %1341 = vmax.xlane.f32.xlu0 %v1340
        %v1342 = vpop.xlane.xlu0 %1341
        %v1343 = vsub.f32 %v1315, %v1324
        %v1344 = vsub.f32 %v1316, %v1327
        %v1345 = vsub.f32 %v1317, %v1330
        %v1346 = vsub.f32 %v1318, %v1333
        %v1347 = vsub.f32 %v1319, %v1336
        %v1348 = vsub.f32 %v1320, %v1339
        %v1349 = vsub.f32 %v1321, %v1342
        %v1350 = vmul.f32 %v1343, 1.442695
        %v1351 = vpow.pop %v1350
        %v1352 = vmul.f32 %v1344, 1.442695
        %v1353 = vpow.pop %v1352
        %v1354 = vmul.f32 %v1345, 1.442695
        %v1355 = vpow.pop %v1354
        %v1356 = vmul.f32 %v1346, 1.442695
        %v1357 = vpow.pop %v1356
        %v1358 = vmul.f32 %v1347, 1.442695
        %v1359 = vpow.pop %v1358
        %v1360 = vmul.f32 %v1348, 1.442695
        %v1361 = vpow.pop %v1360
        %v1362 = vmul.f32 %v1349, 1.442695
        %v1363 = vpow.pop %v1362
        %v1364 = vsel %vm852, %v1351, 0.0
        %1365 = vadd.xlane.f32.xlu0 %v1364
        %v1366 = vpop.xlane.xlu0 %1365
        %v1367 = vsel %vm852, %v1353, 0.0
        %1368 = vadd.xlane.f32.xlu0 %v1367
        %v1369 = vpop.xlane.xlu0 %1368
        %v1370 = vsel %vm852, %v1355, 0.0
        %1371 = vadd.xlane.f32.xlu0 %v1370
        %v1372 = vpop.xlane.xlu0 %1371
        %v1373 = vsel %vm852, %v1357, 0.0
        %1374 = vadd.xlane.f32.xlu0 %v1373
        %v1375 = vpop.xlane.xlu0 %1374
        %v1376 = vsel %vm852, %v1359, 0.0
        %1377 = vadd.xlane.f32.xlu0 %v1376
        %v1378 = vpop.xlane.xlu0 %1377
        %v1379 = vsel %vm852, %v1361, 0.0
        %1380 = vadd.xlane.f32.xlu0 %v1379
        %v1381 = vpop.xlane.xlu0 %1380
        %v1382 = vsel %vm1002, %v1363, 0.0
        %1383 = vadd.xlane.f32.xlu0 %v1382
        %v1384 = vpop.xlane.xlu0 %1383
        %v1385 = vrcp.pop %v1366
        %v1386 = vrcp.pop %v1369
        %v1387 = vrcp.pop %v1372
        %v1388 = vrcp.pop %v1375
        %v1389 = vrcp.pop %v1378
        %v1390 = vrcp.pop %v1381
        %v1391 = vrcp.pop %v1384
        %v1392 = vmul.f32 %v1351, %v1385
        %v1393 = vmul.f32 %v1353, %v1386
        %v1394 = vmul.f32 %v1355, %v1387
        %v1395 = vmul.f32 %v1357, %v1388
        %v1396 = vmul.f32 %v1359, %v1389
        %v1397 = vmul.f32 %v1361, %v1390
        %v1398 = vmul.f32 %v1363, %v1391
        %1400 = vrot.lane.b32.xlu0 %v845, 120
        %v1401 = vpop.permute.xlu0 %1400
        %v1404 = vsel %vm852, %v1392, 0
        %v1407 = vsel %vm852, %v1393, 0
        %v1410 = vsel %vm852, %v1394, 0
        %v1413 = vsel %vm852, %v1395, 0
        %v1416 = vsel %vm852, %v1396, 0
        %v1419 = vsel %vm852, %v1397, 0
        %v1422 = vsel %vm852, %v1398, 0
        %1424 = vmatprep.subr.mxu0 0.0
        %1425 = vmatpush1.msra.mxu0 0.0
        %1426 = vmatprep.subr.mxu0 0.0
        %1427 = vmatpush1.msra.mxu0 0.0
        %1428 = vmatprep.subr.mxu0 0.0
        %1429 = vmatpush1.msra.mxu0 0.0
        %1430 = vmatprep.subr.mxu0 0.0
        %1431 = vmatpush1.msra.mxu0 0.0
        %1432 = vmatprep.subr.mxu0 0.0
        %1433 = vmatpush1.msra.mxu0 0.0
        %1434 = vmatprep.subr.mxu0 0.0
        %1435 = vmatpush1.msra.mxu0 0.0
        %1436 = vmatprep.subr.mxu0 0.0
        %1437 = vmatpush1.msra.mxu0 0.0
        %1438 = vmatprep.subr.mxu0 0.0
        %1439 = vmatpush1.msra.mxu0 0.0
        %1440 = vmatprep.subr.mxu0 0.0
        %1441 = vmatpush1.msra.mxu0 0.0
        %1442 = vmatprep.subr.mxu0 0.0
        %1443 = vmatpush1.msra.mxu0 0.0
        %1444 = vmatprep.subr.mxu0 0.0
        %1445 = vmatpush1.msra.mxu0 0.0
        %1446 = vmatprep.subr.mxu0 0.0
        %1447 = vmatpush1.msra.mxu0 0.0
        %1448 = vmatprep.subr.mxu0 0.0
        %1449 = vmatpush1.msra.mxu0 0.0
        %1450 = vmatprep.subr.mxu0 0.0
        %1451 = vmatpush1.msra.mxu0 0.0
        %1452 = vmatprep.subr.mxu0 0.0
        %1453 = vmatpush1.msra.mxu0 0.0
        %1454 = vmatprep.subr.mxu0 0.0
        %1455 = vmatpush1.msra.mxu0 %v1401
        %1456 = vmatprep.subr.mxu0 0.0
        %1457 = vmatpush2.msra.mxu0 0.0
        %1458 = vmatprep.subr.mxu0 0.0
        %1459 = vmatpush2.msra.mxu0 0.0
        %1460 = vmatprep.subr.mxu0 0.0
        %1461 = vmatpush2.msra.mxu0 0.0
        %1462 = vmatprep.subr.mxu0 0.0
        %1463 = vmatpush2.msra.mxu0 0.0
        %1464 = vmatprep.subr.mxu0 0.0
        %1465 = vmatpush2.msra.mxu0 0.0
        %1466 = vmatprep.subr.mxu0 0.0
        %1467 = vmatpush2.msra.mxu0 0.0
        %1468 = vmatprep.subr.mxu0 0.0
        %1469 = vmatpush2.msra.mxu0 0.0
        %1470 = vmatprep.subr.mxu0 0.0
        %1471 = vmatpush2.msra.mxu0 0.0
        %1472 = vmatprep.subr.mxu0 0.0
        %1473 = vmatpush2.msra.mxu0 0.0
        %1474 = vmatprep.subr.mxu0 0.0
        %1475 = vmatpush2.msra.mxu0 0.0
        %1476 = vmatprep.subr.mxu0 0.0
        %1477 = vmatpush2.msra.mxu0 0.0
        %1478 = vmatprep.subr.mxu0 0.0
        %1479 = vmatpush2.msra.mxu0 0.0
        %1480 = vmatprep.subr.mxu0 0.0
        %1481 = vmatpush2.msra.mxu0 0.0
        %1482 = vmatprep.subr.mxu0 0.0
        %1483 = vmatpush2.msra.mxu0 0.0
        %1484 = vmatprep.subr.mxu0 0.0
        %1485 = vmatpush2.msra.mxu0 0.0
        %1486 = vmatprep.subr.mxu0 0.0
        %1487 = vmatpush2.msra.mxu0 0.0
        %1488 = vmatprep.mubr.f32.mxu0 0.0
        %1489 = vmatmul.mubr.f32.gmra.mxu0 %v1404
        %v1490 = vpop.f32.mrf.mxu0
        %v1491 = vadd.f32 0.0, %v1490
        %v1492 = vpop.f32.mrf.mxu0
        %1493 = vmatprep.mubr.f32.mxu0 0.0
        %1494 = vmatmul.mubr.f32.gmra.mxu0 %v1407
        %v1495 = vpop.f32.mrf.mxu0
        %v1496 = vadd.f32 0.0, %v1495
        %v1497 = vpop.f32.mrf.mxu0
        %1498 = vmatprep.mubr.f32.mxu0 0.0
        %1499 = vmatmul.mubr.f32.gmra.mxu0 %v1410
        %v1500 = vpop.f32.mrf.mxu0
        %v1501 = vadd.f32 0.0, %v1500
        %v1502 = vpop.f32.mrf.mxu0
        %1503 = vmatprep.mubr.f32.mxu0 0.0
        %1504 = vmatmul.mubr.f32.gmra.mxu0 %v1413
        %v1505 = vpop.f32.mrf.mxu0
        %v1506 = vadd.f32 0.0, %v1505
        %v1507 = vpop.f32.mrf.mxu0
        %1508 = vmatprep.mubr.f32.mxu0 0.0
        %1509 = vmatmul.mubr.f32.gmra.mxu0 %v1416
        %v1510 = vpop.f32.mrf.mxu0
        %v1511 = vadd.f32 0.0, %v1510
        %v1512 = vpop.f32.mrf.mxu0
        %1513 = vmatprep.mubr.f32.mxu0 0.0
        %1514 = vmatmul.mubr.f32.gmra.mxu0 %v1419
        %v1515 = vpop.f32.mrf.mxu0
        %v1516 = vadd.f32 0.0, %v1515
        %v1517 = vpop.f32.mrf.mxu0
        %1518 = vmatprep.mubr.f32.mxu0 0.0
        %1519 = vmatmul.mubr.f32.gmra.mxu0 %v1422
        %v1520 = vpop.f32.mrf.mxu0
        %v1521 = vadd.f32 0.0, %v1520
        %v1522 = vpop.f32.mrf.mxu0
        %1523 = vdwg.mxu0
        %v1525 = vsel %vm852, %v1491, 0
        %v1528 = vsel %vm852, %v1496, 0
        %v1531 = vsel %vm852, %v1501, 0
        %v1534 = vsel %vm852, %v1506, 0
        %v1537 = vsel %vm852, %v1511, 0
        %v1540 = vsel %vm852, %v1516, 0
        %v1543 = vsel %vm852, %v1521, 0
        %1545 = vmatprep.subr.mxu0 0.0
        %1546 = vmatpush1.msra.mxu0 0.0
        %1547 = vmatprep.subr.mxu0 0.0
        %1548 = vmatpush1.msra.mxu0 0.0
        %1549 = vmatprep.subr.mxu0 0.0
        %1550 = vmatpush1.msra.mxu0 0.0
        %1551 = vmatprep.subr.mxu0 0.0
        %1552 = vmatpush1.msra.mxu0 0.0
        %1553 = vmatprep.subr.mxu0 0.0
        %1554 = vmatpush1.msra.mxu0 0.0
        %1555 = vmatprep.subr.mxu0 0.0
        %1556 = vmatpush1.msra.mxu0 0.0
        %1557 = vmatprep.subr.mxu0 0.0
        %1558 = vmatpush1.msra.mxu0 0.0
        %1559 = vmatprep.subr.mxu0 0.0
        %1560 = vmatpush1.msra.mxu0 0.0
        %1561 = vmatprep.subr.mxu0 0.0
        %1562 = vmatpush1.msra.mxu0 0.0
        %1563 = vmatprep.subr.mxu0 0.0
        %1564 = vmatpush1.msra.mxu0 0.0
        %1565 = vmatprep.subr.mxu0 0.0
        %1566 = vmatpush1.msra.mxu0 0.0
        %1567 = vmatprep.subr.mxu0 0.0
        %1568 = vmatpush1.msra.mxu0 0.0
        %1569 = vmatprep.subr.mxu0 0.0
        %1570 = vmatpush1.msra.mxu0 0.0
        %1571 = vmatprep.subr.mxu0 0.0
        %1572 = vmatpush1.msra.mxu0 0.0
        %1573 = vmatprep.subr.mxu0 0.0
        %1574 = vmatpush1.msra.mxu0 0.0
        %1575 = vmatprep.subr.mxu0 0.0
        %1576 = vmatpush1.msra.mxu0 %v849
        %1577 = vmatprep.subr.mxu0 0.0
        %1578 = vmatpush2.msra.mxu0 0.0
        %1579 = vmatprep.subr.mxu0 0.0
        %1580 = vmatpush2.msra.mxu0 0.0
        %1581 = vmatprep.subr.mxu0 0.0
        %1582 = vmatpush2.msra.mxu0 0.0
        %1583 = vmatprep.subr.mxu0 0.0
        %1584 = vmatpush2.msra.mxu0 0.0
        %1585 = vmatprep.subr.mxu0 0.0
        %1586 = vmatpush2.msra.mxu0 0.0
        %1587 = vmatprep.subr.mxu0 0.0
        %1588 = vmatpush2.msra.mxu0 0.0
        %1589 = vmatprep.subr.mxu0 0.0
        %1590 = vmatpush2.msra.mxu0 0.0
        %1591 = vmatprep.subr.mxu0 0.0
        %1592 = vmatpush2.msra.mxu0 0.0
        %1593 = vmatprep.subr.mxu0 0.0
        %1594 = vmatpush2.msra.mxu0 0.0
        %1595 = vmatprep.subr.mxu0 0.0
        %1596 = vmatpush2.msra.mxu0 0.0
        %1597 = vmatprep.subr.mxu0 0.0
        %1598 = vmatpush2.msra.mxu0 0.0
        %1599 = vmatprep.subr.mxu0 0.0
        %1600 = vmatpush2.msra.mxu0 0.0
        %1601 = vmatprep.subr.mxu0 0.0
        %1602 = vmatpush2.msra.mxu0 0.0
        %1603 = vmatprep.subr.mxu0 0.0
        %1604 = vmatpush2.msra.mxu0 0.0
        %1605 = vmatprep.subr.mxu0 0.0
        %1606 = vmatpush2.msra.mxu0 0.0
        %1607 = vmatprep.subr.mxu0 0.0
        %1608 = vmatpush2.msra.mxu0 0.0
        %1609 = vmatprep.mubr.f32.mxu0 0.0
        %1610 = vmatmul.mubr.f32.gmra.mxu0 %v1525
        %v1611 = vpop.f32.mrf.mxu0
        %v1612 = vadd.f32 0.0, %v1611
        %v1613 = vpop.f32.mrf.mxu0
        %1614 = vmatprep.mubr.f32.mxu0 0.0
        %1615 = vmatmul.mubr.f32.gmra.mxu0 %v1528
        %v1616 = vpop.f32.mrf.mxu0
        %v1617 = vadd.f32 0.0, %v1616
        %v1618 = vpop.f32.mrf.mxu0
        %1619 = vmatprep.mubr.f32.mxu0 0.0
        %1620 = vmatmul.mubr.f32.gmra.mxu0 %v1531
        %v1621 = vpop.f32.mrf.mxu0
        %v1622 = vadd.f32 0.0, %v1621
        %v1623 = vpop.f32.mrf.mxu0
        %1624 = vmatprep.mubr.f32.mxu0 0.0
        %1625 = vmatmul.mubr.f32.gmra.mxu0 %v1534
        %v1626 = vpop.f32.mrf.mxu0
        %v1627 = vadd.f32 0.0, %v1626
        %v1628 = vpop.f32.mrf.mxu0
        %1629 = vmatprep.mubr.f32.mxu0 0.0
        %1630 = vmatmul.mubr.f32.gmra.mxu0 %v1537
        %v1631 = vpop.f32.mrf.mxu0
        %v1632 = vadd.f32 0.0, %v1631
        %v1633 = vpop.f32.mrf.mxu0
        %1634 = vmatprep.mubr.f32.mxu0 0.0
        %1635 = vmatmul.mubr.f32.gmra.mxu0 %v1540
        %v1636 = vpop.f32.mrf.mxu0
        %v1637 = vadd.f32 0.0, %v1636
        %v1638 = vpop.f32.mrf.mxu0
        %1639 = vmatprep.mubr.f32.mxu0 0.0
        %1640 = vmatmul.mubr.f32.gmra.mxu0 %v1543
        %v1641 = vpop.f32.mrf.mxu0
        %v1642 = vadd.f32 0.0, %v1641
        %v1643 = vpop.f32.mrf.mxu0
        %1644 = vdwg.mxu0
        %v1646 = vsel %vm852, %v1150, 0
        %v1649 = vsel %vm852, %v1155, 0
        %v1652 = vsel %vm852, %v1160, 0
        %v1655 = vsel %vm852, %v1165, 0
        %v1658 = vsel %vm852, %v1170, 0
        %v1661 = vsel %vm852, %v1175, 0
        %v1664 = vsel %vm852, %v1180, 0
        %1666 = vmatprep.subr.mxu0 0.0
        %1667 = vmatpush1.msra.mxu0 0.0
        %1668 = vmatprep.subr.mxu0 0.0
        %1669 = vmatpush1.msra.mxu0 0.0
        %1670 = vmatprep.subr.mxu0 0.0
        %1671 = vmatpush1.msra.mxu0 0.0
        %1672 = vmatprep.subr.mxu0 0.0
        %1673 = vmatpush1.msra.mxu0 0.0
        %1674 = vmatprep.subr.mxu0 0.0
        %1675 = vmatpush1.msra.mxu0 0.0
        %1676 = vmatprep.subr.mxu0 0.0
        %1677 = vmatpush1.msra.mxu0 0.0
        %1678 = vmatprep.subr.mxu0 0.0
        %1679 = vmatpush1.msra.mxu0 0.0
        %1680 = vmatprep.subr.mxu0 0.0
        %1681 = vmatpush1.msra.mxu0 0.0
        %1682 = vmatprep.subr.mxu0 0.0
        %1683 = vmatpush1.msra.mxu0 0.0
        %1684 = vmatprep.subr.mxu0 0.0
        %1685 = vmatpush1.msra.mxu0 0.0
        %1686 = vmatprep.subr.mxu0 0.0
        %1687 = vmatpush1.msra.mxu0 0.0
        %1688 = vmatprep.subr.mxu0 0.0
        %1689 = vmatpush1.msra.mxu0 0.0
        %1690 = vmatprep.subr.mxu0 0.0
        %1691 = vmatpush1.msra.mxu0 0.0
        %1692 = vmatprep.subr.mxu0 0.0
        %1693 = vmatpush1.msra.mxu0 0.0
        %1694 = vmatprep.subr.mxu0 0.0
        %1695 = vmatpush1.msra.mxu0 0.0
        %1696 = vmatprep.subr.mxu0 0.0
        %1697 = vmatpush1.msra.mxu0 %v848
        %1698 = vmatprep.subr.mxu0 0.0
        %1699 = vmatpush2.msra.mxu0 0.0
        %1700 = vmatprep.subr.mxu0 0.0
        %1701 = vmatpush2.msra.mxu0 0.0
        %1702 = vmatprep.subr.mxu0 0.0
        %1703 = vmatpush2.msra.mxu0 0.0
        %1704 = vmatprep.subr.mxu0 0.0
        %1705 = vmatpush2.msra.mxu0 0.0
        %1706 = vmatprep.subr.mxu0 0.0
        %1707 = vmatpush2.msra.mxu0 0.0
        %1708 = vmatprep.subr.mxu0 0.0
        %1709 = vmatpush2.msra.mxu0 0.0
        %1710 = vmatprep.subr.mxu0 0.0
        %1711 = vmatpush2.msra.mxu0 0.0
        %1712 = vmatprep.subr.mxu0 0.0
        %1713 = vmatpush2.msra.mxu0 0.0
        %1714 = vmatprep.subr.mxu0 0.0
        %1715 = vmatpush2.msra.mxu0 0.0
        %1716 = vmatprep.subr.mxu0 0.0
        %1717 = vmatpush2.msra.mxu0 0.0
        %1718 = vmatprep.subr.mxu0 0.0
        %1719 = vmatpush2.msra.mxu0 0.0
        %1720 = vmatprep.subr.mxu0 0.0
        %1721 = vmatpush2.msra.mxu0 0.0
        %1722 = vmatprep.subr.mxu0 0.0
        %1723 = vmatpush2.msra.mxu0 0.0
        %1724 = vmatprep.subr.mxu0 0.0
        %1725 = vmatpush2.msra.mxu0 0.0
        %1726 = vmatprep.subr.mxu0 0.0
        %1727 = vmatpush2.msra.mxu0 0.0
        %1728 = vmatprep.subr.mxu0 0.0
        %1729 = vmatpush2.msra.mxu0 0.0
        %1730 = vmatprep.mubr.f32.mxu0 0.0
        %1731 = vmatmul.mubr.f32.gmra.mxu0 %v1646
        %v1732 = vpop.f32.mrf.mxu0
        %v1733 = vadd.f32 %v1612, %v1732
        %v1734 = vpop.f32.mrf.mxu0
        %1735 = vmatprep.mubr.f32.mxu0 0.0
        %1736 = vmatmul.mubr.f32.gmra.mxu0 %v1649
        %v1737 = vpop.f32.mrf.mxu0
        %v1738 = vadd.f32 %v1617, %v1737
        %v1739 = vpop.f32.mrf.mxu0
        %1740 = vmatprep.mubr.f32.mxu0 0.0
        %1741 = vmatmul.mubr.f32.gmra.mxu0 %v1652
        %v1742 = vpop.f32.mrf.mxu0
        %v1743 = vadd.f32 %v1622, %v1742
        %v1744 = vpop.f32.mrf.mxu0
        %1745 = vmatprep.mubr.f32.mxu0 0.0
        %1746 = vmatmul.mubr.f32.gmra.mxu0 %v1655
        %v1747 = vpop.f32.mrf.mxu0
        %v1748 = vadd.f32 %v1627, %v1747
        %v1749 = vpop.f32.mrf.mxu0
        %1750 = vmatprep.mubr.f32.mxu0 0.0
        %1751 = vmatmul.mubr.f32.gmra.mxu0 %v1658
        %v1752 = vpop.f32.mrf.mxu0
        %v1753 = vadd.f32 %v1632, %v1752
        %v1754 = vpop.f32.mrf.mxu0
        %1755 = vmatprep.mubr.f32.mxu0 0.0
        %1756 = vmatmul.mubr.f32.gmra.mxu0 %v1661
        %v1757 = vpop.f32.mrf.mxu0
        %v1758 = vadd.f32 %v1637, %v1757
        %v1759 = vpop.f32.mrf.mxu0
        %1760 = vmatprep.mubr.f32.mxu0 0.0
        %1761 = vmatmul.mubr.f32.gmra.mxu0 %v1664
        %v1762 = vpop.f32.mrf.mxu0
        %v1763 = vadd.f32 %v1642, %v1762
        %v1764 = vpop.f32.mrf.mxu0
        %1765 = vdwg.mxu0
        %1766 = vrot.lane.b32.xlu0 %v650, 112
        %v1767 = vpop.permute.xlu0 %1766
        %1768 = vrot.lane.b32.xlu0 %v655, 112
        %v1769 = vpop.permute.xlu0 %1768
        %1770 = vrot.lane.b32.xlu0 %v660, 112
        %v1771 = vpop.permute.xlu0 %1770
        %1772 = vrot.lane.b32.xlu0 %v665, 112
        %v1773 = vpop.permute.xlu0 %1772
        %1774 = vrot.lane.b32.xlu0 %v670, 112
        %v1775 = vpop.permute.xlu0 %1774
        %1776 = vrot.lane.b32.xlu0 %v675, 112
        %v1777 = vpop.permute.xlu0 %1776
        %1778 = vrot.lane.b32.xlu0 %v680, 112
        %v1779 = vpop.permute.xlu0 %1778
        %1780 = vrot.lane.b32.xlu0 %v764, 112
        %v1781 = vpop.permute.xlu0 %1780
        %v1782 = vsel %vm852, %v1767, 0
        %v1784 = vsel %vm852, %v1769, 0
        %v1786 = vsel %vm852, %v1771, 0
        %v1788 = vsel %vm852, %v1773, 0
        %v1790 = vsel %vm852, %v1775, 0
        %v1792 = vsel %vm852, %v1777, 0
        %v1794 = vsel %vm852, %v1779, 0
        %v1796 = vsel %vm852, %v1781, 0
        %1798 = vmatprep.subr.mxu0 0.0
        %1799 = vmatpush1.xpose.msra.mxu0 0.0
        %1800 = vmatprep.subr.mxu0 0.0
        %1801 = vmatpush1.xpose.msra.mxu0 0.0
        %1802 = vmatprep.subr.mxu0 0.0
        %1803 = vmatpush1.xpose.msra.mxu0 0.0
        %1804 = vmatprep.subr.mxu0 0.0
        %1805 = vmatpush1.xpose.msra.mxu0 0.0
        %1806 = vmatprep.subr.mxu0 0.0
        %1807 = vmatpush1.xpose.msra.mxu0 0.0
        %1808 = vmatprep.subr.mxu0 0.0
        %1809 = vmatpush1.xpose.msra.mxu0 0.0
        %1810 = vmatprep.subr.mxu0 0.0
        %1811 = vmatpush1.xpose.msra.mxu0 0.0
        %1812 = vmatprep.subr.mxu0 0.0
        %1813 = vmatpush1.xpose.msra.mxu0 0.0
        %1814 = vmatprep.subr.mxu0 0.0
        %1815 = vmatpush1.xpose.msra.mxu0 0.0
        %1816 = vmatprep.subr.mxu0 0.0
        %1817 = vmatpush1.xpose.msra.mxu0 0.0
        %1818 = vmatprep.subr.mxu0 0.0
        %1819 = vmatpush1.xpose.msra.mxu0 0.0
        %1820 = vmatprep.subr.mxu0 0.0
        %1821 = vmatpush1.xpose.msra.mxu0 0.0
        %1822 = vmatprep.subr.mxu0 0.0
        %1823 = vmatpush1.xpose.msra.mxu0 0.0
        %1824 = vmatprep.subr.mxu0 0.0
        %1825 = vmatpush1.xpose.msra.mxu0 0.0
        %1826 = vmatprep.subr.mxu0 0.0
        %1827 = vmatpush1.xpose.msra.mxu0 0.0
        %1828 = vmatprep.subr.mxu0 0.0
        %1829 = vmatpush1.xpose.msra.mxu0 %v1796
        %1830 = vmatprep.subr.mxu0 0.0
        %1831 = vmatpush2.xpose.msra.mxu0 0.0
        %1832 = vmatprep.subr.mxu0 0.0
        %1833 = vmatpush2.xpose.msra.mxu0 0.0
        %1834 = vmatprep.subr.mxu0 0.0
        %1835 = vmatpush2.xpose.msra.mxu0 0.0
        %1836 = vmatprep.subr.mxu0 0.0
        %1837 = vmatpush2.xpose.msra.mxu0 0.0
        %1838 = vmatprep.subr.mxu0 0.0
        %1839 = vmatpush2.xpose.msra.mxu0 0.0
        %1840 = vmatprep.subr.mxu0 0.0
        %1841 = vmatpush2.xpose.msra.mxu0 0.0
        %1842 = vmatprep.subr.mxu0 0.0
        %1843 = vmatpush2.xpose.msra.mxu0 0.0
        %1844 = vmatprep.subr.mxu0 0.0
        %1845 = vmatpush2.xpose.msra.mxu0 0.0
        %1846 = vmatprep.subr.mxu0 0.0
        %1847 = vmatpush2.xpose.msra.mxu0 0.0
        %1848 = vmatprep.subr.mxu0 0.0
        %1849 = vmatpush2.xpose.msra.mxu0 0.0
        %1850 = vmatprep.subr.mxu0 0.0
        %1851 = vmatpush2.xpose.msra.mxu0 0.0
        %1852 = vmatprep.subr.mxu0 0.0
        %1853 = vmatpush2.xpose.msra.mxu0 0.0
        %1854 = vmatprep.subr.mxu0 0.0
        %1855 = vmatpush2.xpose.msra.mxu0 0.0
        %1856 = vmatprep.subr.mxu0 0.0
        %1857 = vmatpush2.xpose.msra.mxu0 0.0
        %1858 = vmatprep.subr.mxu0 0.0
        %1859 = vmatpush2.xpose.msra.mxu0 0.0
        %1860 = vmatprep.subr.mxu0 0.0
        %1861 = vmatpush2.xpose.msra.mxu0 0.0
        %1862 = vmatprep.mubr.f32.mxu0 0.0
        %1863 = vmatmul.mubr.f32.gmra.mxu0 %v1782
        %v1864 = vpop.f32.mrf.mxu0
        %v1865 = vadd.f32 0.0, %v1864
        %v1866 = vpop.f32.mrf.mxu0
        %1867 = vmatprep.mubr.f32.mxu0 0.0
        %1868 = vmatmul.mubr.f32.gmra.mxu0 %v1784
        %v1869 = vpop.f32.mrf.mxu0
        %v1870 = vadd.f32 0.0, %v1869
        %v1871 = vpop.f32.mrf.mxu0
        %1872 = vmatprep.mubr.f32.mxu0 0.0
        %1873 = vmatmul.mubr.f32.gmra.mxu0 %v1786
        %v1874 = vpop.f32.mrf.mxu0
        %v1875 = vadd.f32 0.0, %v1874
        %v1876 = vpop.f32.mrf.mxu0
        %1877 = vmatprep.mubr.f32.mxu0 0.0
        %1878 = vmatmul.mubr.f32.gmra.mxu0 %v1788
        %v1879 = vpop.f32.mrf.mxu0
        %v1880 = vadd.f32 0.0, %v1879
        %v1881 = vpop.f32.mrf.mxu0
        %1882 = vmatprep.mubr.f32.mxu0 0.0
        %1883 = vmatmul.mubr.f32.gmra.mxu0 %v1790
        %v1884 = vpop.f32.mrf.mxu0
        %v1885 = vadd.f32 0.0, %v1884
        %v1886 = vpop.f32.mrf.mxu0
        %1887 = vmatprep.mubr.f32.mxu0 0.0
        %1888 = vmatmul.mubr.f32.gmra.mxu0 %v1792
        %v1889 = vpop.f32.mrf.mxu0
        %v1890 = vadd.f32 0.0, %v1889
        %v1891 = vpop.f32.mrf.mxu0
        %1892 = vmatprep.mubr.f32.mxu0 0.0
        %1893 = vmatmul.mubr.f32.gmra.mxu0 %v1794
        %v1894 = vpop.f32.mrf.mxu0
        %v1895 = vadd.f32 0.0, %v1894
        %v1896 = vpop.f32.mrf.mxu0
        %1897 = vdwg.mxu0
        %v1898 = vmul.f32 %v1865, 0.35355338
        %v1899 = vmul.f32 %v1870, 0.35355338
        %v1900 = vmul.f32 %v1875, 0.35355338
        %v1901 = vmul.f32 %v1880, 0.35355338
        %v1902 = vmul.f32 %v1885, 0.35355338
        %v1903 = vmul.f32 %v1890, 0.35355338
        %v1904 = vmul.f32 %v1895, 0.35355338
        %v1905 = vsel %vm852, %v1898, -inf
        %1906 = vmax.xlane.f32.xlu0 %v1905
        %v1907 = vpop.xlane.xlu0 %1906
        %v1908 = vsel %vm852, %v1899, -inf
        %1909 = vmax.xlane.f32.xlu0 %v1908
        %v1910 = vpop.xlane.xlu0 %1909
        %v1911 = vsel %vm852, %v1900, -inf
        %1912 = vmax.xlane.f32.xlu0 %v1911
        %v1913 = vpop.xlane.xlu0 %1912
        %v1914 = vsel %vm852, %v1901, -inf
        %1915 = vmax.xlane.f32.xlu0 %v1914
        %v1916 = vpop.xlane.xlu0 %1915
        %v1917 = vsel %vm852, %v1902, -inf
        %1918 = vmax.xlane.f32.xlu0 %v1917
        %v1919 = vpop.xlane.xlu0 %1918
        %v1920 = vsel %vm852, %v1903, -inf
        %1921 = vmax.xlane.f32.xlu0 %v1920
        %v1922 = vpop.xlane.xlu0 %1921
        %v1923 = vsel %vm1002, %v1904, -inf
        %1924 = vmax.xlane.f32.xlu0 %v1923
        %v1925 = vpop.xlane.xlu0 %1924
        %v1926 = vsub.f32 %v1898, %v1907
        %v1927 = vsub.f32 %v1899, %v1910
        %v1928 = vsub.f32 %v1900, %v1913
        %v1929 = vsub.f32 %v1901, %v1916
        %v1930 = vsub.f32 %v1902, %v1919
        %v1931 = vsub.f32 %v1903, %v1922
        %v1932 = vsub.f32 %v1904, %v1925
        %v1933 = vmul.f32 %v1926, 1.442695
        %v1934 = vpow.pop %v1933
        %v1935 = vmul.f32 %v1927, 1.442695
        %v1936 = vpow.pop %v1935
        %v1937 = vmul.f32 %v1928, 1.442695
        %v1938 = vpow.pop %v1937
        %v1939 = vmul.f32 %v1929, 1.442695
        %v1940 = vpow.pop %v1939
        %v1941 = vmul.f32 %v1930, 1.442695
        %v1942 = vpow.pop %v1941
        %v1943 = vmul.f32 %v1931, 1.442695
        %v1944 = vpow.pop %v1943
        %v1945 = vmul.f32 %v1932, 1.442695
        %v1946 = vpow.pop %v1945
        %v1947 = vsel %vm852, %v1934, 0.0
        %1948 = vadd.xlane.f32.xlu0 %v1947
        %v1949 = vpop.xlane.xlu0 %1948
        %v1950 = vsel %vm852, %v1936, 0.0
        %1951 = vadd.xlane.f32.xlu0 %v1950
        %v1952 = vpop.xlane.xlu0 %1951
        %v1953 = vsel %vm852, %v1938, 0.0
        %1954 = vadd.xlane.f32.xlu0 %v1953
        %v1955 = vpop.xlane.xlu0 %1954
        %v1956 = vsel %vm852, %v1940, 0.0
        %1957 = vadd.xlane.f32.xlu0 %v1956
        %v1958 = vpop.xlane.xlu0 %1957
        %v1959 = vsel %vm852, %v1942, 0.0
        %1960 = vadd.xlane.f32.xlu0 %v1959
        %v1961 = vpop.xlane.xlu0 %1960
        %v1962 = vsel %vm852, %v1944, 0.0
        %1963 = vadd.xlane.f32.xlu0 %v1962
        %v1964 = vpop.xlane.xlu0 %1963
        %v1965 = vsel %vm1002, %v1946, 0.0
        %1966 = vadd.xlane.f32.xlu0 %v1965
        %v1967 = vpop.xlane.xlu0 %1966
        %v1968 = vrcp.pop %v1949
        %v1969 = vrcp.pop %v1952
        %v1970 = vrcp.pop %v1955
        %v1971 = vrcp.pop %v1958
        %v1972 = vrcp.pop %v1961
        %v1973 = vrcp.pop %v1964
        %v1974 = vrcp.pop %v1967
        %v1975 = vmul.f32 %v1934, %v1968
        %v1976 = vmul.f32 %v1936, %v1969
        %v1977 = vmul.f32 %v1938, %v1970
        %v1978 = vmul.f32 %v1940, %v1971
        %v1979 = vmul.f32 %v1942, %v1972
        %v1980 = vmul.f32 %v1944, %v1973
        %v1981 = vmul.f32 %v1946, %v1974
        %1982 = vrot.lane.b32.xlu0 %v845, 112
        %v1983 = vpop.permute.xlu0 %1982
        %v1986 = vsel %vm852, %v1975, 0
        %v1989 = vsel %vm852, %v1976, 0
        %v1992 = vsel %vm852, %v1977, 0
        %v1995 = vsel %vm852, %v1978, 0
        %v1998 = vsel %vm852, %v1979, 0
        %v2001 = vsel %vm852, %v1980, 0
        %v2004 = vsel %vm852, %v1981, 0
        %2006 = vmatprep.subr.mxu0 0.0
        %2007 = vmatpush1.msra.mxu0 0.0
        %2008 = vmatprep.subr.mxu0 0.0
        %2009 = vmatpush1.msra.mxu0 0.0
        %2010 = vmatprep.subr.mxu0 0.0
        %2011 = vmatpush1.msra.mxu0 0.0
        %2012 = vmatprep.subr.mxu0 0.0
        %2013 = vmatpush1.msra.mxu0 0.0
        %2014 = vmatprep.subr.mxu0 0.0
        %2015 = vmatpush1.msra.mxu0 0.0
        %2016 = vmatprep.subr.mxu0 0.0
        %2017 = vmatpush1.msra.mxu0 0.0
        %2018 = vmatprep.subr.mxu0 0.0
        %2019 = vmatpush1.msra.mxu0 0.0
        %2020 = vmatprep.subr.mxu0 0.0
        %2021 = vmatpush1.msra.mxu0 0.0
        %2022 = vmatprep.subr.mxu0 0.0
        %2023 = vmatpush1.msra.mxu0 0.0
        %2024 = vmatprep.subr.mxu0 0.0
        %2025 = vmatpush1.msra.mxu0 0.0
        %2026 = vmatprep.subr.mxu0 0.0
        %2027 = vmatpush1.msra.mxu0 0.0
        %2028 = vmatprep.subr.mxu0 0.0
        %2029 = vmatpush1.msra.mxu0 0.0
        %2030 = vmatprep.subr.mxu0 0.0
        %2031 = vmatpush1.msra.mxu0 0.0
        %2032 = vmatprep.subr.mxu0 0.0
        %2033 = vmatpush1.msra.mxu0 0.0
        %2034 = vmatprep.subr.mxu0 0.0
        %2035 = vmatpush1.msra.mxu0 0.0
        %2036 = vmatprep.subr.mxu0 0.0
        %2037 = vmatpush1.msra.mxu0 %v1983
        %2038 = vmatprep.subr.mxu0 0.0
        %2039 = vmatpush2.msra.mxu0 0.0
        %2040 = vmatprep.subr.mxu0 0.0
        %2041 = vmatpush2.msra.mxu0 0.0
        %2042 = vmatprep.subr.mxu0 0.0
        %2043 = vmatpush2.msra.mxu0 0.0
        %2044 = vmatprep.subr.mxu0 0.0
        %2045 = vmatpush2.msra.mxu0 0.0
        %2046 = vmatprep.subr.mxu0 0.0
        %2047 = vmatpush2.msra.mxu0 0.0
        %2048 = vmatprep.subr.mxu0 0.0
        %2049 = vmatpush2.msra.mxu0 0.0
        %2050 = vmatprep.subr.mxu0 0.0
        %2051 = vmatpush2.msra.mxu0 0.0
        %2052 = vmatprep.subr.mxu0 0.0
        %2053 = vmatpush2.msra.mxu0 0.0
        %2054 = vmatprep.subr.mxu0 0.0
        %2055 = vmatpush2.msra.mxu0 0.0
        %2056 = vmatprep.subr.mxu0 0.0
        %2057 = vmatpush2.msra.mxu0 0.0
        %2058 = vmatprep.subr.mxu0 0.0
        %2059 = vmatpush2.msra.mxu0 0.0
        %2060 = vmatprep.subr.mxu0 0.0
        %2061 = vmatpush2.msra.mxu0 0.0
        %2062 = vmatprep.subr.mxu0 0.0
        %2063 = vmatpush2.msra.mxu0 0.0
        %2064 = vmatprep.subr.mxu0 0.0
        %2065 = vmatpush2.msra.mxu0 0.0
        %2066 = vmatprep.subr.mxu0 0.0
        %2067 = vmatpush2.msra.mxu0 0.0
        %2068 = vmatprep.subr.mxu0 0.0
        %2069 = vmatpush2.msra.mxu0 0.0
        %2070 = vmatprep.mubr.f32.mxu0 0.0
        %2071 = vmatmul.mubr.f32.gmra.mxu0 %v1986
        %v2072 = vpop.f32.mrf.mxu0
        %v2073 = vadd.f32 0.0, %v2072
        %v2074 = vpop.f32.mrf.mxu0
        %2075 = vmatprep.mubr.f32.mxu0 0.0
        %2076 = vmatmul.mubr.f32.gmra.mxu0 %v1989
        %v2077 = vpop.f32.mrf.mxu0
        %v2078 = vadd.f32 0.0, %v2077
        %v2079 = vpop.f32.mrf.mxu0
        %2080 = vmatprep.mubr.f32.mxu0 0.0
        %2081 = vmatmul.mubr.f32.gmra.mxu0 %v1992
        %v2082 = vpop.f32.mrf.mxu0
        %v2083 = vadd.f32 0.0, %v2082
        %v2084 = vpop.f32.mrf.mxu0
        %2085 = vmatprep.mubr.f32.mxu0 0.0
        %2086 = vmatmul.mubr.f32.gmra.mxu0 %v1995
        %v2087 = vpop.f32.mrf.mxu0
        %v2088 = vadd.f32 0.0, %v2087
        %v2089 = vpop.f32.mrf.mxu0
        %2090 = vmatprep.mubr.f32.mxu0 0.0
        %2091 = vmatmul.mubr.f32.gmra.mxu0 %v1998
        %v2092 = vpop.f32.mrf.mxu0
        %v2093 = vadd.f32 0.0, %v2092
        %v2094 = vpop.f32.mrf.mxu0
        %2095 = vmatprep.mubr.f32.mxu0 0.0
        %2096 = vmatmul.mubr.f32.gmra.mxu0 %v2001
        %v2097 = vpop.f32.mrf.mxu0
        %v2098 = vadd.f32 0.0, %v2097
        %v2099 = vpop.f32.mrf.mxu0
        %2100 = vmatprep.mubr.f32.mxu0 0.0
        %2101 = vmatmul.mubr.f32.gmra.mxu0 %v2004
        %v2102 = vpop.f32.mrf.mxu0
        %v2103 = vadd.f32 0.0, %v2102
        %v2104 = vpop.f32.mrf.mxu0
        %2105 = vdwg.mxu0
        %v2107 = vsel %vm852, %v2073, 0
        %v2110 = vsel %vm852, %v2078, 0
        %v2113 = vsel %vm852, %v2083, 0
        %v2116 = vsel %vm852, %v2088, 0
        %v2119 = vsel %vm852, %v2093, 0
        %v2122 = vsel %vm852, %v2098, 0
        %v2125 = vsel %vm852, %v2103, 0
        %2127 = vmatprep.subr.mxu0 0.0
        %2128 = vmatpush1.msra.mxu0 0.0
        %2129 = vmatprep.subr.mxu0 0.0
        %2130 = vmatpush1.msra.mxu0 0.0
        %2131 = vmatprep.subr.mxu0 0.0
        %2132 = vmatpush1.msra.mxu0 0.0
        %2133 = vmatprep.subr.mxu0 0.0
        %2134 = vmatpush1.msra.mxu0 0.0
        %2135 = vmatprep.subr.mxu0 0.0
        %2136 = vmatpush1.msra.mxu0 0.0
        %2137 = vmatprep.subr.mxu0 0.0
        %2138 = vmatpush1.msra.mxu0 0.0
        %2139 = vmatprep.subr.mxu0 0.0
        %2140 = vmatpush1.msra.mxu0 0.0
        %2141 = vmatprep.subr.mxu0 0.0
        %2142 = vmatpush1.msra.mxu0 0.0
        %2143 = vmatprep.subr.mxu0 0.0
        %2144 = vmatpush1.msra.mxu0 0.0
        %2145 = vmatprep.subr.mxu0 0.0
        %2146 = vmatpush1.msra.mxu0 0.0
        %2147 = vmatprep.subr.mxu0 0.0
        %2148 = vmatpush1.msra.mxu0 0.0
        %2149 = vmatprep.subr.mxu0 0.0
        %2150 = vmatpush1.msra.mxu0 0.0
        %2151 = vmatprep.subr.mxu0 0.0
        %2152 = vmatpush1.msra.mxu0 0.0
        %2153 = vmatprep.subr.mxu0 0.0
        %2154 = vmatpush1.msra.mxu0 0.0
        %2155 = vmatprep.subr.mxu0 0.0
        %2156 = vmatpush1.msra.mxu0 0.0
        %2157 = vmatprep.subr.mxu0 0.0
        %2158 = vmatpush1.msra.mxu0 %v850
        %2159 = vmatprep.subr.mxu0 0.0
        %2160 = vmatpush2.msra.mxu0 0.0
        %2161 = vmatprep.subr.mxu0 0.0
        %2162 = vmatpush2.msra.mxu0 0.0
        %2163 = vmatprep.subr.mxu0 0.0
        %2164 = vmatpush2.msra.mxu0 0.0
        %2165 = vmatprep.subr.mxu0 0.0
        %2166 = vmatpush2.msra.mxu0 0.0
        %2167 = vmatprep.subr.mxu0 0.0
        %2168 = vmatpush2.msra.mxu0 0.0
        %2169 = vmatprep.subr.mxu0 0.0
        %2170 = vmatpush2.msra.mxu0 0.0
        %2171 = vmatprep.subr.mxu0 0.0
        %2172 = vmatpush2.msra.mxu0 0.0
        %2173 = vmatprep.subr.mxu0 0.0
        %2174 = vmatpush2.msra.mxu0 0.0
        %2175 = vmatprep.subr.mxu0 0.0
        %2176 = vmatpush2.msra.mxu0 0.0
        %2177 = vmatprep.subr.mxu0 0.0
        %2178 = vmatpush2.msra.mxu0 0.0
        %2179 = vmatprep.subr.mxu0 0.0
        %2180 = vmatpush2.msra.mxu0 0.0
        %2181 = vmatprep.subr.mxu0 0.0
        %2182 = vmatpush2.msra.mxu0 0.0
        %2183 = vmatprep.subr.mxu0 0.0
        %2184 = vmatpush2.msra.mxu0 0.0
        %2185 = vmatprep.subr.mxu0 0.0
        %2186 = vmatpush2.msra.mxu0 0.0
        %2187 = vmatprep.subr.mxu0 0.0
        %2188 = vmatpush2.msra.mxu0 0.0
        %2189 = vmatprep.subr.mxu0 0.0
        %2190 = vmatpush2.msra.mxu0 0.0
        %2191 = vmatprep.mubr.f32.mxu0 0.0
        %2192 = vmatmul.mubr.f32.gmra.mxu0 %v2107
        %v2193 = vpop.f32.mrf.mxu0
        %v2194 = vadd.f32 0.0, %v2193
        %v2195 = vpop.f32.mrf.mxu0
        %2196 = vmatprep.mubr.f32.mxu0 0.0
        %2197 = vmatmul.mubr.f32.gmra.mxu0 %v2110
        %v2198 = vpop.f32.mrf.mxu0
        %v2199 = vadd.f32 0.0, %v2198
        %v2200 = vpop.f32.mrf.mxu0
        %2201 = vmatprep.mubr.f32.mxu0 0.0
        %2202 = vmatmul.mubr.f32.gmra.mxu0 %v2113
        %v2203 = vpop.f32.mrf.mxu0
        %v2204 = vadd.f32 0.0, %v2203
        %v2205 = vpop.f32.mrf.mxu0
        %2206 = vmatprep.mubr.f32.mxu0 0.0
        %2207 = vmatmul.mubr.f32.gmra.mxu0 %v2116
        %v2208 = vpop.f32.mrf.mxu0
        %v2209 = vadd.f32 0.0, %v2208
        %v2210 = vpop.f32.mrf.mxu0
        %2211 = vmatprep.mubr.f32.mxu0 0.0
        %2212 = vmatmul.mubr.f32.gmra.mxu0 %v2119
        %v2213 = vpop.f32.mrf.mxu0
        %v2214 = vadd.f32 0.0, %v2213
        %v2215 = vpop.f32.mrf.mxu0
        %2216 = vmatprep.mubr.f32.mxu0 0.0
        %2217 = vmatmul.mubr.f32.gmra.mxu0 %v2122
        %v2218 = vpop.f32.mrf.mxu0
        %v2219 = vadd.f32 0.0, %v2218
        %v2220 = vpop.f32.mrf.mxu0
        %2221 = vmatprep.mubr.f32.mxu0 0.0
        %2222 = vmatmul.mubr.f32.gmra.mxu0 %v2125
        %v2223 = vpop.f32.mrf.mxu0
        %v2224 = vadd.f32 0.0, %v2223
        %v2225 = vpop.f32.mrf.mxu0
        %2226 = vdwg.mxu0
        %v2227 = vadd.f32 %v1733, %v2194
        %v2228 = vadd.f32 %v1738, %v2199
        %v2229 = vadd.f32 %v1743, %v2204
        %v2230 = vadd.f32 %v1748, %v2209
        %v2231 = vadd.f32 %v1753, %v2214
        %v2232 = vadd.f32 %v1758, %v2219
        %v2233 = vadd.f32 %v1763, %v2224
        %2234 = vrot.lane.b32.xlu0 %v650, 104
        %v2235 = vpop.permute.xlu0 %2234
        %2236 = vrot.lane.b32.xlu0 %v655, 104
        %v2237 = vpop.permute.xlu0 %2236
        %2238 = vrot.lane.b32.xlu0 %v660, 104
        %v2239 = vpop.permute.xlu0 %2238
        %2240 = vrot.lane.b32.xlu0 %v665, 104
        %v2241 = vpop.permute.xlu0 %2240
        %2242 = vrot.lane.b32.xlu0 %v670, 104
        %v2243 = vpop.permute.xlu0 %2242
        %2244 = vrot.lane.b32.xlu0 %v675, 104
        %v2245 = vpop.permute.xlu0 %2244
        %2246 = vrot.lane.b32.xlu0 %v680, 104
        %v2247 = vpop.permute.xlu0 %2246
        %2248 = vrot.lane.b32.xlu0 %v764, 104
        %v2249 = vpop.permute.xlu0 %2248
        %v2250 = vsel %vm852, %v2235, 0
        %v2252 = vsel %vm852, %v2237, 0
        %v2254 = vsel %vm852, %v2239, 0
        %v2256 = vsel %vm852, %v2241, 0
        %v2258 = vsel %vm852, %v2243, 0
        %v2260 = vsel %vm852, %v2245, 0
        %v2262 = vsel %vm852, %v2247, 0
        %v2264 = vsel %vm852, %v2249, 0
        %2266 = vmatprep.subr.mxu0 0.0
        %2267 = vmatpush1.xpose.msra.mxu0 0.0
        %2268 = vmatprep.subr.mxu0 0.0
        %2269 = vmatpush1.xpose.msra.mxu0 0.0
        %2270 = vmatprep.subr.mxu0 0.0
        %2271 = vmatpush1.xpose.msra.mxu0 0.0
        %2272 = vmatprep.subr.mxu0 0.0
        %2273 = vmatpush1.xpose.msra.mxu0 0.0
        %2274 = vmatprep.subr.mxu0 0.0
        %2275 = vmatpush1.xpose.msra.mxu0 0.0
        %2276 = vmatprep.subr.mxu0 0.0
        %2277 = vmatpush1.xpose.msra.mxu0 0.0
        %2278 = vmatprep.subr.mxu0 0.0
        %2279 = vmatpush1.xpose.msra.mxu0 0.0
        %2280 = vmatprep.subr.mxu0 0.0
        %2281 = vmatpush1.xpose.msra.mxu0 0.0
        %2282 = vmatprep.subr.mxu0 0.0
        %2283 = vmatpush1.xpose.msra.mxu0 0.0
        %2284 = vmatprep.subr.mxu0 0.0
        %2285 = vmatpush1.xpose.msra.mxu0 0.0
        %2286 = vmatprep.subr.mxu0 0.0
        %2287 = vmatpush1.xpose.msra.mxu0 0.0
        %2288 = vmatprep.subr.mxu0 0.0
        %2289 = vmatpush1.xpose.msra.mxu0 0.0
        %2290 = vmatprep.subr.mxu0 0.0
        %2291 = vmatpush1.xpose.msra.mxu0 0.0
        %2292 = vmatprep.subr.mxu0 0.0
        %2293 = vmatpush1.xpose.msra.mxu0 0.0
        %2294 = vmatprep.subr.mxu0 0.0
        %2295 = vmatpush1.xpose.msra.mxu0 0.0
        %2296 = vmatprep.subr.mxu0 0.0
        %2297 = vmatpush1.xpose.msra.mxu0 %v2264
        %2298 = vmatprep.subr.mxu0 0.0
        %2299 = vmatpush2.xpose.msra.mxu0 0.0
        %2300 = vmatprep.subr.mxu0 0.0
        %2301 = vmatpush2.xpose.msra.mxu0 0.0
        %2302 = vmatprep.subr.mxu0 0.0
        %2303 = vmatpush2.xpose.msra.mxu0 0.0
        %2304 = vmatprep.subr.mxu0 0.0
        %2305 = vmatpush2.xpose.msra.mxu0 0.0
        %2306 = vmatprep.subr.mxu0 0.0
        %2307 = vmatpush2.xpose.msra.mxu0 0.0
        %2308 = vmatprep.subr.mxu0 0.0
        %2309 = vmatpush2.xpose.msra.mxu0 0.0
        %2310 = vmatprep.subr.mxu0 0.0
        %2311 = vmatpush2.xpose.msra.mxu0 0.0
        %2312 = vmatprep.subr.mxu0 0.0
        %2313 = vmatpush2.xpose.msra.mxu0 0.0
        %2314 = vmatprep.subr.mxu0 0.0
        %2315 = vmatpush2.xpose.msra.mxu0 0.0
        %2316 = vmatprep.subr.mxu0 0.0
        %2317 = vmatpush2.xpose.msra.mxu0 0.0
        %2318 = vmatprep.subr.mxu0 0.0
        %2319 = vmatpush2.xpose.msra.mxu0 0.0
        %2320 = vmatprep.subr.mxu0 0.0
        %2321 = vmatpush2.xpose.msra.mxu0 0.0
        %2322 = vmatprep.subr.mxu0 0.0
        %2323 = vmatpush2.xpose.msra.mxu0 0.0
        %2324 = vmatprep.subr.mxu0 0.0
        %2325 = vmatpush2.xpose.msra.mxu0 0.0
        %2326 = vmatprep.subr.mxu0 0.0
        %2327 = vmatpush2.xpose.msra.mxu0 0.0
        %2328 = vmatprep.subr.mxu0 0.0
        %2329 = vmatpush2.xpose.msra.mxu0 0.0
        %2330 = vmatprep.mubr.f32.mxu0 0.0
        %2331 = vmatmul.mubr.f32.gmra.mxu0 %v2250
        %v2332 = vpop.f32.mrf.mxu0
        %v2333 = vadd.f32 0.0, %v2332
        %v2334 = vpop.f32.mrf.mxu0
        %2335 = vmatprep.mubr.f32.mxu0 0.0
        %2336 = vmatmul.mubr.f32.gmra.mxu0 %v2252
        %v2337 = vpop.f32.mrf.mxu0
        %v2338 = vadd.f32 0.0, %v2337
        %v2339 = vpop.f32.mrf.mxu0
        %2340 = vmatprep.mubr.f32.mxu0 0.0
        %2341 = vmatmul.mubr.f32.gmra.mxu0 %v2254
        %v2342 = vpop.f32.mrf.mxu0
        %v2343 = vadd.f32 0.0, %v2342
        %v2344 = vpop.f32.mrf.mxu0
        %2345 = vmatprep.mubr.f32.mxu0 0.0
        %2346 = vmatmul.mubr.f32.gmra.mxu0 %v2256
        %v2347 = vpop.f32.mrf.mxu0
        %v2348 = vadd.f32 0.0, %v2347
        %v2349 = vpop.f32.mrf.mxu0
        %2350 = vmatprep.mubr.f32.mxu0 0.0
        %2351 = vmatmul.mubr.f32.gmra.mxu0 %v2258
        %v2352 = vpop.f32.mrf.mxu0
        %v2353 = vadd.f32 0.0, %v2352
        %v2354 = vpop.f32.mrf.mxu0
        %2355 = vmatprep.mubr.f32.mxu0 0.0
        %2356 = vmatmul.mubr.f32.gmra.mxu0 %v2260
        %v2357 = vpop.f32.mrf.mxu0
        %v2358 = vadd.f32 0.0, %v2357
        %v2359 = vpop.f32.mrf.mxu0
        %2360 = vmatprep.mubr.f32.mxu0 0.0
        %2361 = vmatmul.mubr.f32.gmra.mxu0 %v2262
        %v2362 = vpop.f32.mrf.mxu0
        %v2363 = vadd.f32 0.0, %v2362
        %v2364 = vpop.f32.mrf.mxu0
        %2365 = vdwg.mxu0
        %v2366 = vmul.f32 %v2333, 0.35355338
        %v2367 = vmul.f32 %v2338, 0.35355338
        %v2368 = vmul.f32 %v2343, 0.35355338
        %v2369 = vmul.f32 %v2348, 0.35355338
        %v2370 = vmul.f32 %v2353, 0.35355338
        %v2371 = vmul.f32 %v2358, 0.35355338
        %v2372 = vmul.f32 %v2363, 0.35355338
        %v2373 = vsel %vm852, %v2366, -inf
        %2374 = vmax.xlane.f32.xlu0 %v2373
        %v2375 = vpop.xlane.xlu0 %2374
        %v2376 = vsel %vm852, %v2367, -inf
        %2377 = vmax.xlane.f32.xlu0 %v2376
        %v2378 = vpop.xlane.xlu0 %2377
        %v2379 = vsel %vm852, %v2368, -inf
        %2380 = vmax.xlane.f32.xlu0 %v2379
        %v2381 = vpop.xlane.xlu0 %2380
        %v2382 = vsel %vm852, %v2369, -inf
        %2383 = vmax.xlane.f32.xlu0 %v2382
        %v2384 = vpop.xlane.xlu0 %2383
        %v2385 = vsel %vm852, %v2370, -inf
        %2386 = vmax.xlane.f32.xlu0 %v2385
        %v2387 = vpop.xlane.xlu0 %2386
        %v2388 = vsel %vm852, %v2371, -inf
        %2389 = vmax.xlane.f32.xlu0 %v2388
        %v2390 = vpop.xlane.xlu0 %2389
        %v2391 = vsel %vm1002, %v2372, -inf
        %2392 = vmax.xlane.f32.xlu0 %v2391
        %v2393 = vpop.xlane.xlu0 %2392
        %v2394 = vsub.f32 %v2366, %v2375
        %v2395 = vsub.f32 %v2367, %v2378
        %v2396 = vsub.f32 %v2368, %v2381
        %v2397 = vsub.f32 %v2369, %v2384
        %v2398 = vsub.f32 %v2370, %v2387
        %v2399 = vsub.f32 %v2371, %v2390
        %v2400 = vsub.f32 %v2372, %v2393
        %v2401 = vmul.f32 %v2394, 1.442695
        %v2402 = vpow.pop %v2401
        %v2403 = vmul.f32 %v2395, 1.442695
        %v2404 = vpow.pop %v2403
        %v2405 = vmul.f32 %v2396, 1.442695
        %v2406 = vpow.pop %v2405
        %v2407 = vmul.f32 %v2397, 1.442695
        %v2408 = vpow.pop %v2407
        %v2409 = vmul.f32 %v2398, 1.442695
        %v2410 = vpow.pop %v2409
        %v2411 = vmul.f32 %v2399, 1.442695
        %v2412 = vpow.pop %v2411
        %v2413 = vmul.f32 %v2400, 1.442695
        %v2414 = vpow.pop %v2413
        %v2415 = vsel %vm852, %v2402, 0.0
        %2416 = vadd.xlane.f32.xlu0 %v2415
        %v2417 = vpop.xlane.xlu0 %2416
        %v2418 = vsel %vm852, %v2404, 0.0
        %2419 = vadd.xlane.f32.xlu0 %v2418
        %v2420 = vpop.xlane.xlu0 %2419
        %v2421 = vsel %vm852, %v2406, 0.0
        %2422 = vadd.xlane.f32.xlu0 %v2421
        %v2423 = vpop.xlane.xlu0 %2422
        %v2424 = vsel %vm852, %v2408, 0.0
        %2425 = vadd.xlane.f32.xlu0 %v2424
        %v2426 = vpop.xlane.xlu0 %2425
        %v2427 = vsel %vm852, %v2410, 0.0
        %2428 = vadd.xlane.f32.xlu0 %v2427
        %v2429 = vpop.xlane.xlu0 %2428
        %v2430 = vsel %vm852, %v2412, 0.0
        %2431 = vadd.xlane.f32.xlu0 %v2430
        %v2432 = vpop.xlane.xlu0 %2431
        %v2433 = vsel %vm1002, %v2414, 0.0
        %2434 = vadd.xlane.f32.xlu0 %v2433
        %v2435 = vpop.xlane.xlu0 %2434
        %v2436 = vrcp.pop %v2417
        %v2437 = vrcp.pop %v2420
        %v2438 = vrcp.pop %v2423
        %v2439 = vrcp.pop %v2426
        %v2440 = vrcp.pop %v2429
        %v2441 = vrcp.pop %v2432
        %v2442 = vrcp.pop %v2435
        %v2443 = vmul.f32 %v2402, %v2436
        %v2444 = vmul.f32 %v2404, %v2437
        %v2445 = vmul.f32 %v2406, %v2438
        %v2446 = vmul.f32 %v2408, %v2439
        %v2447 = vmul.f32 %v2410, %v2440
        %v2448 = vmul.f32 %v2412, %v2441
        %v2449 = vmul.f32 %v2414, %v2442
        %2450 = vrot.lane.b32.xlu0 %v845, 104
        %v2451 = vpop.permute.xlu0 %2450
        %v2454 = vsel %vm852, %v2443, 0
        %v2457 = vsel %vm852, %v2444, 0
        %v2460 = vsel %vm852, %v2445, 0
        %v2463 = vsel %vm852, %v2446, 0
        %v2466 = vsel %vm852, %v2447, 0
        %v2469 = vsel %vm852, %v2448, 0
        %v2472 = vsel %vm852, %v2449, 0
        %2474 = vmatprep.subr.mxu0 0.0
        %2475 = vmatpush1.msra.mxu0 0.0
        %2476 = vmatprep.subr.mxu0 0.0
        %2477 = vmatpush1.msra.mxu0 0.0
        %2478 = vmatprep.subr.mxu0 0.0
        %2479 = vmatpush1.msra.mxu0 0.0
        %2480 = vmatprep.subr.mxu0 0.0
        %2481 = vmatpush1.msra.mxu0 0.0
        %2482 = vmatprep.subr.mxu0 0.0
        %2483 = vmatpush1.msra.mxu0 0.0
        %2484 = vmatprep.subr.mxu0 0.0
        %2485 = vmatpush1.msra.mxu0 0.0
        %2486 = vmatprep.subr.mxu0 0.0
        %2487 = vmatpush1.msra.mxu0 0.0
        %2488 = vmatprep.subr.mxu0 0.0
        %2489 = vmatpush1.msra.mxu0 0.0
        %2490 = vmatprep.subr.mxu0 0.0
        %2491 = vmatpush1.msra.mxu0 0.0
        %2492 = vmatprep.subr.mxu0 0.0
        %2493 = vmatpush1.msra.mxu0 0.0
        %2494 = vmatprep.subr.mxu0 0.0
        %2495 = vmatpush1.msra.mxu0 0.0
        %2496 = vmatprep.subr.mxu0 0.0
        %2497 = vmatpush1.msra.mxu0 0.0
        %2498 = vmatprep.subr.mxu0 0.0
        %2499 = vmatpush1.msra.mxu0 0.0
        %2500 = vmatprep.subr.mxu0 0.0
        %2501 = vmatpush1.msra.mxu0 0.0
        %2502 = vmatprep.subr.mxu0 0.0
        %2503 = vmatpush1.msra.mxu0 0.0
        %2504 = vmatprep.subr.mxu0 0.0
        %2505 = vmatpush1.msra.mxu0 %v2451
        %2506 = vmatprep.subr.mxu0 0.0
        %2507 = vmatpush2.msra.mxu0 0.0
        %2508 = vmatprep.subr.mxu0 0.0
        %2509 = vmatpush2.msra.mxu0 0.0
        %2510 = vmatprep.subr.mxu0 0.0
        %2511 = vmatpush2.msra.mxu0 0.0
        %2512 = vmatprep.subr.mxu0 0.0
        %2513 = vmatpush2.msra.mxu0 0.0
        %2514 = vmatprep.subr.mxu0 0.0
        %2515 = vmatpush2.msra.mxu0 0.0
        %2516 = vmatprep.subr.mxu0 0.0
        %2517 = vmatpush2.msra.mxu0 0.0
        %2518 = vmatprep.subr.mxu0 0.0
        %2519 = vmatpush2.msra.mxu0 0.0
        %2520 = vmatprep.subr.mxu0 0.0
        %2521 = vmatpush2.msra.mxu0 0.0
        %2522 = vmatprep.subr.mxu0 0.0
        %2523 = vmatpush2.msra.mxu0 0.0
        %2524 = vmatprep.subr.mxu0 0.0
        %2525 = vmatpush2.msra.mxu0 0.0
        %2526 = vmatprep.subr.mxu0 0.0
        %2527 = vmatpush2.msra.mxu0 0.0
        %2528 = vmatprep.subr.mxu0 0.0
        %2529 = vmatpush2.msra.mxu0 0.0
        %2530 = vmatprep.subr.mxu0 0.0
        %2531 = vmatpush2.msra.mxu0 0.0
        %2532 = vmatprep.subr.mxu0 0.0
        %2533 = vmatpush2.msra.mxu0 0.0
        %2534 = vmatprep.subr.mxu0 0.0
        %2535 = vmatpush2.msra.mxu0 0.0
        %2536 = vmatprep.subr.mxu0 0.0
        %2537 = vmatpush2.msra.mxu0 0.0
        %2538 = vmatprep.mubr.f32.mxu0 0.0
        %2539 = vmatmul.mubr.f32.gmra.mxu0 %v2454
        %v2540 = vpop.f32.mrf.mxu0
        %v2541 = vadd.f32 0.0, %v2540
        %v2542 = vpop.f32.mrf.mxu0
        %2543 = vmatprep.mubr.f32.mxu0 0.0
        %2544 = vmatmul.mubr.f32.gmra.mxu0 %v2457
        %v2545 = vpop.f32.mrf.mxu0
        %v2546 = vadd.f32 0.0, %v2545
        %v2547 = vpop.f32.mrf.mxu0
        %2548 = vmatprep.mubr.f32.mxu0 0.0
        %2549 = vmatmul.mubr.f32.gmra.mxu0 %v2460
        %v2550 = vpop.f32.mrf.mxu0
        %v2551 = vadd.f32 0.0, %v2550
        %v2552 = vpop.f32.mrf.mxu0
        %2553 = vmatprep.mubr.f32.mxu0 0.0
        %2554 = vmatmul.mubr.f32.gmra.mxu0 %v2463
        %v2555 = vpop.f32.mrf.mxu0
        %v2556 = vadd.f32 0.0, %v2555
        %v2557 = vpop.f32.mrf.mxu0
        %2558 = vmatprep.mubr.f32.mxu0 0.0
        %2559 = vmatmul.mubr.f32.gmra.mxu0 %v2466
        %v2560 = vpop.f32.mrf.mxu0
        %v2561 = vadd.f32 0.0, %v2560
        %v2562 = vpop.f32.mrf.mxu0
        %2563 = vmatprep.mubr.f32.mxu0 0.0
        %2564 = vmatmul.mubr.f32.gmra.mxu0 %v2469
        %v2565 = vpop.f32.mrf.mxu0
        %v2566 = vadd.f32 0.0, %v2565
        %v2567 = vpop.f32.mrf.mxu0
        %2568 = vmatprep.mubr.f32.mxu0 0.0
        %2569 = vmatmul.mubr.f32.gmra.mxu0 %v2472
        %v2570 = vpop.f32.mrf.mxu0
        %v2571 = vadd.f32 0.0, %v2570
        %v2572 = vpop.f32.mrf.mxu0
        %2573 = vdwg.mxu0
        %v2575 = vsel %vm852, %v2541, 0
        %v2578 = vsel %vm852, %v2546, 0
        %v2581 = vsel %vm852, %v2551, 0
        %v2584 = vsel %vm852, %v2556, 0
        %v2587 = vsel %vm852, %v2561, 0
        %v2590 = vsel %vm852, %v2566, 0
        %v2593 = vsel %vm852, %v2571, 0
        %2595 = vmatprep.subr.mxu0 0.0
        %2596 = vmatpush1.msra.mxu0 0.0
        %2597 = vmatprep.subr.mxu0 0.0
        %2598 = vmatpush1.msra.mxu0 0.0
        %2599 = vmatprep.subr.mxu0 0.0
        %2600 = vmatpush1.msra.mxu0 0.0
        %2601 = vmatprep.subr.mxu0 0.0
        %2602 = vmatpush1.msra.mxu0 0.0
        %2603 = vmatprep.subr.mxu0 0.0
        %2604 = vmatpush1.msra.mxu0 0.0
        %2605 = vmatprep.subr.mxu0 0.0
        %2606 = vmatpush1.msra.mxu0 0.0
        %2607 = vmatprep.subr.mxu0 0.0
        %2608 = vmatpush1.msra.mxu0 0.0
        %2609 = vmatprep.subr.mxu0 0.0
        %2610 = vmatpush1.msra.mxu0 0.0
        %2611 = vmatprep.subr.mxu0 0.0
        %2612 = vmatpush1.msra.mxu0 0.0
        %2613 = vmatprep.subr.mxu0 0.0
        %2614 = vmatpush1.msra.mxu0 0.0
        %2615 = vmatprep.subr.mxu0 0.0
        %2616 = vmatpush1.msra.mxu0 0.0
        %2617 = vmatprep.subr.mxu0 0.0
        %2618 = vmatpush1.msra.mxu0 0.0
        %2619 = vmatprep.subr.mxu0 0.0
        %2620 = vmatpush1.msra.mxu0 0.0
        %2621 = vmatprep.subr.mxu0 0.0
        %2622 = vmatpush1.msra.mxu0 0.0
        %2623 = vmatprep.subr.mxu0 0.0
        %2624 = vmatpush1.msra.mxu0 0.0
        %2625 = vmatprep.subr.mxu0 0.0
        %2626 = vmatpush1.msra.mxu0 %v851
        %2627 = vmatprep.subr.mxu0 0.0
        %2628 = vmatpush2.msra.mxu0 0.0
        %2629 = vmatprep.subr.mxu0 0.0
        %2630 = vmatpush2.msra.mxu0 0.0
        %2631 = vmatprep.subr.mxu0 0.0
        %2632 = vmatpush2.msra.mxu0 0.0
        %2633 = vmatprep.subr.mxu0 0.0
        %2634 = vmatpush2.msra.mxu0 0.0
        %2635 = vmatprep.subr.mxu0 0.0
        %2636 = vmatpush2.msra.mxu0 0.0
        %2637 = vmatprep.subr.mxu0 0.0
        %2638 = vmatpush2.msra.mxu0 0.0
        %2639 = vmatprep.subr.mxu0 0.0
        %2640 = vmatpush2.msra.mxu0 0.0
        %2641 = vmatprep.subr.mxu0 0.0
        %2642 = vmatpush2.msra.mxu0 0.0
        %2643 = vmatprep.subr.mxu0 0.0
        %2644 = vmatpush2.msra.mxu0 0.0
        %2645 = vmatprep.subr.mxu0 0.0
        %2646 = vmatpush2.msra.mxu0 0.0
        %2647 = vmatprep.subr.mxu0 0.0
        %2648 = vmatpush2.msra.mxu0 0.0
        %2649 = vmatprep.subr.mxu0 0.0
        %2650 = vmatpush2.msra.mxu0 0.0
        %2651 = vmatprep.subr.mxu0 0.0
        %2652 = vmatpush2.msra.mxu0 0.0
        %2653 = vmatprep.subr.mxu0 0.0
        %2654 = vmatpush2.msra.mxu0 0.0
        %2655 = vmatprep.subr.mxu0 0.0
        %2656 = vmatpush2.msra.mxu0 0.0
        %2657 = vmatprep.subr.mxu0 0.0
        %2658 = vmatpush2.msra.mxu0 0.0
        %2659 = vmatprep.mubr.f32.mxu0 0.0
        %2660 = vmatmul.mubr.f32.gmra.mxu0 %v2575
        %v2661 = vpop.f32.mrf.mxu0
        %v2662 = vadd.f32 0.0, %v2661
        %v2663 = vpop.f32.mrf.mxu0
        %2664 = vmatprep.mubr.f32.mxu0 0.0
        %2665 = vmatmul.mubr.f32.gmra.mxu0 %v2578
        %v2666 = vpop.f32.mrf.mxu0
        %v2667 = vadd.f32 0.0, %v2666
        %v2668 = vpop.f32.mrf.mxu0
        %2669 = vmatprep.mubr.f32.mxu0 0.0
        %2670 = vmatmul.mubr.f32.gmra.mxu0 %v2581
        %v2671 = vpop.f32.mrf.mxu0
        %v2672 = vadd.f32 0.0, %v2671
        %v2673 = vpop.f32.mrf.mxu0
        %2674 = vmatprep.mubr.f32.mxu0 0.0
        %2675 = vmatmul.mubr.f32.gmra.mxu0 %v2584
        %v2676 = vpop.f32.mrf.mxu0
        %v2677 = vadd.f32 0.0, %v2676
        %v2678 = vpop.f32.mrf.mxu0
        %2679 = vmatprep.mubr.f32.mxu0 0.0
        %2680 = vmatmul.mubr.f32.gmra.mxu0 %v2587
        %v2681 = vpop.f32.mrf.mxu0
        %v2682 = vadd.f32 0.0, %v2681
        %v2683 = vpop.f32.mrf.mxu0
        %2684 = vmatprep.mubr.f32.mxu0 0.0
        %2685 = vmatmul.mubr.f32.gmra.mxu0 %v2590
        %v2686 = vpop.f32.mrf.mxu0
        %v2687 = vadd.f32 0.0, %v2686
        %v2688 = vpop.f32.mrf.mxu0
        %2689 = vmatprep.mubr.f32.mxu0 0.0
        %2690 = vmatmul.mubr.f32.gmra.mxu0 %v2593
        %v2691 = vpop.f32.mrf.mxu0
        %v2692 = vadd.f32 0.0, %v2691
        %v2693 = vpop.f32.mrf.mxu0
        %2694 = vdwg.mxu0
        %v2695 = vadd.f32 %v2227, %v2662
        %v2696 = vadd.f32 %v2228, %v2667
        %v2697 = vadd.f32 %v2229, %v2672
        %v2698 = vadd.f32 %v2230, %v2677
        %v2699 = vadd.f32 %v2231, %v2682
        %v2700 = vadd.f32 %v2232, %v2687
        %v2701 = vadd.f32 %v2233, %v2692
        %v2702 = vld [vmem:[%s9] sm:$0x1]
        %v2704 = vlaneseq
        %v2705 = vshrl.u32 %v2704, 7
        %v2706 = vsub.s32 0, %v2705
        %v2707 = vrot.slane %v2702, %v2706
        %v2709 = vadd.f32 %v2695, %v2707
        %v2710 = vadd.f32 %v2696, %v2707
        %v2711 = vadd.f32 %v2697, %v2707
        %v2712 = vadd.f32 %v2698, %v2707
        %v2713 = vadd.f32 %v2699, %v2707
        %v2714 = vadd.f32 %v2700, %v2707
        %v2715 = vadd.f32 %v2701, %v2707
        %v2716 = vsel %vm561, %v2709, 0.0
        %v2717 = vsel %vm561, %v2710, 0.0
        %v2718 = vadd.f32 %v2716, %v2717
        %v2719 = vsel %vm561, %v2711, 0.0
        %v2720 = vadd.f32 %v2718, %v2719
        %v2721 = vsel %vm561, %v2712, 0.0
        %v2722 = vadd.f32 %v2720, %v2721
        %v2723 = vsel %vm561, %v2713, 0.0
        %v2724 = vadd.f32 %v2722, %v2723
        %v2725 = vsel %vm561, %v2714, 0.0
        %v2726 = vadd.f32 %v2724, %v2725
        %vm2727 = vcmask 253952
        %v2728 = vsel %vm2727, %v2715, 0.0
        %v2729 = vadd.f32 %v2726, %v2728
        %v2730 = vrot.slane %v2729, 4
        %v2731 = vadd.f32 %v2729, %v2730
        %v2732 = vrot.slane %v2731, 2
        %v2733 = vadd.f32 %v2731, %v2732
        %v2734 = vrot.slane %v2733, 1
        %v2735 = vadd.f32 %v2733, %v2734
        %v2736 = vsel %vm561, %v2735, 0.0
        %2737 = vadd.xlane.f32.xlu0 %v2736
        %v2738 = vpop.xlane.xlu0 %2737
        %v2739 = vrcp.pop 1568.0
        %v2740 = vmul.f32 %v2738, %v2739
        %v2741 = vsub.f32 %v2709, %v2740
        %v2742 = vsub.f32 %v2710, %v2740
        %v2743 = vsub.f32 %v2711, %v2740
        %v2744 = vsub.f32 %v2712, %v2740
        %v2745 = vsub.f32 %v2713, %v2740
        %v2746 = vsub.f32 %v2714, %v2740
        %v2747 = vsub.f32 %v2715, %v2740
        %v2748 = vmul.f32 %v2741, %v2741
        %v2749 = vmul.f32 %v2742, %v2742
        %v2750 = vmul.f32 %v2743, %v2743
        %v2751 = vmul.f32 %v2744, %v2744
        %v2752 = vmul.f32 %v2745, %v2745
        %v2753 = vmul.f32 %v2746, %v2746
        %v2754 = vmul.f32 %v2747, %v2747
        %v2755 = vsel %vm561, %v2748, 0.0
        %v2756 = vsel %vm561, %v2749, 0.0
        %v2757 = vadd.f32 %v2755, %v2756
        %v2758 = vsel %vm561, %v2750, 0.0
        %v2759 = vadd.f32 %v2757, %v2758
        %v2760 = vsel %vm561, %v2751, 0.0
        %v2761 = vadd.f32 %v2759, %v2760
        %v2762 = vsel %vm561, %v2752, 0.0
        %v2763 = vadd.f32 %v2761, %v2762
        %v2764 = vsel %vm561, %v2753, 0.0
        %v2765 = vadd.f32 %v2763, %v2764
        %v2766 = vsel %vm2727, %v2754, 0.0
        %v2767 = vadd.f32 %v2765, %v2766
        %v2768 = vrot.slane %v2767, 4
        %v2769 = vadd.f32 %v2767, %v2768
        %v2770 = vrot.slane %v2769, 2
        %v2771 = vadd.f32 %v2769, %v2770
        %v2772 = vrot.slane %v2771, 1
        %v2773 = vadd.f32 %v2771, %v2772
        %v2774 = vsel %vm561, %v2773, 0.0
        %2775 = vadd.xlane.f32.xlu0 %v2774
        %v2776 = vpop.xlane.xlu0 %2775
        %v2777 = vmul.f32 %v2776, %v2739
        %v2778 = vadd.f32 %v2777, 1e-05
        %v2779 = vrsqrt.pop %v2778
        %v2780 = vmul.f32 %v2741, %v2779
        %v2781 = vmul.f32 %v2742, %v2779
        %v2782 = vmul.f32 %v2743, %v2779
        %v2783 = vmul.f32 %v2744, %v2779
        %v2784 = vmul.f32 %v2745, %v2779
        %v2785 = vmul.f32 %v2746, %v2779
        %v2786 = vmul.f32 %v2747, %v2779
        %v2787 = vld [vmem:[%s10] sm:$0xff]
        %v2788 = vld [vmem:[%s10 + $0x8] sm:$0xff]
        %v2789 = vld [vmem:[%s10 + $0x10] sm:$0xff]
        %v2790 = vld [vmem:[%s10 + $0x18] sm:$0xff]
        %v2791 = vld [vmem:[%s10 + $0x20] sm:$0xff]
        %v2792 = vld [vmem:[%s10 + $0x28] sm:$0xff]
        %v2793 = vld [vmem:[%s10 + $0x30] sm:$0x1]
        %v2794 = vmul.f32 %v2780, %v2787
        %v2795 = vmul.f32 %v2781, %v2788
        %v2796 = vmul.f32 %v2782, %v2789
        %v2797 = vmul.f32 %v2783, %v2790
        %v2798 = vmul.f32 %v2784, %v2791
        %v2799 = vmul.f32 %v2785, %v2792
        %v2800 = vmul.f32 %v2786, %v2793
        %v2801 = vld [vmem:[%s11] sm:$0xff]
        %v2802 = vld [vmem:[%s11 + $0x8] sm:$0xff]
        %v2803 = vld [vmem:[%s11 + $0x10] sm:$0xff]
        %v2804 = vld [vmem:[%s11 + $0x18] sm:$0xff]
        %v2805 = vld [vmem:[%s11 + $0x20] sm:$0xff]
        %v2806 = vld [vmem:[%s11 + $0x28] sm:$0xff]
        %v2807 = vld [vmem:[%s11 + $0x30] sm:$0x1]
        %v2808 = vadd.f32 %v2794, %v2801
        %v2809 = vadd.f32 %v2795, %v2802
        %v2810 = vadd.f32 %v2796, %v2803
        %v2811 = vadd.f32 %v2797, %v2804
        %v2812 = vadd.f32 %v2798, %v2805
        %v2813 = vadd.f32 %v2799, %v2806
        %v2814 = vadd.f32 %v2800, %v2807
        %v2815 = vadd.f32 %v2808, %v542
        %v2816 = vadd.f32 %v2809, %v543
        %v2817 = vadd.f32 %v2810, %v544
        %v2818 = vadd.f32 %v2811, %v545
        %v2819 = vadd.f32 %v2812, %v546
        %v2820 = vadd.f32 %v2813, %v547
        %v2821 = vadd.f32 %v2814, %v548
        %v2822 = vld [vmem:[#allocation4] sm:$0xff]
        %v2823 = vld [vmem:[#allocation4 + $0x8] sm:$0xff]
        %v2824 = vld [vmem:[#allocation4 + $0x10] sm:$0xff]
        %v2825 = vld [vmem:[#allocation4 + $0x18] sm:$0xff]
        %v2826 = vld [vmem:[#allocation4 + $0x20] sm:$0xff]
        %v2827 = vld [vmem:[#allocation4 + $0x28] sm:$0xff]
        %v2828 = vld [vmem:[#allocation4 + $0x30] sm:$0x1]
        %vm2829 = vcmask 400384
        %v2831 = vsel %vm2829, %v2822, 0
        %v2834 = vsel %vm2829, %v2823, 0
        %v2837 = vsel %vm2829, %v2824, 0
        %v2840 = vsel %vm2829, %v2825, 0
        %v2843 = vsel %vm2829, %v2826, 0
        %v2846 = vsel %vm2829, %v2827, 0
        %v2849 = vsel %vm2829, %v2828, 0
        %vm2851 = vcmask 1040384
        %v2853 = vsel %vm2851, %v2821, 0
        %2855 = vmatprep.subr.mxu0 0.0
        %2856 = vmatpush1.msra.mxu0 0.0
        %2857 = vmatprep.subr.mxu0 0.0
        %2858 = vmatpush1.msra.mxu0 0.0
        %2859 = vmatprep.subr.mxu0 0.0
        %2860 = vmatpush1.msra.mxu0 0.0
        %2861 = vmatprep.subr.mxu0 0.0
        %2862 = vmatpush1.msra.mxu0 0.0
        %2863 = vmatprep.subr.mxu0 0.0
        %2864 = vmatpush1.msra.mxu0 0.0
        %2865 = vmatprep.subr.mxu0 0.0
        %2866 = vmatpush1.msra.mxu0 0.0
        %2867 = vmatprep.subr.mxu0 0.0
        %2868 = vmatpush1.msra.mxu0 0.0
        %2869 = vmatprep.subr.mxu0 0.0
        %2870 = vmatpush1.msra.mxu0 0.0
        %2871 = vmatprep.subr.mxu0 0.0
        %2872 = vmatpush1.msra.mxu0 0.0
        %2873 = vmatprep.subr.mxu0 0.0
        %2874 = vmatpush1.msra.mxu0 %v2853
        %2875 = vmatprep.subr.mxu0 0.0
        %2876 = vmatpush1.msra.mxu0 %v2820
        %2877 = vmatprep.subr.mxu0 0.0
        %2878 = vmatpush1.msra.mxu0 %v2819
        %2879 = vmatprep.subr.mxu0 0.0
        %2880 = vmatpush1.msra.mxu0 %v2818
        %2881 = vmatprep.subr.mxu0 0.0
        %2882 = vmatpush1.msra.mxu0 %v2817
        %2883 = vmatprep.subr.mxu0 0.0
        %2884 = vmatpush1.msra.mxu0 %v2816
        %2885 = vmatprep.subr.mxu0 0.0
        %2886 = vmatpush1.msra.mxu0 %v2815
        %2887 = vmatprep.subr.mxu0 0.0
        %2888 = vmatpush2.msra.mxu0 0.0
        %2889 = vmatprep.subr.mxu0 0.0
        %2890 = vmatpush2.msra.mxu0 0.0
        %2891 = vmatprep.subr.mxu0 0.0
        %2892 = vmatpush2.msra.mxu0 0.0
        %2893 = vmatprep.subr.mxu0 0.0
        %2894 = vmatpush2.msra.mxu0 0.0
        %2895 = vmatprep.subr.mxu0 0.0
        %2896 = vmatpush2.msra.mxu0 0.0
        %2897 = vmatprep.subr.mxu0 0.0
        %2898 = vmatpush2.msra.mxu0 0.0
        %2899 = vmatprep.subr.mxu0 0.0
        %2900 = vmatpush2.msra.mxu0 0.0
        %2901 = vmatprep.subr.mxu0 0.0
        %2902 = vmatpush2.msra.mxu0 0.0
        %2903 = vmatprep.subr.mxu0 0.0
        %2904 = vmatpush2.msra.mxu0 0.0
        %2905 = vmatprep.subr.mxu0 0.0
        %2906 = vmatpush2.msra.mxu0 0.0
        %2907 = vmatprep.subr.mxu0 0.0
        %2908 = vmatpush2.msra.mxu0 0.0
        %2909 = vmatprep.subr.mxu0 0.0
        %2910 = vmatpush2.msra.mxu0 0.0
        %2911 = vmatprep.subr.mxu0 0.0
        %2912 = vmatpush2.msra.mxu0 0.0
        %2913 = vmatprep.subr.mxu0 0.0
        %2914 = vmatpush2.msra.mxu0 0.0
        %2915 = vmatprep.subr.mxu0 0.0
        %2916 = vmatpush2.msra.mxu0 0.0
        %2917 = vmatprep.subr.mxu0 0.0
        %2918 = vmatpush2.msra.mxu0 0.0
        %2919 = vmatprep.mubr.f32.mxu0 0.0
        %2920 = vmatmul.mubr.f32.gmra.mxu0 %v2831
        %v2921 = vpop.f32.mrf.mxu0
        %v2922 = vadd.f32 0.0, %v2921
        %v2923 = vpop.f32.mrf.mxu0
        %2924 = vmatprep.mubr.f32.mxu0 0.0
        %2925 = vmatmul.mubr.f32.gmra.mxu0 %v2834
        %v2926 = vpop.f32.mrf.mxu0
        %v2927 = vadd.f32 0.0, %v2926
        %v2928 = vpop.f32.mrf.mxu0
        %2929 = vmatprep.mubr.f32.mxu0 0.0
        %2930 = vmatmul.mubr.f32.gmra.mxu0 %v2837
        %v2931 = vpop.f32.mrf.mxu0
        %v2932 = vadd.f32 0.0, %v2931
        %v2933 = vpop.f32.mrf.mxu0
        %2934 = vmatprep.mubr.f32.mxu0 0.0
        %2935 = vmatmul.mubr.f32.gmra.mxu0 %v2840
        %v2936 = vpop.f32.mrf.mxu0
        %v2937 = vadd.f32 0.0, %v2936
        %v2938 = vpop.f32.mrf.mxu0
        %2939 = vmatprep.mubr.f32.mxu0 0.0
        %2940 = vmatmul.mubr.f32.gmra.mxu0 %v2843
        %v2941 = vpop.f32.mrf.mxu0
        %v2942 = vadd.f32 0.0, %v2941
        %v2943 = vpop.f32.mrf.mxu0
        %2944 = vmatprep.mubr.f32.mxu0 0.0
        %2945 = vmatmul.mubr.f32.gmra.mxu0 %v2846
        %v2946 = vpop.f32.mrf.mxu0
        %v2947 = vadd.f32 0.0, %v2946
        %v2948 = vpop.f32.mrf.mxu0
        %2949 = vmatprep.mubr.f32.mxu0 0.0
        %2950 = vmatmul.mubr.f32.gmra.mxu0 %v2849
        %v2951 = vpop.f32.mrf.mxu0
        %v2952 = vadd.f32 0.0, %v2951
        %v2953 = vpop.f32.mrf.mxu0
        %2954 = vdwg.mxu0
        %v2955 = vld [vmem:[%s13] sm:$0xff]
        %v2956 = vld [vmem:[%s13 + $0x8] sm:$0xff]
        %v2957 = vld [vmem:[%s13 + $0x10] sm:$0xff]
        %v2958 = vld [vmem:[%s13 + $0x18] sm:$0xff]
        %s2959 = scalar_lea.vmem [#allocation4], 56
        %v2960 = vld [vmem:[%s2959] sm:$0xff]
        %v2961 = vld [vmem:[%s2959 + $0x8] sm:$0xff]
        %v2962 = vld [vmem:[%s2959 + $0x10] sm:$0xff]
        %v2963 = vld [vmem:[%s2959 + $0x18] sm:$0xff]
        %v2964 = vld [vmem:[%s2959 + $0x20] sm:$0xff]
        %v2965 = vld [vmem:[%s2959 + $0x28] sm:$0xff]
        %v2966 = vld [vmem:[%s2959 + $0x30] sm:$0x1]
        %v2968 = vsel %vm2829, %v2960, 0
        %v2971 = vsel %vm2829, %v2961, 0
        %v2974 = vsel %vm2829, %v2962, 0
        %v2977 = vsel %vm2829, %v2963, 0
        %v2980 = vsel %vm2829, %v2964, 0
        %v2983 = vsel %vm2829, %v2965, 0
        %v2986 = vsel %vm2829, %v2966, 0
        %2988 = vmatprep.subr.mxu0 0.0
        %2989 = vmatpush1.msra.mxu0 0.0
        %2990 = vmatprep.subr.mxu0 0.0
        %2991 = vmatpush1.msra.mxu0 0.0
        %2992 = vmatprep.subr.mxu0 0.0
        %2993 = vmatpush1.msra.mxu0 0.0
        %2994 = vmatprep.subr.mxu0 0.0
        %2995 = vmatpush1.msra.mxu0 0.0
        %2996 = vmatprep.subr.mxu0 0.0
        %2997 = vmatpush1.msra.mxu0 0.0
        %2998 = vmatprep.subr.mxu0 0.0
        %2999 = vmatpush1.msra.mxu0 0.0
        %3000 = vmatprep.subr.mxu0 0.0
        %3001 = vmatpush1.msra.mxu0 0.0
        %3002 = vmatprep.subr.mxu0 0.0
        %3003 = vmatpush1.msra.mxu0 0.0
        %3004 = vmatprep.subr.mxu0 0.0
        %3005 = vmatpush1.msra.mxu0 0.0
        %3006 = vmatprep.subr.mxu0 0.0
        %3007 = vmatpush1.msra.mxu0 %v2853
        %3008 = vmatprep.subr.mxu0 0.0
        %3009 = vmatpush1.msra.mxu0 %v2820
        %3010 = vmatprep.subr.mxu0 0.0
        %3011 = vmatpush1.msra.mxu0 %v2819
        %3012 = vmatprep.subr.mxu0 0.0
        %3013 = vmatpush1.msra.mxu0 %v2818
        %3014 = vmatprep.subr.mxu0 0.0
        %3015 = vmatpush1.msra.mxu0 %v2817
        %3016 = vmatprep.subr.mxu0 0.0
        %3017 = vmatpush1.msra.mxu0 %v2816
        %3018 = vmatprep.subr.mxu0 0.0
        %3019 = vmatpush1.msra.mxu0 %v2815
        %3020 = vmatprep.subr.mxu0 0.0
        %3021 = vmatpush2.msra.mxu0 0.0
        %3022 = vmatprep.subr.mxu0 0.0
        %3023 = vmatpush2.msra.mxu0 0.0
        %3024 = vmatprep.subr.mxu0 0.0
        %3025 = vmatpush2.msra.mxu0 0.0
        %3026 = vmatprep.subr.mxu0 0.0
        %3027 = vmatpush2.msra.mxu0 0.0
        %3028 = vmatprep.subr.mxu0 0.0
        %3029 = vmatpush2.msra.mxu0 0.0
        %3030 = vmatprep.subr.mxu0 0.0
        %3031 = vmatpush2.msra.mxu0 0.0
        %3032 = vmatprep.subr.mxu0 0.0
        %3033 = vmatpush2.msra.mxu0 0.0
        %3034 = vmatprep.subr.mxu0 0.0
        %3035 = vmatpush2.msra.mxu0 0.0
        %3036 = vmatprep.subr.mxu0 0.0
        %3037 = vmatpush2.msra.mxu0 0.0
        %3038 = vmatprep.subr.mxu0 0.0
        %3039 = vmatpush2.msra.mxu0 0.0
        %3040 = vmatprep.subr.mxu0 0.0
        %3041 = vmatpush2.msra.mxu0 0.0
        %3042 = vmatprep.subr.mxu0 0.0
        %3043 = vmatpush2.msra.mxu0 0.0
        %3044 = vmatprep.subr.mxu0 0.0
        %3045 = vmatpush2.msra.mxu0 0.0
        %3046 = vmatprep.subr.mxu0 0.0
        %3047 = vmatpush2.msra.mxu0 0.0
        %3048 = vmatprep.subr.mxu0 0.0
        %3049 = vmatpush2.msra.mxu0 0.0
        %3050 = vmatprep.subr.mxu0 0.0
        %3051 = vmatpush2.msra.mxu0 0.0
        %3052 = vmatprep.mubr.f32.mxu0 0.0
        %3053 = vmatmul.mubr.f32.gmra.mxu0 %v2968
        %v3054 = vpop.f32.mrf.mxu0
        %v3055 = vadd.f32 0.0, %v3054
        %v3056 = vpop.f32.mrf.mxu0
        %3057 = vmatprep.mubr.f32.mxu0 0.0
        %3058 = vmatmul.mubr.f32.gmra.mxu0 %v2971
        %v3059 = vpop.f32.mrf.mxu0
        %v3060 = vadd.f32 0.0, %v3059
        %v3061 = vpop.f32.mrf.mxu0
        %3062 = vmatprep.mubr.f32.mxu0 0.0
        %3063 = vmatmul.mubr.f32.gmra.mxu0 %v2974
        %v3064 = vpop.f32.mrf.mxu0
        %v3065 = vadd.f32 0.0, %v3064
        %v3066 = vpop.f32.mrf.mxu0
        %3067 = vmatprep.mubr.f32.mxu0 0.0
        %3068 = vmatmul.mubr.f32.gmra.mxu0 %v2977
        %v3069 = vpop.f32.mrf.mxu0
        %v3070 = vadd.f32 0.0, %v3069
        %v3071 = vpop.f32.mrf.mxu0
        %3072 = vmatprep.mubr.f32.mxu0 0.0
        %3073 = vmatmul.mubr.f32.gmra.mxu0 %v2980
        %v3074 = vpop.f32.mrf.mxu0
        %v3075 = vadd.f32 0.0, %v3074
        %v3076 = vpop.f32.mrf.mxu0
        %3077 = vmatprep.mubr.f32.mxu0 0.0
        %3078 = vmatmul.mubr.f32.gmra.mxu0 %v2983
        %v3079 = vpop.f32.mrf.mxu0
        %v3080 = vadd.f32 0.0, %v3079
        %v3081 = vpop.f32.mrf.mxu0
        %3082 = vmatprep.mubr.f32.mxu0 0.0
        %3083 = vmatmul.mubr.f32.gmra.mxu0 %v2986
        %v3084 = vpop.f32.mrf.mxu0
        %v3085 = vadd.f32 0.0, %v3084
        %v3086 = vpop.f32.mrf.mxu0
        %3087 = vdwg.mxu0
        %s3088 = scalar_lea.vmem %s13, 32
        %v3089 = vld [vmem:[%s3088] sm:$0xff]
        %v3090 = vld [vmem:[%s3088 + $0x8] sm:$0xff]
        %v3091 = vld [vmem:[%s3088 + $0x10] sm:$0xff]
        %v3092 = vld [vmem:[%s3088 + $0x18] sm:$0xff]
        %v3094 = vsel %vm561, %v3055, 0
        %v3097 = vsel %vm561, %v3060, 0
        %v3100 = vsel %vm561, %v3065, 0
        %v3103 = vsel %vm561, %v3070, 0
        %v3106 = vsel %vm561, %v3075, 0
        %v3109 = vsel %vm561, %v3080, 0
        %v3112 = vsel %vm561, %v3085, 0
        %3114 = vmatprep.subr.mxu0 0.0
        %3115 = vmatpush1.msra.mxu0 0.0
        %3116 = vmatprep.subr.mxu0 0.0
        %3117 = vmatpush1.msra.mxu0 0.0
        %3118 = vmatprep.subr.mxu0 0.0
        %3119 = vmatpush1.msra.mxu0 0.0
        %3120 = vmatprep.subr.mxu0 0.0
        %3121 = vmatpush1.msra.mxu0 0.0
        %3122 = vmatprep.subr.mxu0 0.0
        %3123 = vmatpush1.msra.mxu0 0.0
        %3124 = vmatprep.subr.mxu0 0.0
        %3125 = vmatpush1.msra.mxu0 0.0
        %3126 = vmatprep.subr.mxu0 0.0
        %3127 = vmatpush1.msra.mxu0 0.0
        %3128 = vmatprep.subr.mxu0 0.0
        %3129 = vmatpush1.msra.mxu0 0.0
        %3130 = vmatprep.subr.mxu0 0.0
        %3131 = vmatpush1.msra.mxu0 0.0
        %3132 = vmatprep.subr.mxu0 0.0
        %3133 = vmatpush1.msra.mxu0 0.0
        %3134 = vmatprep.subr.mxu0 0.0
        %3135 = vmatpush1.msra.mxu0 0.0
        %3136 = vmatprep.subr.mxu0 0.0
        %3137 = vmatpush1.msra.mxu0 0.0
        %3138 = vmatprep.subr.mxu0 0.0
        %3139 = vmatpush1.msra.mxu0 %v3092
        %3140 = vmatprep.subr.mxu0 0.0
        %3141 = vmatpush1.msra.mxu0 %v3091
        %3142 = vmatprep.subr.mxu0 0.0
        %3143 = vmatpush1.msra.mxu0 %v3090
        %3144 = vmatprep.subr.mxu0 0.0
        %3145 = vmatpush1.msra.mxu0 %v3089
        %3146 = vmatprep.subr.mxu0 0.0
        %3147 = vmatpush2.msra.mxu0 0.0
        %3148 = vmatprep.subr.mxu0 0.0
        %3149 = vmatpush2.msra.mxu0 0.0
        %3150 = vmatprep.subr.mxu0 0.0
        %3151 = vmatpush2.msra.mxu0 0.0
        %3152 = vmatprep.subr.mxu0 0.0
        %3153 = vmatpush2.msra.mxu0 0.0
        %3154 = vmatprep.subr.mxu0 0.0
        %3155 = vmatpush2.msra.mxu0 0.0
        %3156 = vmatprep.subr.mxu0 0.0
        %3157 = vmatpush2.msra.mxu0 0.0
        %3158 = vmatprep.subr.mxu0 0.0
        %3159 = vmatpush2.msra.mxu0 0.0
        %3160 = vmatprep.subr.mxu0 0.0
        %3161 = vmatpush2.msra.mxu0 0.0
        %3162 = vmatprep.subr.mxu0 0.0
        %3163 = vmatpush2.msra.mxu0 0.0
        %3164 = vmatprep.subr.mxu0 0.0
        %3165 = vmatpush2.msra.mxu0 0.0
        %3166 = vmatprep.subr.mxu0 0.0
        %3167 = vmatpush2.msra.mxu0 0.0
        %3168 = vmatprep.subr.mxu0 0.0
        %3169 = vmatpush2.msra.mxu0 0.0
        %3170 = vmatprep.subr.mxu0 0.0
        %3171 = vmatpush2.msra.mxu0 0.0
        %3172 = vmatprep.subr.mxu0 0.0
        %3173 = vmatpush2.msra.mxu0 0.0
        %3174 = vmatprep.subr.mxu0 0.0
        %3175 = vmatpush2.msra.mxu0 0.0
        %3176 = vmatprep.subr.mxu0 0.0
        %3177 = vmatpush2.msra.mxu0 0.0
        %3178 = vmatprep.mubr.f32.mxu0 0.0
        %3179 = vmatmul.mubr.f32.gmra.mxu0 %v3094
        %v3180 = vpop.f32.mrf.mxu0
        %v3181 = vadd.f32 0.0, %v3180
        %v3182 = vpop.f32.mrf.mxu0
        %3183 = vmatprep.mubr.f32.mxu0 0.0
        %3184 = vmatmul.mubr.f32.gmra.mxu0 %v3097
        %v3185 = vpop.f32.mrf.mxu0
        %v3186 = vadd.f32 0.0, %v3185
        %v3187 = vpop.f32.mrf.mxu0
        %3188 = vmatprep.mubr.f32.mxu0 0.0
        %3189 = vmatmul.mubr.f32.gmra.mxu0 %v3100
        %v3190 = vpop.f32.mrf.mxu0
        %v3191 = vadd.f32 0.0, %v3190
        %v3192 = vpop.f32.mrf.mxu0
        %3193 = vmatprep.mubr.f32.mxu0 0.0
        %3194 = vmatmul.mubr.f32.gmra.mxu0 %v3103
        %v3195 = vpop.f32.mrf.mxu0
        %v3196 = vadd.f32 0.0, %v3195
        %v3197 = vpop.f32.mrf.mxu0
        %3198 = vmatprep.mubr.f32.mxu0 0.0
        %3199 = vmatmul.mubr.f32.gmra.mxu0 %v3106
        %v3200 = vpop.f32.mrf.mxu0
        %v3201 = vadd.f32 0.0, %v3200
        %v3202 = vpop.f32.mrf.mxu0
        %3203 = vmatprep.mubr.f32.mxu0 0.0
        %3204 = vmatmul.mubr.f32.gmra.mxu0 %v3109
        %v3205 = vpop.f32.mrf.mxu0
        %v3206 = vadd.f32 0.0, %v3205
        %v3207 = vpop.f32.mrf.mxu0
        %3208 = vmatprep.mubr.f32.mxu0 0.0
        %3209 = vmatmul.mubr.f32.gmra.mxu0 %v3112
        %v3210 = vpop.f32.mrf.mxu0
        %v3211 = vadd.f32 0.0, %v3210
        %v3212 = vpop.f32.mrf.mxu0
        %3213 = vdwg.mxu0
        %v3215 = vsel %vm561, %v2922, 0
        %v3218 = vsel %vm561, %v2927, 0
        %v3221 = vsel %vm561, %v2932, 0
        %v3224 = vsel %vm561, %v2937, 0
        %v3227 = vsel %vm561, %v2942, 0
        %v3230 = vsel %vm561, %v2947, 0
        %v3233 = vsel %vm561, %v2952, 0
        %3235 = vmatprep.subr.mxu0 0.0
        %3236 = vmatpush1.msra.mxu0 0.0
        %3237 = vmatprep.subr.mxu0 0.0
        %3238 = vmatpush1.msra.mxu0 0.0
        %3239 = vmatprep.subr.mxu0 0.0
        %3240 = vmatpush1.msra.mxu0 0.0
        %3241 = vmatprep.subr.mxu0 0.0
        %3242 = vmatpush1.msra.mxu0 0.0
        %3243 = vmatprep.subr.mxu0 0.0
        %3244 = vmatpush1.msra.mxu0 0.0
        %3245 = vmatprep.subr.mxu0 0.0
        %3246 = vmatpush1.msra.mxu0 0.0
        %3247 = vmatprep.subr.mxu0 0.0
        %3248 = vmatpush1.msra.mxu0 0.0
        %3249 = vmatprep.subr.mxu0 0.0
        %3250 = vmatpush1.msra.mxu0 0.0
        %3251 = vmatprep.subr.mxu0 0.0
        %3252 = vmatpush1.msra.mxu0 0.0
        %3253 = vmatprep.subr.mxu0 0.0
        %3254 = vmatpush1.msra.mxu0 0.0
        %3255 = vmatprep.subr.mxu0 0.0
        %3256 = vmatpush1.msra.mxu0 0.0
        %3257 = vmatprep.subr.mxu0 0.0
        %3258 = vmatpush1.msra.mxu0 0.0
        %3259 = vmatprep.subr.mxu0 0.0
        %3260 = vmatpush1.msra.mxu0 %v2958
        %3261 = vmatprep.subr.mxu0 0.0
        %3262 = vmatpush1.msra.mxu0 %v2957
        %3263 = vmatprep.subr.mxu0 0.0
        %3264 = vmatpush1.msra.mxu0 %v2956
        %3265 = vmatprep.subr.mxu0 0.0
        %3266 = vmatpush1.msra.mxu0 %v2955
        %3267 = vmatprep.subr.mxu0 0.0
        %3268 = vmatpush2.msra.mxu0 0.0
        %3269 = vmatprep.subr.mxu0 0.0
        %3270 = vmatpush2.msra.mxu0 0.0
        %3271 = vmatprep.subr.mxu0 0.0
        %3272 = vmatpush2.msra.mxu0 0.0
        %3273 = vmatprep.subr.mxu0 0.0
        %3274 = vmatpush2.msra.mxu0 0.0
        %3275 = vmatprep.subr.mxu0 0.0
        %3276 = vmatpush2.msra.mxu0 0.0
        %3277 = vmatprep.subr.mxu0 0.0
        %3278 = vmatpush2.msra.mxu0 0.0
        %3279 = vmatprep.subr.mxu0 0.0
        %3280 = vmatpush2.msra.mxu0 0.0
        %3281 = vmatprep.subr.mxu0 0.0
        %3282 = vmatpush2.msra.mxu0 0.0
        %3283 = vmatprep.subr.mxu0 0.0
        %3284 = vmatpush2.msra.mxu0 0.0
        %3285 = vmatprep.subr.mxu0 0.0
        %3286 = vmatpush2.msra.mxu0 0.0
        %3287 = vmatprep.subr.mxu0 0.0
        %3288 = vmatpush2.msra.mxu0 0.0
        %3289 = vmatprep.subr.mxu0 0.0
        %3290 = vmatpush2.msra.mxu0 0.0
        %3291 = vmatprep.subr.mxu0 0.0
        %3292 = vmatpush2.msra.mxu0 0.0
        %3293 = vmatprep.subr.mxu0 0.0
        %3294 = vmatpush2.msra.mxu0 0.0
        %3295 = vmatprep.subr.mxu0 0.0
        %3296 = vmatpush2.msra.mxu0 0.0
        %3297 = vmatprep.subr.mxu0 0.0
        %3298 = vmatpush2.msra.mxu0 0.0
        %3299 = vmatprep.mubr.f32.mxu0 0.0
        %3300 = vmatmul.mubr.f32.gmra.mxu0 %v3215
        %v3301 = vpop.f32.mrf.mxu0
        %v3302 = vadd.f32 %v3181, %v3301
        %v3303 = vpop.f32.mrf.mxu0
        %3304 = vmatprep.mubr.f32.mxu0 0.0
        %3305 = vmatmul.mubr.f32.gmra.mxu0 %v3218
        %v3306 = vpop.f32.mrf.mxu0
        %v3307 = vadd.f32 %v3186, %v3306
        %v3308 = vpop.f32.mrf.mxu0
        %3309 = vmatprep.mubr.f32.mxu0 0.0
        %3310 = vmatmul.mubr.f32.gmra.mxu0 %v3221
        %v3311 = vpop.f32.mrf.mxu0
        %v3312 = vadd.f32 %v3191, %v3311
        %v3313 = vpop.f32.mrf.mxu0
        %3314 = vmatprep.mubr.f32.mxu0 0.0
        %3315 = vmatmul.mubr.f32.gmra.mxu0 %v3224
        %v3316 = vpop.f32.mrf.mxu0
        %v3317 = vadd.f32 %v3196, %v3316
        %v3318 = vpop.f32.mrf.mxu0
        %3319 = vmatprep.mubr.f32.mxu0 0.0
        %3320 = vmatmul.mubr.f32.gmra.mxu0 %v3227
        %v3321 = vpop.f32.mrf.mxu0
        %v3322 = vadd.f32 %v3201, %v3321
        %v3323 = vpop.f32.mrf.mxu0
        %3324 = vmatprep.mubr.f32.mxu0 0.0
        %3325 = vmatmul.mubr.f32.gmra.mxu0 %v3230
        %v3326 = vpop.f32.mrf.mxu0
        %v3327 = vadd.f32 %v3206, %v3326
        %v3328 = vpop.f32.mrf.mxu0
        %3329 = vmatprep.mubr.f32.mxu0 0.0
        %3330 = vmatmul.mubr.f32.gmra.mxu0 %v3233
        %v3331 = vpop.f32.mrf.mxu0
        %v3332 = vadd.f32 %v3211, %v3331
        %v3333 = vpop.f32.mrf.mxu0
        %3334 = vdwg.mxu0
        %s3335 = scalar_lea.vmem [#allocation4], 112
        %v3336 = vld [vmem:[%s3335] sm:$0xff]
        %v3337 = vld [vmem:[%s3335 + $0x8] sm:$0xff]
        %v3338 = vld [vmem:[%s3335 + $0x10] sm:$0xff]
        %v3339 = vld [vmem:[%s3335 + $0x18] sm:$0xff]
        %v3340 = vld [vmem:[%s3335 + $0x20] sm:$0xff]
        %v3341 = vld [vmem:[%s3335 + $0x28] sm:$0xff]
        %v3342 = vld [vmem:[%s3335 + $0x30] sm:$0x1]
        %v3344 = vsel %vm2829, %v3336, 0
        %v3347 = vsel %vm2829, %v3337, 0
        %v3350 = vsel %vm2829, %v3338, 0
        %v3353 = vsel %vm2829, %v3339, 0
        %v3356 = vsel %vm2829, %v3340, 0
        %v3359 = vsel %vm2829, %v3341, 0
        %v3362 = vsel %vm2829, %v3342, 0
        %3364 = vmatprep.subr.mxu0 0.0
        %3365 = vmatpush1.msra.mxu0 0.0
        %3366 = vmatprep.subr.mxu0 0.0
        %3367 = vmatpush1.msra.mxu0 0.0
        %3368 = vmatprep.subr.mxu0 0.0
        %3369 = vmatpush1.msra.mxu0 0.0
        %3370 = vmatprep.subr.mxu0 0.0
        %3371 = vmatpush1.msra.mxu0 0.0
        %3372 = vmatprep.subr.mxu0 0.0
        %3373 = vmatpush1.msra.mxu0 0.0
        %3374 = vmatprep.subr.mxu0 0.0
        %3375 = vmatpush1.msra.mxu0 0.0
        %3376 = vmatprep.subr.mxu0 0.0
        %3377 = vmatpush1.msra.mxu0 0.0
        %3378 = vmatprep.subr.mxu0 0.0
        %3379 = vmatpush1.msra.mxu0 0.0
        %3380 = vmatprep.subr.mxu0 0.0
        %3381 = vmatpush1.msra.mxu0 0.0
        %3382 = vmatprep.subr.mxu0 0.0
        %3383 = vmatpush1.msra.mxu0 %v2853
        %3384 = vmatprep.subr.mxu0 0.0
        %3385 = vmatpush1.msra.mxu0 %v2820
        %3386 = vmatprep.subr.mxu0 0.0
        %3387 = vmatpush1.msra.mxu0 %v2819
        %3388 = vmatprep.subr.mxu0 0.0
        %3389 = vmatpush1.msra.mxu0 %v2818
        %3390 = vmatprep.subr.mxu0 0.0
        %3391 = vmatpush1.msra.mxu0 %v2817
        %3392 = vmatprep.subr.mxu0 0.0
        %3393 = vmatpush1.msra.mxu0 %v2816
        %3394 = vmatprep.subr.mxu0 0.0
        %3395 = vmatpush1.msra.mxu0 %v2815
        %3396 = vmatprep.subr.mxu0 0.0
        %3397 = vmatpush2.msra.mxu0 0.0
        %3398 = vmatprep.subr.mxu0 0.0
        %3399 = vmatpush2.msra.mxu0 0.0
        %3400 = vmatprep.subr.mxu0 0.0
        %3401 = vmatpush2.msra.mxu0 0.0
        %3402 = vmatprep.subr.mxu0 0.0
        %3403 = vmatpush2.msra.mxu0 0.0
        %3404 = vmatprep.subr.mxu0 0.0
        %3405 = vmatpush2.msra.mxu0 0.0
        %3406 = vmatprep.subr.mxu0 0.0
        %3407 = vmatpush2.msra.mxu0 0.0
        %3408 = vmatprep.subr.mxu0 0.0
        %3409 = vmatpush2.msra.mxu0 0.0
        %3410 = vmatprep.subr.mxu0 0.0
        %3411 = vmatpush2.msra.mxu0 0.0
        %3412 = vmatprep.subr.mxu0 0.0
        %3413 = vmatpush2.msra.mxu0 0.0
        %3414 = vmatprep.subr.mxu0 0.0
        %3415 = vmatpush2.msra.mxu0 0.0
        %3416 = vmatprep.subr.mxu0 0.0
        %3417 = vmatpush2.msra.mxu0 0.0
        %3418 = vmatprep.subr.mxu0 0.0
        %3419 = vmatpush2.msra.mxu0 0.0
        %3420 = vmatprep.subr.mxu0 0.0
        %3421 = vmatpush2.msra.mxu0 0.0
        %3422 = vmatprep.subr.mxu0 0.0
        %3423 = vmatpush2.msra.mxu0 0.0
        %3424 = vmatprep.subr.mxu0 0.0
        %3425 = vmatpush2.msra.mxu0 0.0
        %3426 = vmatprep.subr.mxu0 0.0
        %3427 = vmatpush2.msra.mxu0 0.0
        %3428 = vmatprep.mubr.f32.mxu0 0.0
        %3429 = vmatmul.mubr.f32.gmra.mxu0 %v3344
        %v3430 = vpop.f32.mrf.mxu0
        %v3431 = vadd.f32 0.0, %v3430
        %v3432 = vpop.f32.mrf.mxu0
        %3433 = vmatprep.mubr.f32.mxu0 0.0
        %3434 = vmatmul.mubr.f32.gmra.mxu0 %v3347
        %v3435 = vpop.f32.mrf.mxu0
        %v3436 = vadd.f32 0.0, %v3435
        %v3437 = vpop.f32.mrf.mxu0
        %3438 = vmatprep.mubr.f32.mxu0 0.0
        %3439 = vmatmul.mubr.f32.gmra.mxu0 %v3350
        %v3440 = vpop.f32.mrf.mxu0
        %v3441 = vadd.f32 0.0, %v3440
        %v3442 = vpop.f32.mrf.mxu0
        %3443 = vmatprep.mubr.f32.mxu0 0.0
        %3444 = vmatmul.mubr.f32.gmra.mxu0 %v3353
        %v3445 = vpop.f32.mrf.mxu0
        %v3446 = vadd.f32 0.0, %v3445
        %v3447 = vpop.f32.mrf.mxu0
        %3448 = vmatprep.mubr.f32.mxu0 0.0
        %3449 = vmatmul.mubr.f32.gmra.mxu0 %v3356
        %v3450 = vpop.f32.mrf.mxu0
        %v3451 = vadd.f32 0.0, %v3450
        %v3452 = vpop.f32.mrf.mxu0
        %3453 = vmatprep.mubr.f32.mxu0 0.0
        %3454 = vmatmul.mubr.f32.gmra.mxu0 %v3359
        %v3455 = vpop.f32.mrf.mxu0
        %v3456 = vadd.f32 0.0, %v3455
        %v3457 = vpop.f32.mrf.mxu0
        %3458 = vmatprep.mubr.f32.mxu0 0.0
        %3459 = vmatmul.mubr.f32.gmra.mxu0 %v3362
        %v3460 = vpop.f32.mrf.mxu0
        %v3461 = vadd.f32 0.0, %v3460
        %v3462 = vpop.f32.mrf.mxu0
        %3463 = vdwg.mxu0
        %s3464 = scalar_lea.vmem %s13, 64
        %v3465 = vld [vmem:[%s3464] sm:$0xff]
        %v3466 = vld [vmem:[%s3464 + $0x8] sm:$0xff]
        %v3467 = vld [vmem:[%s3464 + $0x10] sm:$0xff]
        %v3468 = vld [vmem:[%s3464 + $0x18] sm:$0xff]
        %v3470 = vsel %vm561, %v3431, 0
        %v3473 = vsel %vm561, %v3436, 0
        %v3476 = vsel %vm561, %v3441, 0
        %v3479 = vsel %vm561, %v3446, 0
        %v3482 = vsel %vm561, %v3451, 0
        %v3485 = vsel %vm561, %v3456, 0
        %v3488 = vsel %vm561, %v3461, 0
        %3490 = vmatprep.subr.mxu0 0.0
        %3491 = vmatpush1.msra.mxu0 0.0
        %3492 = vmatprep.subr.mxu0 0.0
        %3493 = vmatpush1.msra.mxu0 0.0
        %3494 = vmatprep.subr.mxu0 0.0
        %3495 = vmatpush1.msra.mxu0 0.0
        %3496 = vmatprep.subr.mxu0 0.0
        %3497 = vmatpush1.msra.mxu0 0.0
        %3498 = vmatprep.subr.mxu0 0.0
        %3499 = vmatpush1.msra.mxu0 0.0
        %3500 = vmatprep.subr.mxu0 0.0
        %3501 = vmatpush1.msra.mxu0 0.0
        %3502 = vmatprep.subr.mxu0 0.0
        %3503 = vmatpush1.msra.mxu0 0.0
        %3504 = vmatprep.subr.mxu0 0.0
        %3505 = vmatpush1.msra.mxu0 0.0
        %3506 = vmatprep.subr.mxu0 0.0
        %3507 = vmatpush1.msra.mxu0 0.0
        %3508 = vmatprep.subr.mxu0 0.0
        %3509 = vmatpush1.msra.mxu0 0.0
        %3510 = vmatprep.subr.mxu0 0.0
        %3511 = vmatpush1.msra.mxu0 0.0
        %3512 = vmatprep.subr.mxu0 0.0
        %3513 = vmatpush1.msra.mxu0 0.0
        %3514 = vmatprep.subr.mxu0 0.0
        %3515 = vmatpush1.msra.mxu0 %v3468
        %3516 = vmatprep.subr.mxu0 0.0
        %3517 = vmatpush1.msra.mxu0 %v3467
        %3518 = vmatprep.subr.mxu0 0.0
        %3519 = vmatpush1.msra.mxu0 %v3466
        %3520 = vmatprep.subr.mxu0 0.0
        %3521 = vmatpush1.msra.mxu0 %v3465
        %3522 = vmatprep.subr.mxu0 0.0
        %3523 = vmatpush2.msra.mxu0 0.0
        %3524 = vmatprep.subr.mxu0 0.0
        %3525 = vmatpush2.msra.mxu0 0.0
        %3526 = vmatprep.subr.mxu0 0.0
        %3527 = vmatpush2.msra.mxu0 0.0
        %3528 = vmatprep.subr.mxu0 0.0
        %3529 = vmatpush2.msra.mxu0 0.0
        %3530 = vmatprep.subr.mxu0 0.0
        %3531 = vmatpush2.msra.mxu0 0.0
        %3532 = vmatprep.subr.mxu0 0.0
        %3533 = vmatpush2.msra.mxu0 0.0
        %3534 = vmatprep.subr.mxu0 0.0
        %3535 = vmatpush2.msra.mxu0 0.0
        %3536 = vmatprep.subr.mxu0 0.0
        %3537 = vmatpush2.msra.mxu0 0.0
        %3538 = vmatprep.subr.mxu0 0.0
        %3539 = vmatpush2.msra.mxu0 0.0
        %3540 = vmatprep.subr.mxu0 0.0
        %3541 = vmatpush2.msra.mxu0 0.0
        %3542 = vmatprep.subr.mxu0 0.0
        %3543 = vmatpush2.msra.mxu0 0.0
        %3544 = vmatprep.subr.mxu0 0.0
        %3545 = vmatpush2.msra.mxu0 0.0
        %3546 = vmatprep.subr.mxu0 0.0
        %3547 = vmatpush2.msra.mxu0 0.0
        %3548 = vmatprep.subr.mxu0 0.0
        %3549 = vmatpush2.msra.mxu0 0.0
        %3550 = vmatprep.subr.mxu0 0.0
        %3551 = vmatpush2.msra.mxu0 0.0
        %3552 = vmatprep.subr.mxu0 0.0
        %3553 = vmatpush2.msra.mxu0 0.0
        %3554 = vmatprep.mubr.f32.mxu0 0.0
        %3555 = vmatmul.mubr.f32.gmra.mxu0 %v3470
        %v3556 = vpop.f32.mrf.mxu0
        %v3557 = vadd.f32 0.0, %v3556
        %v3558 = vpop.f32.mrf.mxu0
        %3559 = vmatprep.mubr.f32.mxu0 0.0
        %3560 = vmatmul.mubr.f32.gmra.mxu0 %v3473
        %v3561 = vpop.f32.mrf.mxu0
        %v3562 = vadd.f32 0.0, %v3561
        %v3563 = vpop.f32.mrf.mxu0
        %3564 = vmatprep.mubr.f32.mxu0 0.0
        %3565 = vmatmul.mubr.f32.gmra.mxu0 %v3476
        %v3566 = vpop.f32.mrf.mxu0
        %v3567 = vadd.f32 0.0, %v3566
        %v3568 = vpop.f32.mrf.mxu0
        %3569 = vmatprep.mubr.f32.mxu0 0.0
        %3570 = vmatmul.mubr.f32.gmra.mxu0 %v3479
        %v3571 = vpop.f32.mrf.mxu0
        %v3572 = vadd.f32 0.0, %v3571
        %v3573 = vpop.f32.mrf.mxu0
        %3574 = vmatprep.mubr.f32.mxu0 0.0
        %3575 = vmatmul.mubr.f32.gmra.mxu0 %v3482
        %v3576 = vpop.f32.mrf.mxu0
        %v3577 = vadd.f32 0.0, %v3576
        %v3578 = vpop.f32.mrf.mxu0
        %3579 = vmatprep.mubr.f32.mxu0 0.0
        %3580 = vmatmul.mubr.f32.gmra.mxu0 %v3485
        %v3581 = vpop.f32.mrf.mxu0
        %v3582 = vadd.f32 0.0, %v3581
        %v3583 = vpop.f32.mrf.mxu0
        %3584 = vmatprep.mubr.f32.mxu0 0.0
        %3585 = vmatmul.mubr.f32.gmra.mxu0 %v3488
        %v3586 = vpop.f32.mrf.mxu0
        %v3587 = vadd.f32 0.0, %v3586
        %v3588 = vpop.f32.mrf.mxu0
        %3589 = vdwg.mxu0
        %v3590 = vadd.f32 %v3302, %v3557
        %v3591 = vadd.f32 %v3307, %v3562
        %v3592 = vadd.f32 %v3312, %v3567
        %v3593 = vadd.f32 %v3317, %v3572
        %v3594 = vadd.f32 %v3322, %v3577
        %v3595 = vadd.f32 %v3327, %v3582
        %v3596 = vadd.f32 %v3332, %v3587
        %s3597 = scalar_lea.vmem [#allocation4], 168
        %v3598 = vld [vmem:[%s3597] sm:$0xff]
        %v3599 = vld [vmem:[%s3597 + $0x8] sm:$0xff]
        %v3600 = vld [vmem:[%s3597 + $0x10] sm:$0xff]
        %v3601 = vld [vmem:[%s3597 + $0x18] sm:$0xff]
        %v3602 = vld [vmem:[%s3597 + $0x20] sm:$0xff]
        %v3603 = vld [vmem:[%s3597 + $0x28] sm:$0xff]
        %v3604 = vld [vmem:[%s3597 + $0x30] sm:$0x1]
        %v3606 = vsel %vm2829, %v3598, 0
        %v3609 = vsel %vm2829, %v3599, 0
        %v3612 = vsel %vm2829, %v3600, 0
        %v3615 = vsel %vm2829, %v3601, 0
        %v3618 = vsel %vm2829, %v3602, 0
        %v3621 = vsel %vm2829, %v3603, 0
        %v3624 = vsel %vm2829, %v3604, 0
        %3626 = vmatprep.subr.mxu0 0.0
        %3627 = vmatpush1.msra.mxu0 0.0
        %3628 = vmatprep.subr.mxu0 0.0
        %3629 = vmatpush1.msra.mxu0 0.0
        %3630 = vmatprep.subr.mxu0 0.0
        %3631 = vmatpush1.msra.mxu0 0.0
        %3632 = vmatprep.subr.mxu0 0.0
        %3633 = vmatpush1.msra.mxu0 0.0
        %3634 = vmatprep.subr.mxu0 0.0
        %3635 = vmatpush1.msra.mxu0 0.0
        %3636 = vmatprep.subr.mxu0 0.0
        %3637 = vmatpush1.msra.mxu0 0.0
        %3638 = vmatprep.subr.mxu0 0.0
        %3639 = vmatpush1.msra.mxu0 0.0
        %3640 = vmatprep.subr.mxu0 0.0
        %3641 = vmatpush1.msra.mxu0 0.0
        %3642 = vmatprep.subr.mxu0 0.0
        %3643 = vmatpush1.msra.mxu0 0.0
        %3644 = vmatprep.subr.mxu0 0.0
        %3645 = vmatpush1.msra.mxu0 %v2853
        %3646 = vmatprep.subr.mxu0 0.0
        %3647 = vmatpush1.msra.mxu0 %v2820
        %3648 = vmatprep.subr.mxu0 0.0
        %3649 = vmatpush1.msra.mxu0 %v2819
        %3650 = vmatprep.subr.mxu0 0.0
        %3651 = vmatpush1.msra.mxu0 %v2818
        %3652 = vmatprep.subr.mxu0 0.0
        %3653 = vmatpush1.msra.mxu0 %v2817
        %3654 = vmatprep.subr.mxu0 0.0
        %3655 = vmatpush1.msra.mxu0 %v2816
        %3656 = vmatprep.subr.mxu0 0.0
        %3657 = vmatpush1.msra.mxu0 %v2815
        %3658 = vmatprep.subr.mxu0 0.0
        %3659 = vmatpush2.msra.mxu0 0.0
        %3660 = vmatprep.subr.mxu0 0.0
        %3661 = vmatpush2.msra.mxu0 0.0
        %3662 = vmatprep.subr.mxu0 0.0
        %3663 = vmatpush2.msra.mxu0 0.0
        %3664 = vmatprep.subr.mxu0 0.0
        %3665 = vmatpush2.msra.mxu0 0.0
        %3666 = vmatprep.subr.mxu0 0.0
        %3667 = vmatpush2.msra.mxu0 0.0
        %3668 = vmatprep.subr.mxu0 0.0
        %3669 = vmatpush2.msra.mxu0 0.0
        %3670 = vmatprep.subr.mxu0 0.0
        %3671 = vmatpush2.msra.mxu0 0.0
        %3672 = vmatprep.subr.mxu0 0.0
        %3673 = vmatpush2.msra.mxu0 0.0
        %3674 = vmatprep.subr.mxu0 0.0
        %3675 = vmatpush2.msra.mxu0 0.0
        %3676 = vmatprep.subr.mxu0 0.0
        %3677 = vmatpush2.msra.mxu0 0.0
        %3678 = vmatprep.subr.mxu0 0.0
        %3679 = vmatpush2.msra.mxu0 0.0
        %3680 = vmatprep.subr.mxu0 0.0
        %3681 = vmatpush2.msra.mxu0 0.0
        %3682 = vmatprep.subr.mxu0 0.0
        %3683 = vmatpush2.msra.mxu0 0.0
        %3684 = vmatprep.subr.mxu0 0.0
        %3685 = vmatpush2.msra.mxu0 0.0
        %3686 = vmatprep.subr.mxu0 0.0
        %3687 = vmatpush2.msra.mxu0 0.0
        %3688 = vmatprep.subr.mxu0 0.0
        %3689 = vmatpush2.msra.mxu0 0.0
        %3690 = vmatprep.mubr.f32.mxu0 0.0
        %3691 = vmatmul.mubr.f32.gmra.mxu0 %v3606
        %v3692 = vpop.f32.mrf.mxu0
        %v3693 = vadd.f32 0.0, %v3692
        %v3694 = vpop.f32.mrf.mxu0
        %3695 = vmatprep.mubr.f32.mxu0 0.0
        %3696 = vmatmul.mubr.f32.gmra.mxu0 %v3609
        %v3697 = vpop.f32.mrf.mxu0
        %v3698 = vadd.f32 0.0, %v3697
        %v3699 = vpop.f32.mrf.mxu0
        %3700 = vmatprep.mubr.f32.mxu0 0.0
        %3701 = vmatmul.mubr.f32.gmra.mxu0 %v3612
        %v3702 = vpop.f32.mrf.mxu0
        %v3703 = vadd.f32 0.0, %v3702
        %v3704 = vpop.f32.mrf.mxu0
        %3705 = vmatprep.mubr.f32.mxu0 0.0
        %3706 = vmatmul.mubr.f32.gmra.mxu0 %v3615
        %v3707 = vpop.f32.mrf.mxu0
        %v3708 = vadd.f32 0.0, %v3707
        %v3709 = vpop.f32.mrf.mxu0
        %3710 = vmatprep.mubr.f32.mxu0 0.0
        %3711 = vmatmul.mubr.f32.gmra.mxu0 %v3618
        %v3712 = vpop.f32.mrf.mxu0
        %v3713 = vadd.f32 0.0, %v3712
        %v3714 = vpop.f32.mrf.mxu0
        %3715 = vmatprep.mubr.f32.mxu0 0.0
        %3716 = vmatmul.mubr.f32.gmra.mxu0 %v3621
        %v3717 = vpop.f32.mrf.mxu0
        %v3718 = vadd.f32 0.0, %v3717
        %v3719 = vpop.f32.mrf.mxu0
        %3720 = vmatprep.mubr.f32.mxu0 0.0
        %3721 = vmatmul.mubr.f32.gmra.mxu0 %v3624
        %v3722 = vpop.f32.mrf.mxu0
        %v3723 = vadd.f32 0.0, %v3722
        %v3724 = vpop.f32.mrf.mxu0
        %3725 = vdwg.mxu0
        %s3726 = scalar_lea.vmem %s13, 96
        %v3727 = vld [vmem:[%s3726] sm:$0xff]
        %v3728 = vld [vmem:[%s3726 + $0x8] sm:$0xff]
        %v3729 = vld [vmem:[%s3726 + $0x10] sm:$0xff]
        %v3730 = vld [vmem:[%s3726 + $0x18] sm:$0xff]
        %v3732 = vsel %vm561, %v3693, 0
        %v3735 = vsel %vm561, %v3698, 0
        %v3738 = vsel %vm561, %v3703, 0
        %v3741 = vsel %vm561, %v3708, 0
        %v3744 = vsel %vm561, %v3713, 0
        %v3747 = vsel %vm561, %v3718, 0
        %v3750 = vsel %vm561, %v3723, 0
        %3752 = vmatprep.subr.mxu0 0.0
        %3753 = vmatpush1.msra.mxu0 0.0
        %3754 = vmatprep.subr.mxu0 0.0
        %3755 = vmatpush1.msra.mxu0 0.0
        %3756 = vmatprep.subr.mxu0 0.0
        %3757 = vmatpush1.msra.mxu0 0.0
        %3758 = vmatprep.subr.mxu0 0.0
        %3759 = vmatpush1.msra.mxu0 0.0
        %3760 = vmatprep.subr.mxu0 0.0
        %3761 = vmatpush1.msra.mxu0 0.0
        %3762 = vmatprep.subr.mxu0 0.0
        %3763 = vmatpush1.msra.mxu0 0.0
        %3764 = vmatprep.subr.mxu0 0.0
        %3765 = vmatpush1.msra.mxu0 0.0
        %3766 = vmatprep.subr.mxu0 0.0
        %3767 = vmatpush1.msra.mxu0 0.0
        %3768 = vmatprep.subr.mxu0 0.0
        %3769 = vmatpush1.msra.mxu0 0.0
        %3770 = vmatprep.subr.mxu0 0.0
        %3771 = vmatpush1.msra.mxu0 0.0
        %3772 = vmatprep.subr.mxu0 0.0
        %3773 = vmatpush1.msra.mxu0 0.0
        %3774 = vmatprep.subr.mxu0 0.0
        %3775 = vmatpush1.msra.mxu0 0.0
        %3776 = vmatprep.subr.mxu0 0.0
        %3777 = vmatpush1.msra.mxu0 %v3730
        %3778 = vmatprep.subr.mxu0 0.0
        %3779 = vmatpush1.msra.mxu0 %v3729
        %3780 = vmatprep.subr.mxu0 0.0
        %3781 = vmatpush1.msra.mxu0 %v3728
        %3782 = vmatprep.subr.mxu0 0.0
        %3783 = vmatpush1.msra.mxu0 %v3727
        %3784 = vmatprep.subr.mxu0 0.0
        %3785 = vmatpush2.msra.mxu0 0.0
        %3786 = vmatprep.subr.mxu0 0.0
        %3787 = vmatpush2.msra.mxu0 0.0
        %3788 = vmatprep.subr.mxu0 0.0
        %3789 = vmatpush2.msra.mxu0 0.0
        %3790 = vmatprep.subr.mxu0 0.0
        %3791 = vmatpush2.msra.mxu0 0.0
        %3792 = vmatprep.subr.mxu0 0.0
        %3793 = vmatpush2.msra.mxu0 0.0
        %3794 = vmatprep.subr.mxu0 0.0
        %3795 = vmatpush2.msra.mxu0 0.0
        %3796 = vmatprep.subr.mxu0 0.0
        %3797 = vmatpush2.msra.mxu0 0.0
        %3798 = vmatprep.subr.mxu0 0.0
        %3799 = vmatpush2.msra.mxu0 0.0
        %3800 = vmatprep.subr.mxu0 0.0
        %3801 = vmatpush2.msra.mxu0 0.0
        %3802 = vmatprep.subr.mxu0 0.0
        %3803 = vmatpush2.msra.mxu0 0.0
        %3804 = vmatprep.subr.mxu0 0.0
        %3805 = vmatpush2.msra.mxu0 0.0
        %3806 = vmatprep.subr.mxu0 0.0
        %3807 = vmatpush2.msra.mxu0 0.0
        %3808 = vmatprep.subr.mxu0 0.0
        %3809 = vmatpush2.msra.mxu0 0.0
        %3810 = vmatprep.subr.mxu0 0.0
        %3811 = vmatpush2.msra.mxu0 0.0
        %3812 = vmatprep.subr.mxu0 0.0
        %3813 = vmatpush2.msra.mxu0 0.0
        %3814 = vmatprep.subr.mxu0 0.0
        %3815 = vmatpush2.msra.mxu0 0.0
        %3816 = vmatprep.mubr.f32.mxu0 0.0
        %3817 = vmatmul.mubr.f32.gmra.mxu0 %v3732
        %v3818 = vpop.f32.mrf.mxu0
        %v3819 = vadd.f32 0.0, %v3818
        %v3820 = vpop.f32.mrf.mxu0
        %3821 = vmatprep.mubr.f32.mxu0 0.0
        %3822 = vmatmul.mubr.f32.gmra.mxu0 %v3735
        %v3823 = vpop.f32.mrf.mxu0
        %v3824 = vadd.f32 0.0, %v3823
        %v3825 = vpop.f32.mrf.mxu0
        %3826 = vmatprep.mubr.f32.mxu0 0.0
        %3827 = vmatmul.mubr.f32.gmra.mxu0 %v3738
        %v3828 = vpop.f32.mrf.mxu0
        %v3829 = vadd.f32 0.0, %v3828
        %v3830 = vpop.f32.mrf.mxu0
        %3831 = vmatprep.mubr.f32.mxu0 0.0
        %3832 = vmatmul.mubr.f32.gmra.mxu0 %v3741
        %v3833 = vpop.f32.mrf.mxu0
        %v3834 = vadd.f32 0.0, %v3833
        %v3835 = vpop.f32.mrf.mxu0
        %3836 = vmatprep.mubr.f32.mxu0 0.0
        %3837 = vmatmul.mubr.f32.gmra.mxu0 %v3744
        %v3838 = vpop.f32.mrf.mxu0
        %v3839 = vadd.f32 0.0, %v3838
        %v3840 = vpop.f32.mrf.mxu0
        %3841 = vmatprep.mubr.f32.mxu0 0.0
        %3842 = vmatmul.mubr.f32.gmra.mxu0 %v3747
        %v3843 = vpop.f32.mrf.mxu0
        %v3844 = vadd.f32 0.0, %v3843
        %v3845 = vpop.f32.mrf.mxu0
        %3846 = vmatprep.mubr.f32.mxu0 0.0
        %3847 = vmatmul.mubr.f32.gmra.mxu0 %v3750
        %v3848 = vpop.f32.mrf.mxu0
        %v3849 = vadd.f32 0.0, %v3848
        %v3850 = vpop.f32.mrf.mxu0
        %3851 = vdwg.mxu0
        %v3852 = vadd.f32 %v3590, %v3819
        %v3853 = vadd.f32 %v3591, %v3824
        %v3854 = vadd.f32 %v3592, %v3829
        %v3855 = vadd.f32 %v3593, %v3834
        %v3856 = vadd.f32 %v3594, %v3839
        %v3857 = vadd.f32 %v3595, %v3844
        %v3858 = vadd.f32 %v3596, %v3849
        %s3859 = scalar_lea.vmem [#allocation4], 224
        %v3860 = vld [vmem:[%s3859] sm:$0xff]
        %v3861 = vld [vmem:[%s3859 + $0x8] sm:$0xff]
        %v3862 = vld [vmem:[%s3859 + $0x10] sm:$0xff]
        %v3863 = vld [vmem:[%s3859 + $0x18] sm:$0xff]
        %v3864 = vld [vmem:[%s3859 + $0x20] sm:$0xff]
        %v3865 = vld [vmem:[%s3859 + $0x28] sm:$0xff]
        %v3866 = vld [vmem:[%s3859 + $0x30] sm:$0x1]
        %v3868 = vsel %vm2829, %v3860, 0
        %v3871 = vsel %vm2829, %v3861, 0
        %v3874 = vsel %vm2829, %v3862, 0
        %v3877 = vsel %vm2829, %v3863, 0
        %v3880 = vsel %vm2829, %v3864, 0
        %v3883 = vsel %vm2829, %v3865, 0
        %v3886 = vsel %vm2829, %v3866, 0
        %3888 = vmatprep.subr.mxu0 0.0
        %3889 = vmatpush1.msra.mxu0 0.0
        %3890 = vmatprep.subr.mxu0 0.0
        %3891 = vmatpush1.msra.mxu0 0.0
        %3892 = vmatprep.subr.mxu0 0.0
        %3893 = vmatpush1.msra.mxu0 0.0
        %3894 = vmatprep.subr.mxu0 0.0
        %3895 = vmatpush1.msra.mxu0 0.0
        %3896 = vmatprep.subr.mxu0 0.0
        %3897 = vmatpush1.msra.mxu0 0.0
        %3898 = vmatprep.subr.mxu0 0.0
        %3899 = vmatpush1.msra.mxu0 0.0
        %3900 = vmatprep.subr.mxu0 0.0
        %3901 = vmatpush1.msra.mxu0 0.0
        %3902 = vmatprep.subr.mxu0 0.0
        %3903 = vmatpush1.msra.mxu0 0.0
        %3904 = vmatprep.subr.mxu0 0.0
        %3905 = vmatpush1.msra.mxu0 0.0
        %3906 = vmatprep.subr.mxu0 0.0
        %3907 = vmatpush1.msra.mxu0 %v2853
        %3908 = vmatprep.subr.mxu0 0.0
        %3909 = vmatpush1.msra.mxu0 %v2820
        %3910 = vmatprep.subr.mxu0 0.0
        %3911 = vmatpush1.msra.mxu0 %v2819
        %3912 = vmatprep.subr.mxu0 0.0
        %3913 = vmatpush1.msra.mxu0 %v2818
        %3914 = vmatprep.subr.mxu0 0.0
        %3915 = vmatpush1.msra.mxu0 %v2817
        %3916 = vmatprep.subr.mxu0 0.0
        %3917 = vmatpush1.msra.mxu0 %v2816
        %3918 = vmatprep.subr.mxu0 0.0
        %3919 = vmatpush1.msra.mxu0 %v2815
        %3920 = vmatprep.subr.mxu0 0.0
        %3921 = vmatpush2.msra.mxu0 0.0
        %3922 = vmatprep.subr.mxu0 0.0
        %3923 = vmatpush2.msra.mxu0 0.0
        %3924 = vmatprep.subr.mxu0 0.0
        %3925 = vmatpush2.msra.mxu0 0.0
        %3926 = vmatprep.subr.mxu0 0.0
        %3927 = vmatpush2.msra.mxu0 0.0
        %3928 = vmatprep.subr.mxu0 0.0
        %3929 = vmatpush2.msra.mxu0 0.0
        %3930 = vmatprep.subr.mxu0 0.0
        %3931 = vmatpush2.msra.mxu0 0.0
        %3932 = vmatprep.subr.mxu0 0.0
        %3933 = vmatpush2.msra.mxu0 0.0
        %3934 = vmatprep.subr.mxu0 0.0
        %3935 = vmatpush2.msra.mxu0 0.0
        %3936 = vmatprep.subr.mxu0 0.0
        %3937 = vmatpush2.msra.mxu0 0.0
        %3938 = vmatprep.subr.mxu0 0.0
        %3939 = vmatpush2.msra.mxu0 0.0
        %3940 = vmatprep.subr.mxu0 0.0
        %3941 = vmatpush2.msra.mxu0 0.0
        %3942 = vmatprep.subr.mxu0 0.0
        %3943 = vmatpush2.msra.mxu0 0.0
        %3944 = vmatprep.subr.mxu0 0.0
        %3945 = vmatpush2.msra.mxu0 0.0
        %3946 = vmatprep.subr.mxu0 0.0
        %3947 = vmatpush2.msra.mxu0 0.0
        %3948 = vmatprep.subr.mxu0 0.0
        %3949 = vmatpush2.msra.mxu0 0.0
        %3950 = vmatprep.subr.mxu0 0.0
        %3951 = vmatpush2.msra.mxu0 0.0
        %3952 = vmatprep.mubr.f32.mxu0 0.0
        %3953 = vmatmul.mubr.f32.gmra.mxu0 %v3868
        %v3954 = vpop.f32.mrf.mxu0
        %v3955 = vadd.f32 0.0, %v3954
        %v3956 = vpop.f32.mrf.mxu0
        %3957 = vmatprep.mubr.f32.mxu0 0.0
        %3958 = vmatmul.mubr.f32.gmra.mxu0 %v3871
        %v3959 = vpop.f32.mrf.mxu0
        %v3960 = vadd.f32 0.0, %v3959
        %v3961 = vpop.f32.mrf.mxu0
        %3962 = vmatprep.mubr.f32.mxu0 0.0
        %3963 = vmatmul.mubr.f32.gmra.mxu0 %v3874
        %v3964 = vpop.f32.mrf.mxu0
        %v3965 = vadd.f32 0.0, %v3964
        %v3966 = vpop.f32.mrf.mxu0
        %3967 = vmatprep.mubr.f32.mxu0 0.0
        %3968 = vmatmul.mubr.f32.gmra.mxu0 %v3877
        %v3969 = vpop.f32.mrf.mxu0
        %v3970 = vadd.f32 0.0, %v3969
        %v3971 = vpop.f32.mrf.mxu0
        %3972 = vmatprep.mubr.f32.mxu0 0.0
        %3973 = vmatmul.mubr.f32.gmra.mxu0 %v3880
        %v3974 = vpop.f32.mrf.mxu0
        %v3975 = vadd.f32 0.0, %v3974
        %v3976 = vpop.f32.mrf.mxu0
        %3977 = vmatprep.mubr.f32.mxu0 0.0
        %3978 = vmatmul.mubr.f32.gmra.mxu0 %v3883
        %v3979 = vpop.f32.mrf.mxu0
        %v3980 = vadd.f32 0.0, %v3979
        %v3981 = vpop.f32.mrf.mxu0
        %3982 = vmatprep.mubr.f32.mxu0 0.0
        %3983 = vmatmul.mubr.f32.gmra.mxu0 %v3886
        %v3984 = vpop.f32.mrf.mxu0
        %v3985 = vadd.f32 0.0, %v3984
        %v3986 = vpop.f32.mrf.mxu0
        %3987 = vdwg.mxu0
        %s3988 = scalar_lea.vmem %s13, 128
        %v3989 = vld [vmem:[%s3988] sm:$0xff]
        %v3990 = vld [vmem:[%s3988 + $0x8] sm:$0xff]
        %v3991 = vld [vmem:[%s3988 + $0x10] sm:$0xff]
        %v3992 = vld [vmem:[%s3988 + $0x18] sm:$0xff]
        %v3994 = vsel %vm561, %v3955, 0
        %v3997 = vsel %vm561, %v3960, 0
        %v4000 = vsel %vm561, %v3965, 0
        %v4003 = vsel %vm561, %v3970, 0
        %v4006 = vsel %vm561, %v3975, 0
        %v4009 = vsel %vm561, %v3980, 0
        %v4012 = vsel %vm561, %v3985, 0
        %4014 = vmatprep.subr.mxu0 0.0
        %4015 = vmatpush1.msra.mxu0 0.0
        %4016 = vmatprep.subr.mxu0 0.0
        %4017 = vmatpush1.msra.mxu0 0.0
        %4018 = vmatprep.subr.mxu0 0.0
        %4019 = vmatpush1.msra.mxu0 0.0
        %4020 = vmatprep.subr.mxu0 0.0
        %4021 = vmatpush1.msra.mxu0 0.0
        %4022 = vmatprep.subr.mxu0 0.0
        %4023 = vmatpush1.msra.mxu0 0.0
        %4024 = vmatprep.subr.mxu0 0.0
        %4025 = vmatpush1.msra.mxu0 0.0
        %4026 = vmatprep.subr.mxu0 0.0
        %4027 = vmatpush1.msra.mxu0 0.0
        %4028 = vmatprep.subr.mxu0 0.0
        %4029 = vmatpush1.msra.mxu0 0.0
        %4030 = vmatprep.subr.mxu0 0.0
        %4031 = vmatpush1.msra.mxu0 0.0
        %4032 = vmatprep.subr.mxu0 0.0
        %4033 = vmatpush1.msra.mxu0 0.0
        %4034 = vmatprep.subr.mxu0 0.0
        %4035 = vmatpush1.msra.mxu0 0.0
        %4036 = vmatprep.subr.mxu0 0.0
        %4037 = vmatpush1.msra.mxu0 0.0
        %4038 = vmatprep.subr.mxu0 0.0
        %4039 = vmatpush1.msra.mxu0 %v3992
        %4040 = vmatprep.subr.mxu0 0.0
        %4041 = vmatpush1.msra.mxu0 %v3991
        %4042 = vmatprep.subr.mxu0 0.0
        %4043 = vmatpush1.msra.mxu0 %v3990
        %4044 = vmatprep.subr.mxu0 0.0
        %4045 = vmatpush1.msra.mxu0 %v3989
        %4046 = vmatprep.subr.mxu0 0.0
        %4047 = vmatpush2.msra.mxu0 0.0
        %4048 = vmatprep.subr.mxu0 0.0
        %4049 = vmatpush2.msra.mxu0 0.0
        %4050 = vmatprep.subr.mxu0 0.0
        %4051 = vmatpush2.msra.mxu0 0.0
        %4052 = vmatprep.subr.mxu0 0.0
        %4053 = vmatpush2.msra.mxu0 0.0
        %4054 = vmatprep.subr.mxu0 0.0
        %4055 = vmatpush2.msra.mxu0 0.0
        %4056 = vmatprep.subr.mxu0 0.0
        %4057 = vmatpush2.msra.mxu0 0.0
        %4058 = vmatprep.subr.mxu0 0.0
        %4059 = vmatpush2.msra.mxu0 0.0
        %4060 = vmatprep.subr.mxu0 0.0
        %4061 = vmatpush2.msra.mxu0 0.0
        %4062 = vmatprep.subr.mxu0 0.0
        %4063 = vmatpush2.msra.mxu0 0.0
        %4064 = vmatprep.subr.mxu0 0.0
        %4065 = vmatpush2.msra.mxu0 0.0
        %4066 = vmatprep.subr.mxu0 0.0
        %4067 = vmatpush2.msra.mxu0 0.0
        %4068 = vmatprep.subr.mxu0 0.0
        %4069 = vmatpush2.msra.mxu0 0.0
        %4070 = vmatprep.subr.mxu0 0.0
        %4071 = vmatpush2.msra.mxu0 0.0
        %4072 = vmatprep.subr.mxu0 0.0
        %4073 = vmatpush2.msra.mxu0 0.0
        %4074 = vmatprep.subr.mxu0 0.0
        %4075 = vmatpush2.msra.mxu0 0.0
        %4076 = vmatprep.subr.mxu0 0.0
        %4077 = vmatpush2.msra.mxu0 0.0
        %4078 = vmatprep.mubr.f32.mxu0 0.0
        %4079 = vmatmul.mubr.f32.gmra.mxu0 %v3994
        %v4080 = vpop.f32.mrf.mxu0
        %v4081 = vadd.f32 0.0, %v4080
        %v4082 = vpop.f32.mrf.mxu0
        %4083 = vmatprep.mubr.f32.mxu0 0.0
        %4084 = vmatmul.mubr.f32.gmra.mxu0 %v3997
        %v4085 = vpop.f32.mrf.mxu0
        %v4086 = vadd.f32 0.0, %v4085
        %v4087 = vpop.f32.mrf.mxu0
        %4088 = vmatprep.mubr.f32.mxu0 0.0
        %4089 = vmatmul.mubr.f32.gmra.mxu0 %v4000
        %v4090 = vpop.f32.mrf.mxu0
        %v4091 = vadd.f32 0.0, %v4090
        %v4092 = vpop.f32.mrf.mxu0
        %4093 = vmatprep.mubr.f32.mxu0 0.0
        %4094 = vmatmul.mubr.f32.gmra.mxu0 %v4003
        %v4095 = vpop.f32.mrf.mxu0
        %v4096 = vadd.f32 0.0, %v4095
        %v4097 = vpop.f32.mrf.mxu0
        %4098 = vmatprep.mubr.f32.mxu0 0.0
        %4099 = vmatmul.mubr.f32.gmra.mxu0 %v4006
        %v4100 = vpop.f32.mrf.mxu0
        %v4101 = vadd.f32 0.0, %v4100
        %v4102 = vpop.f32.mrf.mxu0
        %4103 = vmatprep.mubr.f32.mxu0 0.0
        %4104 = vmatmul.mubr.f32.gmra.mxu0 %v4009
        %v4105 = vpop.f32.mrf.mxu0
        %v4106 = vadd.f32 0.0, %v4105
        %v4107 = vpop.f32.mrf.mxu0
        %4108 = vmatprep.mubr.f32.mxu0 0.0
        %4109 = vmatmul.mubr.f32.gmra.mxu0 %v4012
        %v4110 = vpop.f32.mrf.mxu0
        %v4111 = vadd.f32 0.0, %v4110
        %v4112 = vpop.f32.mrf.mxu0
        %4113 = vdwg.mxu0
        %v4114 = vadd.f32 %v3852, %v4081
        %v4115 = vadd.f32 %v3853, %v4086
        %v4116 = vadd.f32 %v3854, %v4091
        %v4117 = vadd.f32 %v3855, %v4096
        %v4118 = vadd.f32 %v3856, %v4101
        %v4119 = vadd.f32 %v3857, %v4106
        %v4120 = vadd.f32 %v3858, %v4111
        %s4121 = scalar_lea.vmem [#allocation4], 280
        %v4122 = vld [vmem:[%s4121] sm:$0xff]
        %v4123 = vld [vmem:[%s4121 + $0x8] sm:$0xff]
        %v4124 = vld [vmem:[%s4121 + $0x10] sm:$0xff]
        %v4125 = vld [vmem:[%s4121 + $0x18] sm:$0xff]
        %v4126 = vld [vmem:[%s4121 + $0x20] sm:$0xff]
        %v4127 = vld [vmem:[%s4121 + $0x28] sm:$0xff]
        %v4128 = vld [vmem:[%s4121 + $0x30] sm:$0x1]
        %v4130 = vsel %vm2829, %v4122, 0
        %v4133 = vsel %vm2829, %v4123, 0
        %v4136 = vsel %vm2829, %v4124, 0
        %v4139 = vsel %vm2829, %v4125, 0
        %v4142 = vsel %vm2829, %v4126, 0
        %v4145 = vsel %vm2829, %v4127, 0
        %v4148 = vsel %vm2829, %v4128, 0
        %4150 = vmatprep.subr.mxu0 0.0
        %4151 = vmatpush1.msra.mxu0 0.0
        %4152 = vmatprep.subr.mxu0 0.0
        %4153 = vmatpush1.msra.mxu0 0.0
        %4154 = vmatprep.subr.mxu0 0.0
        %4155 = vmatpush1.msra.mxu0 0.0
        %4156 = vmatprep.subr.mxu0 0.0
        %4157 = vmatpush1.msra.mxu0 0.0
        %4158 = vmatprep.subr.mxu0 0.0
        %4159 = vmatpush1.msra.mxu0 0.0
        %4160 = vmatprep.subr.mxu0 0.0
        %4161 = vmatpush1.msra.mxu0 0.0
        %4162 = vmatprep.subr.mxu0 0.0
        %4163 = vmatpush1.msra.mxu0 0.0
        %4164 = vmatprep.subr.mxu0 0.0
        %4165 = vmatpush1.msra.mxu0 0.0
        %4166 = vmatprep.subr.mxu0 0.0
        %4167 = vmatpush1.msra.mxu0 0.0
        %4168 = vmatprep.subr.mxu0 0.0
        %4169 = vmatpush1.msra.mxu0 %v2853
        %4170 = vmatprep.subr.mxu0 0.0
        %4171 = vmatpush1.msra.mxu0 %v2820
        %4172 = vmatprep.subr.mxu0 0.0
        %4173 = vmatpush1.msra.mxu0 %v2819
        %4174 = vmatprep.subr.mxu0 0.0
        %4175 = vmatpush1.msra.mxu0 %v2818
        %4176 = vmatprep.subr.mxu0 0.0
        %4177 = vmatpush1.msra.mxu0 %v2817
        %4178 = vmatprep.subr.mxu0 0.0
        %4179 = vmatpush1.msra.mxu0 %v2816
        %4180 = vmatprep.subr.mxu0 0.0
        %4181 = vmatpush1.msra.mxu0 %v2815
        %4182 = vmatprep.subr.mxu0 0.0
        %4183 = vmatpush2.msra.mxu0 0.0
        %4184 = vmatprep.subr.mxu0 0.0
        %4185 = vmatpush2.msra.mxu0 0.0
        %4186 = vmatprep.subr.mxu0 0.0
        %4187 = vmatpush2.msra.mxu0 0.0
        %4188 = vmatprep.subr.mxu0 0.0
        %4189 = vmatpush2.msra.mxu0 0.0
        %4190 = vmatprep.subr.mxu0 0.0
        %4191 = vmatpush2.msra.mxu0 0.0
        %4192 = vmatprep.subr.mxu0 0.0
        %4193 = vmatpush2.msra.mxu0 0.0
        %4194 = vmatprep.subr.mxu0 0.0
        %4195 = vmatpush2.msra.mxu0 0.0
        %4196 = vmatprep.subr.mxu0 0.0
        %4197 = vmatpush2.msra.mxu0 0.0
        %4198 = vmatprep.subr.mxu0 0.0
        %4199 = vmatpush2.msra.mxu0 0.0
        %4200 = vmatprep.subr.mxu0 0.0
        %4201 = vmatpush2.msra.mxu0 0.0
        %4202 = vmatprep.subr.mxu0 0.0
        %4203 = vmatpush2.msra.mxu0 0.0
        %4204 = vmatprep.subr.mxu0 0.0
        %4205 = vmatpush2.msra.mxu0 0.0
        %4206 = vmatprep.subr.mxu0 0.0
        %4207 = vmatpush2.msra.mxu0 0.0
        %4208 = vmatprep.subr.mxu0 0.0
        %4209 = vmatpush2.msra.mxu0 0.0
        %4210 = vmatprep.subr.mxu0 0.0
        %4211 = vmatpush2.msra.mxu0 0.0
        %4212 = vmatprep.subr.mxu0 0.0
        %4213 = vmatpush2.msra.mxu0 0.0
        %4214 = vmatprep.mubr.f32.mxu0 0.0
        %4215 = vmatmul.mubr.f32.gmra.mxu0 %v4130
        %v4216 = vpop.f32.mrf.mxu0
        %v4217 = vadd.f32 0.0, %v4216
        %v4218 = vpop.f32.mrf.mxu0
        %4219 = vmatprep.mubr.f32.mxu0 0.0
        %4220 = vmatmul.mubr.f32.gmra.mxu0 %v4133
        %v4221 = vpop.f32.mrf.mxu0
        %v4222 = vadd.f32 0.0, %v4221
        %v4223 = vpop.f32.mrf.mxu0
        %4224 = vmatprep.mubr.f32.mxu0 0.0
        %4225 = vmatmul.mubr.f32.gmra.mxu0 %v4136
        %v4226 = vpop.f32.mrf.mxu0
        %v4227 = vadd.f32 0.0, %v4226
        %v4228 = vpop.f32.mrf.mxu0
        %4229 = vmatprep.mubr.f32.mxu0 0.0
        %4230 = vmatmul.mubr.f32.gmra.mxu0 %v4139
        %v4231 = vpop.f32.mrf.mxu0
        %v4232 = vadd.f32 0.0, %v4231
        %v4233 = vpop.f32.mrf.mxu0
        %4234 = vmatprep.mubr.f32.mxu0 0.0
        %4235 = vmatmul.mubr.f32.gmra.mxu0 %v4142
        %v4236 = vpop.f32.mrf.mxu0
        %v4237 = vadd.f32 0.0, %v4236
        %v4238 = vpop.f32.mrf.mxu0
        %4239 = vmatprep.mubr.f32.mxu0 0.0
        %4240 = vmatmul.mubr.f32.gmra.mxu0 %v4145
        %v4241 = vpop.f32.mrf.mxu0
        %v4242 = vadd.f32 0.0, %v4241
        %v4243 = vpop.f32.mrf.mxu0
        %4244 = vmatprep.mubr.f32.mxu0 0.0
        %4245 = vmatmul.mubr.f32.gmra.mxu0 %v4148
        %v4246 = vpop.f32.mrf.mxu0
        %v4247 = vadd.f32 0.0, %v4246
        %v4248 = vpop.f32.mrf.mxu0
        %4249 = vdwg.mxu0
        %s4250 = scalar_lea.vmem %s13, 160
        %v4251 = vld [vmem:[%s4250] sm:$0xff]
        %v4252 = vld [vmem:[%s4250 + $0x8] sm:$0xff]
        %v4253 = vld [vmem:[%s4250 + $0x10] sm:$0xff]
        %v4254 = vld [vmem:[%s4250 + $0x18] sm:$0xff]
        %v4256 = vsel %vm561, %v4217, 0
        %v4259 = vsel %vm561, %v4222, 0
        %v4262 = vsel %vm561, %v4227, 0
        %v4265 = vsel %vm561, %v4232, 0
        %v4268 = vsel %vm561, %v4237, 0
        %v4271 = vsel %vm561, %v4242, 0
        %v4274 = vsel %vm561, %v4247, 0
        %4276 = vmatprep.subr.mxu0 0.0
        %4277 = vmatpush1.msra.mxu0 0.0
        %4278 = vmatprep.subr.mxu0 0.0
        %4279 = vmatpush1.msra.mxu0 0.0
        %4280 = vmatprep.subr.mxu0 0.0
        %4281 = vmatpush1.msra.mxu0 0.0
        %4282 = vmatprep.subr.mxu0 0.0
        %4283 = vmatpush1.msra.mxu0 0.0
        %4284 = vmatprep.subr.mxu0 0.0
        %4285 = vmatpush1.msra.mxu0 0.0
        %4286 = vmatprep.subr.mxu0 0.0
        %4287 = vmatpush1.msra.mxu0 0.0
        %4288 = vmatprep.subr.mxu0 0.0
        %4289 = vmatpush1.msra.mxu0 0.0
        %4290 = vmatprep.subr.mxu0 0.0
        %4291 = vmatpush1.msra.mxu0 0.0
        %4292 = vmatprep.subr.mxu0 0.0
        %4293 = vmatpush1.msra.mxu0 0.0
        %4294 = vmatprep.subr.mxu0 0.0
        %4295 = vmatpush1.msra.mxu0 0.0
        %4296 = vmatprep.subr.mxu0 0.0
        %4297 = vmatpush1.msra.mxu0 0.0
        %4298 = vmatprep.subr.mxu0 0.0
        %4299 = vmatpush1.msra.mxu0 0.0
        %4300 = vmatprep.subr.mxu0 0.0
        %4301 = vmatpush1.msra.mxu0 %v4254
        %4302 = vmatprep.subr.mxu0 0.0
        %4303 = vmatpush1.msra.mxu0 %v4253
        %4304 = vmatprep.subr.mxu0 0.0
        %4305 = vmatpush1.msra.mxu0 %v4252
        %4306 = vmatprep.subr.mxu0 0.0
        %4307 = vmatpush1.msra.mxu0 %v4251
        %4308 = vmatprep.subr.mxu0 0.0
        %4309 = vmatpush2.msra.mxu0 0.0
        %4310 = vmatprep.subr.mxu0 0.0
        %4311 = vmatpush2.msra.mxu0 0.0
        %4312 = vmatprep.subr.mxu0 0.0
        %4313 = vmatpush2.msra.mxu0 0.0
        %4314 = vmatprep.subr.mxu0 0.0
        %4315 = vmatpush2.msra.mxu0 0.0
        %4316 = vmatprep.subr.mxu0 0.0
        %4317 = vmatpush2.msra.mxu0 0.0
        %4318 = vmatprep.subr.mxu0 0.0
        %4319 = vmatpush2.msra.mxu0 0.0
        %4320 = vmatprep.subr.mxu0 0.0
        %4321 = vmatpush2.msra.mxu0 0.0
        %4322 = vmatprep.subr.mxu0 0.0
        %4323 = vmatpush2.msra.mxu0 0.0
        %4324 = vmatprep.subr.mxu0 0.0
        %4325 = vmatpush2.msra.mxu0 0.0
        %4326 = vmatprep.subr.mxu0 0.0
        %4327 = vmatpush2.msra.mxu0 0.0
        %4328 = vmatprep.subr.mxu0 0.0
        %4329 = vmatpush2.msra.mxu0 0.0
        %4330 = vmatprep.subr.mxu0 0.0
        %4331 = vmatpush2.msra.mxu0 0.0
        %4332 = vmatprep.subr.mxu0 0.0
        %4333 = vmatpush2.msra.mxu0 0.0
        %4334 = vmatprep.subr.mxu0 0.0
        %4335 = vmatpush2.msra.mxu0 0.0
        %4336 = vmatprep.subr.mxu0 0.0
        %4337 = vmatpush2.msra.mxu0 0.0
        %4338 = vmatprep.subr.mxu0 0.0
        %4339 = vmatpush2.msra.mxu0 0.0
        %4340 = vmatprep.mubr.f32.mxu0 0.0
        %4341 = vmatmul.mubr.f32.gmra.mxu0 %v4256
        %v4342 = vpop.f32.mrf.mxu0
        %v4343 = vadd.f32 0.0, %v4342
        %v4344 = vpop.f32.mrf.mxu0
        %4345 = vmatprep.mubr.f32.mxu0 0.0
        %4346 = vmatmul.mubr.f32.gmra.mxu0 %v4259
        %v4347 = vpop.f32.mrf.mxu0
        %v4348 = vadd.f32 0.0, %v4347
        %v4349 = vpop.f32.mrf.mxu0
        %4350 = vmatprep.mubr.f32.mxu0 0.0
        %4351 = vmatmul.mubr.f32.gmra.mxu0 %v4262
        %v4352 = vpop.f32.mrf.mxu0
        %v4353 = vadd.f32 0.0, %v4352
        %v4354 = vpop.f32.mrf.mxu0
        %4355 = vmatprep.mubr.f32.mxu0 0.0
        %4356 = vmatmul.mubr.f32.gmra.mxu0 %v4265
        %v4357 = vpop.f32.mrf.mxu0
        %v4358 = vadd.f32 0.0, %v4357
        %v4359 = vpop.f32.mrf.mxu0
        %4360 = vmatprep.mubr.f32.mxu0 0.0
        %4361 = vmatmul.mubr.f32.gmra.mxu0 %v4268
        %v4362 = vpop.f32.mrf.mxu0
        %v4363 = vadd.f32 0.0, %v4362
        %v4364 = vpop.f32.mrf.mxu0
        %4365 = vmatprep.mubr.f32.mxu0 0.0
        %4366 = vmatmul.mubr.f32.gmra.mxu0 %v4271
        %v4367 = vpop.f32.mrf.mxu0
        %v4368 = vadd.f32 0.0, %v4367
        %v4369 = vpop.f32.mrf.mxu0
        %4370 = vmatprep.mubr.f32.mxu0 0.0
        %4371 = vmatmul.mubr.f32.gmra.mxu0 %v4274
        %v4372 = vpop.f32.mrf.mxu0
        %v4373 = vadd.f32 0.0, %v4372
        %v4374 = vpop.f32.mrf.mxu0
        %4375 = vdwg.mxu0
        %v4376 = vadd.f32 %v4114, %v4343
        %v4377 = vadd.f32 %v4115, %v4348
        %v4378 = vadd.f32 %v4116, %v4353
        %v4379 = vadd.f32 %v4117, %v4358
        %v4380 = vadd.f32 %v4118, %v4363
        %v4381 = vadd.f32 %v4119, %v4368
        %v4382 = vadd.f32 %v4120, %v4373
        %s4383 = scalar_lea.vmem [#allocation4], 336
        %v4384 = vld [vmem:[%s4383] sm:$0xff]
        %v4385 = vld [vmem:[%s4383 + $0x8] sm:$0xff]
        %v4386 = vld [vmem:[%s4383 + $0x10] sm:$0xff]
        %v4387 = vld [vmem:[%s4383 + $0x18] sm:$0xff]
        %v4388 = vld [vmem:[%s4383 + $0x20] sm:$0xff]
        %v4389 = vld [vmem:[%s4383 + $0x28] sm:$0xff]
        %v4390 = vld [vmem:[%s4383 + $0x30] sm:$0x1]
        %v4392 = vsel %vm2829, %v4384, 0
        %v4395 = vsel %vm2829, %v4385, 0
        %v4398 = vsel %vm2829, %v4386, 0
        %v4401 = vsel %vm2829, %v4387, 0
        %v4404 = vsel %vm2829, %v4388, 0
        %v4407 = vsel %vm2829, %v4389, 0
        %v4410 = vsel %vm2829, %v4390, 0
        %4412 = vmatprep.subr.mxu0 0.0
        %4413 = vmatpush1.msra.mxu0 0.0
        %4414 = vmatprep.subr.mxu0 0.0
        %4415 = vmatpush1.msra.mxu0 0.0
        %4416 = vmatprep.subr.mxu0 0.0
        %4417 = vmatpush1.msra.mxu0 0.0
        %4418 = vmatprep.subr.mxu0 0.0
        %4419 = vmatpush1.msra.mxu0 0.0
        %4420 = vmatprep.subr.mxu0 0.0
        %4421 = vmatpush1.msra.mxu0 0.0
        %4422 = vmatprep.subr.mxu0 0.0
        %4423 = vmatpush1.msra.mxu0 0.0
        %4424 = vmatprep.subr.mxu0 0.0
        %4425 = vmatpush1.msra.mxu0 0.0
        %4426 = vmatprep.subr.mxu0 0.0
        %4427 = vmatpush1.msra.mxu0 0.0
        %4428 = vmatprep.subr.mxu0 0.0
        %4429 = vmatpush1.msra.mxu0 0.0
        %4430 = vmatprep.subr.mxu0 0.0
        %4431 = vmatpush1.msra.mxu0 %v2853
        %4432 = vmatprep.subr.mxu0 0.0
        %4433 = vmatpush1.msra.mxu0 %v2820
        %4434 = vmatprep.subr.mxu0 0.0
        %4435 = vmatpush1.msra.mxu0 %v2819
        %4436 = vmatprep.subr.mxu0 0.0
        %4437 = vmatpush1.msra.mxu0 %v2818
        %4438 = vmatprep.subr.mxu0 0.0
        %4439 = vmatpush1.msra.mxu0 %v2817
        %4440 = vmatprep.subr.mxu0 0.0
        %4441 = vmatpush1.msra.mxu0 %v2816
        %4442 = vmatprep.subr.mxu0 0.0
        %4443 = vmatpush1.msra.mxu0 %v2815
        %4444 = vmatprep.subr.mxu0 0.0
        %4445 = vmatpush2.msra.mxu0 0.0
        %4446 = vmatprep.subr.mxu0 0.0
        %4447 = vmatpush2.msra.mxu0 0.0
        %4448 = vmatprep.subr.mxu0 0.0
        %4449 = vmatpush2.msra.mxu0 0.0
        %4450 = vmatprep.subr.mxu0 0.0
        %4451 = vmatpush2.msra.mxu0 0.0
        %4452 = vmatprep.subr.mxu0 0.0
        %4453 = vmatpush2.msra.mxu0 0.0
        %4454 = vmatprep.subr.mxu0 0.0
        %4455 = vmatpush2.msra.mxu0 0.0
        %4456 = vmatprep.subr.mxu0 0.0
        %4457 = vmatpush2.msra.mxu0 0.0
        %4458 = vmatprep.subr.mxu0 0.0
        %4459 = vmatpush2.msra.mxu0 0.0
        %4460 = vmatprep.subr.mxu0 0.0
        %4461 = vmatpush2.msra.mxu0 0.0
        %4462 = vmatprep.subr.mxu0 0.0
        %4463 = vmatpush2.msra.mxu0 0.0
        %4464 = vmatprep.subr.mxu0 0.0
        %4465 = vmatpush2.msra.mxu0 0.0
        %4466 = vmatprep.subr.mxu0 0.0
        %4467 = vmatpush2.msra.mxu0 0.0
        %4468 = vmatprep.subr.mxu0 0.0
        %4469 = vmatpush2.msra.mxu0 0.0
        %4470 = vmatprep.subr.mxu0 0.0
        %4471 = vmatpush2.msra.mxu0 0.0
        %4472 = vmatprep.subr.mxu0 0.0
        %4473 = vmatpush2.msra.mxu0 0.0
        %4474 = vmatprep.subr.mxu0 0.0
        %4475 = vmatpush2.msra.mxu0 0.0
        %4476 = vmatprep.mubr.f32.mxu0 0.0
        %4477 = vmatmul.mubr.f32.gmra.mxu0 %v4392
        %v4478 = vpop.f32.mrf.mxu0
        %v4479 = vadd.f32 0.0, %v4478
        %v4480 = vpop.f32.mrf.mxu0
        %4481 = vmatprep.mubr.f32.mxu0 0.0
        %4482 = vmatmul.mubr.f32.gmra.mxu0 %v4395
        %v4483 = vpop.f32.mrf.mxu0
        %v4484 = vadd.f32 0.0, %v4483
        %v4485 = vpop.f32.mrf.mxu0
        %4486 = vmatprep.mubr.f32.mxu0 0.0
        %4487 = vmatmul.mubr.f32.gmra.mxu0 %v4398
        %v4488 = vpop.f32.mrf.mxu0
        %v4489 = vadd.f32 0.0, %v4488
        %v4490 = vpop.f32.mrf.mxu0
        %4491 = vmatprep.mubr.f32.mxu0 0.0
        %4492 = vmatmul.mubr.f32.gmra.mxu0 %v4401
        %v4493 = vpop.f32.mrf.mxu0
        %v4494 = vadd.f32 0.0, %v4493
        %v4495 = vpop.f32.mrf.mxu0
        %4496 = vmatprep.mubr.f32.mxu0 0.0
        %4497 = vmatmul.mubr.f32.gmra.mxu0 %v4404
        %v4498 = vpop.f32.mrf.mxu0
        %v4499 = vadd.f32 0.0, %v4498
        %v4500 = vpop.f32.mrf.mxu0
        %4501 = vmatprep.mubr.f32.mxu0 0.0
        %4502 = vmatmul.mubr.f32.gmra.mxu0 %v4407
        %v4503 = vpop.f32.mrf.mxu0
        %v4504 = vadd.f32 0.0, %v4503
        %v4505 = vpop.f32.mrf.mxu0
        %4506 = vmatprep.mubr.f32.mxu0 0.0
        %4507 = vmatmul.mubr.f32.gmra.mxu0 %v4410
        %v4508 = vpop.f32.mrf.mxu0
        %v4509 = vadd.f32 0.0, %v4508
        %v4510 = vpop.f32.mrf.mxu0
        %4511 = vdwg.mxu0
        %s4512 = scalar_lea.vmem %s13, 192
        %v4513 = vld [vmem:[%s4512] sm:$0xff]
        %v4514 = vld [vmem:[%s4512 + $0x8] sm:$0xff]
        %v4515 = vld [vmem:[%s4512 + $0x10] sm:$0xff]
        %v4516 = vld [vmem:[%s4512 + $0x18] sm:$0xff]
        %v4518 = vsel %vm561, %v4479, 0
        %v4521 = vsel %vm561, %v4484, 0
        %v4524 = vsel %vm561, %v4489, 0
        %v4527 = vsel %vm561, %v4494, 0
        %v4530 = vsel %vm561, %v4499, 0
        %v4533 = vsel %vm561, %v4504, 0
        %v4536 = vsel %vm561, %v4509, 0
        %4538 = vmatprep.subr.mxu0 0.0
        %4539 = vmatpush1.msra.mxu0 0.0
        %4540 = vmatprep.subr.mxu0 0.0
        %4541 = vmatpush1.msra.mxu0 0.0
        %4542 = vmatprep.subr.mxu0 0.0
        %4543 = vmatpush1.msra.mxu0 0.0
        %4544 = vmatprep.subr.mxu0 0.0
        %4545 = vmatpush1.msra.mxu0 0.0
        %4546 = vmatprep.subr.mxu0 0.0
        %4547 = vmatpush1.msra.mxu0 0.0
        %4548 = vmatprep.subr.mxu0 0.0
        %4549 = vmatpush1.msra.mxu0 0.0
        %4550 = vmatprep.subr.mxu0 0.0
        %4551 = vmatpush1.msra.mxu0 0.0
        %4552 = vmatprep.subr.mxu0 0.0
        %4553 = vmatpush1.msra.mxu0 0.0
        %4554 = vmatprep.subr.mxu0 0.0
        %4555 = vmatpush1.msra.mxu0 0.0
        %4556 = vmatprep.subr.mxu0 0.0
        %4557 = vmatpush1.msra.mxu0 0.0
        %4558 = vmatprep.subr.mxu0 0.0
        %4559 = vmatpush1.msra.mxu0 0.0
        %4560 = vmatprep.subr.mxu0 0.0
        %4561 = vmatpush1.msra.mxu0 0.0
        %4562 = vmatprep.subr.mxu0 0.0
        %4563 = vmatpush1.msra.mxu0 %v4516
        %4564 = vmatprep.subr.mxu0 0.0
        %4565 = vmatpush1.msra.mxu0 %v4515
        %4566 = vmatprep.subr.mxu0 0.0
        %4567 = vmatpush1.msra.mxu0 %v4514
        %4568 = vmatprep.subr.mxu0 0.0
        %4569 = vmatpush1.msra.mxu0 %v4513
        %4570 = vmatprep.subr.mxu0 0.0
        %4571 = vmatpush2.msra.mxu0 0.0
        %4572 = vmatprep.subr.mxu0 0.0
        %4573 = vmatpush2.msra.mxu0 0.0
        %4574 = vmatprep.subr.mxu0 0.0
        %4575 = vmatpush2.msra.mxu0 0.0
        %4576 = vmatprep.subr.mxu0 0.0
        %4577 = vmatpush2.msra.mxu0 0.0
        %4578 = vmatprep.subr.mxu0 0.0
        %4579 = vmatpush2.msra.mxu0 0.0
        %4580 = vmatprep.subr.mxu0 0.0
        %4581 = vmatpush2.msra.mxu0 0.0
        %4582 = vmatprep.subr.mxu0 0.0
        %4583 = vmatpush2.msra.mxu0 0.0
        %4584 = vmatprep.subr.mxu0 0.0
        %4585 = vmatpush2.msra.mxu0 0.0
        %4586 = vmatprep.subr.mxu0 0.0
        %4587 = vmatpush2.msra.mxu0 0.0
        %4588 = vmatprep.subr.mxu0 0.0
        %4589 = vmatpush2.msra.mxu0 0.0
        %4590 = vmatprep.subr.mxu0 0.0
        %4591 = vmatpush2.msra.mxu0 0.0
        %4592 = vmatprep.subr.mxu0 0.0
        %4593 = vmatpush2.msra.mxu0 0.0
        %4594 = vmatprep.subr.mxu0 0.0
        %4595 = vmatpush2.msra.mxu0 0.0
        %4596 = vmatprep.subr.mxu0 0.0
        %4597 = vmatpush2.msra.mxu0 0.0
        %4598 = vmatprep.subr.mxu0 0.0
        %4599 = vmatpush2.msra.mxu0 0.0
        %4600 = vmatprep.subr.mxu0 0.0
        %4601 = vmatpush2.msra.mxu0 0.0
        %4602 = vmatprep.mubr.f32.mxu0 0.0
        %4603 = vmatmul.mubr.f32.gmra.mxu0 %v4518
        %v4604 = vpop.f32.mrf.mxu0
        %v4605 = vadd.f32 0.0, %v4604
        %v4606 = vpop.f32.mrf.mxu0
        %4607 = vmatprep.mubr.f32.mxu0 0.0
        %4608 = vmatmul.mubr.f32.gmra.mxu0 %v4521
        %v4609 = vpop.f32.mrf.mxu0
        %v4610 = vadd.f32 0.0, %v4609
        %v4611 = vpop.f32.mrf.mxu0
        %4612 = vmatprep.mubr.f32.mxu0 0.0
        %4613 = vmatmul.mubr.f32.gmra.mxu0 %v4524
        %v4614 = vpop.f32.mrf.mxu0
        %v4615 = vadd.f32 0.0, %v4614
        %v4616 = vpop.f32.mrf.mxu0
        %4617 = vmatprep.mubr.f32.mxu0 0.0
        %4618 = vmatmul.mubr.f32.gmra.mxu0 %v4527
        %v4619 = vpop.f32.mrf.mxu0
        %v4620 = vadd.f32 0.0, %v4619
        %v4621 = vpop.f32.mrf.mxu0
        %4622 = vmatprep.mubr.f32.mxu0 0.0
        %4623 = vmatmul.mubr.f32.gmra.mxu0 %v4530
        %v4624 = vpop.f32.mrf.mxu0
        %v4625 = vadd.f32 0.0, %v4624
        %v4626 = vpop.f32.mrf.mxu0
        %4627 = vmatprep.mubr.f32.mxu0 0.0
        %4628 = vmatmul.mubr.f32.gmra.mxu0 %v4533
        %v4629 = vpop.f32.mrf.mxu0
        %v4630 = vadd.f32 0.0, %v4629
        %v4631 = vpop.f32.mrf.mxu0
        %4632 = vmatprep.mubr.f32.mxu0 0.0
        %4633 = vmatmul.mubr.f32.gmra.mxu0 %v4536
        %v4634 = vpop.f32.mrf.mxu0
        %v4635 = vadd.f32 0.0, %v4634
        %v4636 = vpop.f32.mrf.mxu0
        %4637 = vdwg.mxu0
        %v4638 = vadd.f32 %v4376, %v4605
        %v4639 = vadd.f32 %v4377, %v4610
        %v4640 = vadd.f32 %v4378, %v4615
        %v4641 = vadd.f32 %v4379, %v4620
        %v4642 = vadd.f32 %v4380, %v4625
        %v4643 = vadd.f32 %v4381, %v4630
        %v4644 = vadd.f32 %v4382, %v4635
        %s4645 = scalar_lea.vmem [#allocation4], 392
        %v4646 = vld [vmem:[%s4645] sm:$0xff]
        %v4647 = vld [vmem:[%s4645 + $0x8] sm:$0xff]
        %v4648 = vld [vmem:[%s4645 + $0x10] sm:$0xff]
        %v4649 = vld [vmem:[%s4645 + $0x18] sm:$0xff]
        %v4650 = vld [vmem:[%s4645 + $0x20] sm:$0xff]
        %v4651 = vld [vmem:[%s4645 + $0x28] sm:$0xff]
        %v4652 = vld [vmem:[%s4645 + $0x30] sm:$0x1]
        %v4654 = vsel %vm2829, %v4646, 0
        %v4657 = vsel %vm2829, %v4647, 0
        %v4660 = vsel %vm2829, %v4648, 0
        %v4663 = vsel %vm2829, %v4649, 0
        %v4666 = vsel %vm2829, %v4650, 0
        %v4669 = vsel %vm2829, %v4651, 0
        %v4672 = vsel %vm2829, %v4652, 0
        %4674 = vmatprep.subr.mxu0 0.0
        %4675 = vmatpush1.msra.mxu0 0.0
        %4676 = vmatprep.subr.mxu0 0.0
        %4677 = vmatpush1.msra.mxu0 0.0
        %4678 = vmatprep.subr.mxu0 0.0
        %4679 = vmatpush1.msra.mxu0 0.0
        %4680 = vmatprep.subr.mxu0 0.0
        %4681 = vmatpush1.msra.mxu0 0.0
        %4682 = vmatprep.subr.mxu0 0.0
        %4683 = vmatpush1.msra.mxu0 0.0
        %4684 = vmatprep.subr.mxu0 0.0
        %4685 = vmatpush1.msra.mxu0 0.0
        %4686 = vmatprep.subr.mxu0 0.0
        %4687 = vmatpush1.msra.mxu0 0.0
        %4688 = vmatprep.subr.mxu0 0.0
        %4689 = vmatpush1.msra.mxu0 0.0
        %4690 = vmatprep.subr.mxu0 0.0
        %4691 = vmatpush1.msra.mxu0 0.0
        %4692 = vmatprep.subr.mxu0 0.0
        %4693 = vmatpush1.msra.mxu0 %v2853
        %4694 = vmatprep.subr.mxu0 0.0
        %4695 = vmatpush1.msra.mxu0 %v2820
        %4696 = vmatprep.subr.mxu0 0.0
        %4697 = vmatpush1.msra.mxu0 %v2819
        %4698 = vmatprep.subr.mxu0 0.0
        %4699 = vmatpush1.msra.mxu0 %v2818
        %4700 = vmatprep.subr.mxu0 0.0
        %4701 = vmatpush1.msra.mxu0 %v2817
        %4702 = vmatprep.subr.mxu0 0.0
        %4703 = vmatpush1.msra.mxu0 %v2816
        %4704 = vmatprep.subr.mxu0 0.0
        %4705 = vmatpush1.msra.mxu0 %v2815
        %4706 = vmatprep.subr.mxu0 0.0
        %4707 = vmatpush2.msra.mxu0 0.0
        %4708 = vmatprep.subr.mxu0 0.0
        %4709 = vmatpush2.msra.mxu0 0.0
        %4710 = vmatprep.subr.mxu0 0.0
        %4711 = vmatpush2.msra.mxu0 0.0
        %4712 = vmatprep.subr.mxu0 0.0
        %4713 = vmatpush2.msra.mxu0 0.0
        %4714 = vmatprep.subr.mxu0 0.0
        %4715 = vmatpush2.msra.mxu0 0.0
        %4716 = vmatprep.subr.mxu0 0.0
        %4717 = vmatpush2.msra.mxu0 0.0
        %4718 = vmatprep.subr.mxu0 0.0
        %4719 = vmatpush2.msra.mxu0 0.0
        %4720 = vmatprep.subr.mxu0 0.0
        %4721 = vmatpush2.msra.mxu0 0.0
        %4722 = vmatprep.subr.mxu0 0.0
        %4723 = vmatpush2.msra.mxu0 0.0
        %4724 = vmatprep.subr.mxu0 0.0
        %4725 = vmatpush2.msra.mxu0 0.0
        %4726 = vmatprep.subr.mxu0 0.0
        %4727 = vmatpush2.msra.mxu0 0.0
        %4728 = vmatprep.subr.mxu0 0.0
        %4729 = vmatpush2.msra.mxu0 0.0
        %4730 = vmatprep.subr.mxu0 0.0
        %4731 = vmatpush2.msra.mxu0 0.0
        %4732 = vmatprep.subr.mxu0 0.0
        %4733 = vmatpush2.msra.mxu0 0.0
        %4734 = vmatprep.subr.mxu0 0.0
        %4735 = vmatpush2.msra.mxu0 0.0
        %4736 = vmatprep.subr.mxu0 0.0
        %4737 = vmatpush2.msra.mxu0 0.0
        %4738 = vmatprep.mubr.f32.mxu0 0.0
        %4739 = vmatmul.mubr.f32.gmra.mxu0 %v4654
        %v4740 = vpop.f32.mrf.mxu0
        %v4741 = vadd.f32 0.0, %v4740
        %v4742 = vpop.f32.mrf.mxu0
        %4743 = vmatprep.mubr.f32.mxu0 0.0
        %4744 = vmatmul.mubr.f32.gmra.mxu0 %v4657
        %v4745 = vpop.f32.mrf.mxu0
        %v4746 = vadd.f32 0.0, %v4745
        %v4747 = vpop.f32.mrf.mxu0
        %4748 = vmatprep.mubr.f32.mxu0 0.0
        %4749 = vmatmul.mubr.f32.gmra.mxu0 %v4660
        %v4750 = vpop.f32.mrf.mxu0
        %v4751 = vadd.f32 0.0, %v4750
        %v4752 = vpop.f32.mrf.mxu0
        %4753 = vmatprep.mubr.f32.mxu0 0.0
        %4754 = vmatmul.mubr.f32.gmra.mxu0 %v4663
        %v4755 = vpop.f32.mrf.mxu0
        %v4756 = vadd.f32 0.0, %v4755
        %v4757 = vpop.f32.mrf.mxu0
        %4758 = vmatprep.mubr.f32.mxu0 0.0
        %4759 = vmatmul.mubr.f32.gmra.mxu0 %v4666
        %v4760 = vpop.f32.mrf.mxu0
        %v4761 = vadd.f32 0.0, %v4760
        %v4762 = vpop.f32.mrf.mxu0
        %4763 = vmatprep.mubr.f32.mxu0 0.0
        %4764 = vmatmul.mubr.f32.gmra.mxu0 %v4669
        %v4765 = vpop.f32.mrf.mxu0
        %v4766 = vadd.f32 0.0, %v4765
        %v4767 = vpop.f32.mrf.mxu0
        %4768 = vmatprep.mubr.f32.mxu0 0.0
        %4769 = vmatmul.mubr.f32.gmra.mxu0 %v4672
        %v4770 = vpop.f32.mrf.mxu0
        %v4771 = vadd.f32 0.0, %v4770
        %v4772 = vpop.f32.mrf.mxu0
        %4773 = vdwg.mxu0
        %s4774 = scalar_lea.vmem %s13, 224
        %v4775 = vld [vmem:[%s4774] sm:$0xff]
        %v4776 = vld [vmem:[%s4774 + $0x8] sm:$0xff]
        %v4777 = vld [vmem:[%s4774 + $0x10] sm:$0xff]
        %v4778 = vld [vmem:[%s4774 + $0x18] sm:$0xff]
        %v4780 = vsel %vm561, %v4741, 0
        %v4783 = vsel %vm561, %v4746, 0
        %v4786 = vsel %vm561, %v4751, 0
        %v4789 = vsel %vm561, %v4756, 0
        %v4792 = vsel %vm561, %v4761, 0
        %v4795 = vsel %vm561, %v4766, 0
        %v4798 = vsel %vm561, %v4771, 0
        %4800 = vmatprep.subr.mxu0 0.0
        %4801 = vmatpush1.msra.mxu0 0.0
        %4802 = vmatprep.subr.mxu0 0.0
        %4803 = vmatpush1.msra.mxu0 0.0
        %4804 = vmatprep.subr.mxu0 0.0
        %4805 = vmatpush1.msra.mxu0 0.0
        %4806 = vmatprep.subr.mxu0 0.0
        %4807 = vmatpush1.msra.mxu0 0.0
        %4808 = vmatprep.subr.mxu0 0.0
        %4809 = vmatpush1.msra.mxu0 0.0
        %4810 = vmatprep.subr.mxu0 0.0
        %4811 = vmatpush1.msra.mxu0 0.0
        %4812 = vmatprep.subr.mxu0 0.0
        %4813 = vmatpush1.msra.mxu0 0.0
        %4814 = vmatprep.subr.mxu0 0.0
        %4815 = vmatpush1.msra.mxu0 0.0
        %4816 = vmatprep.subr.mxu0 0.0
        %4817 = vmatpush1.msra.mxu0 0.0
        %4818 = vmatprep.subr.mxu0 0.0
        %4819 = vmatpush1.msra.mxu0 0.0
        %4820 = vmatprep.subr.mxu0 0.0
        %4821 = vmatpush1.msra.mxu0 0.0
        %4822 = vmatprep.subr.mxu0 0.0
        %4823 = vmatpush1.msra.mxu0 0.0
        %4824 = vmatprep.subr.mxu0 0.0
        %4825 = vmatpush1.msra.mxu0 %v4778
        %4826 = vmatprep.subr.mxu0 0.0
        %4827 = vmatpush1.msra.mxu0 %v4777
        %4828 = vmatprep.subr.mxu0 0.0
        %4829 = vmatpush1.msra.mxu0 %v4776
        %4830 = vmatprep.subr.mxu0 0.0
        %4831 = vmatpush1.msra.mxu0 %v4775
        %4832 = vmatprep.subr.mxu0 0.0
        %4833 = vmatpush2.msra.mxu0 0.0
        %4834 = vmatprep.subr.mxu0 0.0
        %4835 = vmatpush2.msra.mxu0 0.0
        %4836 = vmatprep.subr.mxu0 0.0
        %4837 = vmatpush2.msra.mxu0 0.0
        %4838 = vmatprep.subr.mxu0 0.0
        %4839 = vmatpush2.msra.mxu0 0.0
        %4840 = vmatprep.subr.mxu0 0.0
        %4841 = vmatpush2.msra.mxu0 0.0
        %4842 = vmatprep.subr.mxu0 0.0
        %4843 = vmatpush2.msra.mxu0 0.0
        %4844 = vmatprep.subr.mxu0 0.0
        %4845 = vmatpush2.msra.mxu0 0.0
        %4846 = vmatprep.subr.mxu0 0.0
        %4847 = vmatpush2.msra.mxu0 0.0
        %4848 = vmatprep.subr.mxu0 0.0
        %4849 = vmatpush2.msra.mxu0 0.0
        %4850 = vmatprep.subr.mxu0 0.0
        %4851 = vmatpush2.msra.mxu0 0.0
        %4852 = vmatprep.subr.mxu0 0.0
        %4853 = vmatpush2.msra.mxu0 0.0
        %4854 = vmatprep.subr.mxu0 0.0
        %4855 = vmatpush2.msra.mxu0 0.0
        %4856 = vmatprep.subr.mxu0 0.0
        %4857 = vmatpush2.msra.mxu0 0.0
        %4858 = vmatprep.subr.mxu0 0.0
        %4859 = vmatpush2.msra.mxu0 0.0
        %4860 = vmatprep.subr.mxu0 0.0
        %4861 = vmatpush2.msra.mxu0 0.0
        %4862 = vmatprep.subr.mxu0 0.0
        %4863 = vmatpush2.msra.mxu0 0.0
        %4864 = vmatprep.mubr.f32.mxu0 0.0
        %4865 = vmatmul.mubr.f32.gmra.mxu0 %v4780
        %v4866 = vpop.f32.mrf.mxu0
        %v4867 = vadd.f32 0.0, %v4866
        %v4868 = vpop.f32.mrf.mxu0
        %4869 = vmatprep.mubr.f32.mxu0 0.0
        %4870 = vmatmul.mubr.f32.gmra.mxu0 %v4783
        %v4871 = vpop.f32.mrf.mxu0
        %v4872 = vadd.f32 0.0, %v4871
        %v4873 = vpop.f32.mrf.mxu0
        %4874 = vmatprep.mubr.f32.mxu0 0.0
        %4875 = vmatmul.mubr.f32.gmra.mxu0 %v4786
        %v4876 = vpop.f32.mrf.mxu0
        %v4877 = vadd.f32 0.0, %v4876
        %v4878 = vpop.f32.mrf.mxu0
        %4879 = vmatprep.mubr.f32.mxu0 0.0
        %4880 = vmatmul.mubr.f32.gmra.mxu0 %v4789
        %v4881 = vpop.f32.mrf.mxu0
        %v4882 = vadd.f32 0.0, %v4881
        %v4883 = vpop.f32.mrf.mxu0
        %4884 = vmatprep.mubr.f32.mxu0 0.0
        %4885 = vmatmul.mubr.f32.gmra.mxu0 %v4792
        %v4886 = vpop.f32.mrf.mxu0
        %v4887 = vadd.f32 0.0, %v4886
        %v4888 = vpop.f32.mrf.mxu0
        %4889 = vmatprep.mubr.f32.mxu0 0.0
        %4890 = vmatmul.mubr.f32.gmra.mxu0 %v4795
        %v4891 = vpop.f32.mrf.mxu0
        %v4892 = vadd.f32 0.0, %v4891
        %v4893 = vpop.f32.mrf.mxu0
        %4894 = vmatprep.mubr.f32.mxu0 0.0
        %4895 = vmatmul.mubr.f32.gmra.mxu0 %v4798
        %v4896 = vpop.f32.mrf.mxu0
        %v4897 = vadd.f32 0.0, %v4896
        %v4898 = vpop.f32.mrf.mxu0
        %4899 = vdwg.mxu0
        %v4900 = vadd.f32 %v4638, %v4867
        %v4901 = vadd.f32 %v4639, %v4872
        %v4902 = vadd.f32 %v4640, %v4877
        %v4903 = vadd.f32 %v4641, %v4882
        %v4904 = vadd.f32 %v4642, %v4887
        %v4905 = vadd.f32 %v4643, %v4892
        %v4906 = vadd.f32 %v4644, %v4897
        %s4907 = scalar_lea.vmem [#allocation4], 448
        %v4908 = vld [vmem:[%s4907] sm:$0xff]
        %v4909 = vld [vmem:[%s4907 + $0x8] sm:$0xff]
        %v4910 = vld [vmem:[%s4907 + $0x10] sm:$0xff]
        %v4911 = vld [vmem:[%s4907 + $0x18] sm:$0xff]
        %v4912 = vld [vmem:[%s4907 + $0x20] sm:$0xff]
        %v4913 = vld [vmem:[%s4907 + $0x28] sm:$0xff]
        %v4914 = vld [vmem:[%s4907 + $0x30] sm:$0x1]
        %v4916 = vsel %vm2829, %v4908, 0
        %v4919 = vsel %vm2829, %v4909, 0
        %v4922 = vsel %vm2829, %v4910, 0
        %v4925 = vsel %vm2829, %v4911, 0
        %v4928 = vsel %vm2829, %v4912, 0
        %v4931 = vsel %vm2829, %v4913, 0
        %v4934 = vsel %vm2829, %v4914, 0
        %4936 = vmatprep.subr.mxu0 0.0
        %4937 = vmatpush1.msra.mxu0 0.0
        %4938 = vmatprep.subr.mxu0 0.0
        %4939 = vmatpush1.msra.mxu0 0.0
        %4940 = vmatprep.subr.mxu0 0.0
        %4941 = vmatpush1.msra.mxu0 0.0
        %4942 = vmatprep.subr.mxu0 0.0
        %4943 = vmatpush1.msra.mxu0 0.0
        %4944 = vmatprep.subr.mxu0 0.0
        %4945 = vmatpush1.msra.mxu0 0.0
        %4946 = vmatprep.subr.mxu0 0.0
        %4947 = vmatpush1.msra.mxu0 0.0
        %4948 = vmatprep.subr.mxu0 0.0
        %4949 = vmatpush1.msra.mxu0 0.0
        %4950 = vmatprep.subr.mxu0 0.0
        %4951 = vmatpush1.msra.mxu0 0.0
        %4952 = vmatprep.subr.mxu0 0.0
        %4953 = vmatpush1.msra.mxu0 0.0
        %4954 = vmatprep.subr.mxu0 0.0
        %4955 = vmatpush1.msra.mxu0 %v2853
        %4956 = vmatprep.subr.mxu0 0.0
        %4957 = vmatpush1.msra.mxu0 %v2820
        %4958 = vmatprep.subr.mxu0 0.0
        %4959 = vmatpush1.msra.mxu0 %v2819
        %4960 = vmatprep.subr.mxu0 0.0
        %4961 = vmatpush1.msra.mxu0 %v2818
        %4962 = vmatprep.subr.mxu0 0.0
        %4963 = vmatpush1.msra.mxu0 %v2817
        %4964 = vmatprep.subr.mxu0 0.0
        %4965 = vmatpush1.msra.mxu0 %v2816
        %4966 = vmatprep.subr.mxu0 0.0
        %4967 = vmatpush1.msra.mxu0 %v2815
        %4968 = vmatprep.subr.mxu0 0.0
        %4969 = vmatpush2.msra.mxu0 0.0
        %4970 = vmatprep.subr.mxu0 0.0
        %4971 = vmatpush2.msra.mxu0 0.0
        %4972 = vmatprep.subr.mxu0 0.0
        %4973 = vmatpush2.msra.mxu0 0.0
        %4974 = vmatprep.subr.mxu0 0.0
        %4975 = vmatpush2.msra.mxu0 0.0
        %4976 = vmatprep.subr.mxu0 0.0
        %4977 = vmatpush2.msra.mxu0 0.0
        %4978 = vmatprep.subr.mxu0 0.0
        %4979 = vmatpush2.msra.mxu0 0.0
        %4980 = vmatprep.subr.mxu0 0.0
        %4981 = vmatpush2.msra.mxu0 0.0
        %4982 = vmatprep.subr.mxu0 0.0
        %4983 = vmatpush2.msra.mxu0 0.0
        %4984 = vmatprep.subr.mxu0 0.0
        %4985 = vmatpush2.msra.mxu0 0.0
        %4986 = vmatprep.subr.mxu0 0.0
        %4987 = vmatpush2.msra.mxu0 0.0
        %4988 = vmatprep.subr.mxu0 0.0
        %4989 = vmatpush2.msra.mxu0 0.0
        %4990 = vmatprep.subr.mxu0 0.0
        %4991 = vmatpush2.msra.mxu0 0.0
        %4992 = vmatprep.subr.mxu0 0.0
        %4993 = vmatpush2.msra.mxu0 0.0
        %4994 = vmatprep.subr.mxu0 0.0
        %4995 = vmatpush2.msra.mxu0 0.0
        %4996 = vmatprep.subr.mxu0 0.0
        %4997 = vmatpush2.msra.mxu0 0.0
        %4998 = vmatprep.subr.mxu0 0.0
        %4999 = vmatpush2.msra.mxu0 0.0
        %5000 = vmatprep.mubr.f32.mxu0 0.0
        %5001 = vmatmul.mubr.f32.gmra.mxu0 %v4916
        %v5002 = vpop.f32.mrf.mxu0
        %v5003 = vadd.f32 0.0, %v5002
        %v5004 = vpop.f32.mrf.mxu0
        %5005 = vmatprep.mubr.f32.mxu0 0.0
        %5006 = vmatmul.mubr.f32.gmra.mxu0 %v4919
        %v5007 = vpop.f32.mrf.mxu0
        %v5008 = vadd.f32 0.0, %v5007
        %v5009 = vpop.f32.mrf.mxu0
        %5010 = vmatprep.mubr.f32.mxu0 0.0
        %5011 = vmatmul.mubr.f32.gmra.mxu0 %v4922
        %v5012 = vpop.f32.mrf.mxu0
        %v5013 = vadd.f32 0.0, %v5012
        %v5014 = vpop.f32.mrf.mxu0
        %5015 = vmatprep.mubr.f32.mxu0 0.0
        %5016 = vmatmul.mubr.f32.gmra.mxu0 %v4925
        %v5017 = vpop.f32.mrf.mxu0
        %v5018 = vadd.f32 0.0, %v5017
        %v5019 = vpop.f32.mrf.mxu0
        %5020 = vmatprep.mubr.f32.mxu0 0.0
        %5021 = vmatmul.mubr.f32.gmra.mxu0 %v4928
        %v5022 = vpop.f32.mrf.mxu0
        %v5023 = vadd.f32 0.0, %v5022
        %v5024 = vpop.f32.mrf.mxu0
        %5025 = vmatprep.mubr.f32.mxu0 0.0
        %5026 = vmatmul.mubr.f32.gmra.mxu0 %v4931
        %v5027 = vpop.f32.mrf.mxu0
        %v5028 = vadd.f32 0.0, %v5027
        %v5029 = vpop.f32.mrf.mxu0
        %5030 = vmatprep.mubr.f32.mxu0 0.0
        %5031 = vmatmul.mubr.f32.gmra.mxu0 %v4934
        %v5032 = vpop.f32.mrf.mxu0
        %v5033 = vadd.f32 0.0, %v5032
        %v5034 = vpop.f32.mrf.mxu0
        %5035 = vdwg.mxu0
        %s5036 = scalar_lea.vmem %s13, 256
        %v5037 = vld [vmem:[%s5036] sm:$0xff]
        %v5038 = vld [vmem:[%s5036 + $0x8] sm:$0xff]
        %v5039 = vld [vmem:[%s5036 + $0x10] sm:$0xff]
        %v5040 = vld [vmem:[%s5036 + $0x18] sm:$0xff]
        %v5042 = vsel %vm561, %v5003, 0
        %v5045 = vsel %vm561, %v5008, 0
        %v5048 = vsel %vm561, %v5013, 0
        %v5051 = vsel %vm561, %v5018, 0
        %v5054 = vsel %vm561, %v5023, 0
        %v5057 = vsel %vm561, %v5028, 0
        %v5060 = vsel %vm561, %v5033, 0
        %5062 = vmatprep.subr.mxu0 0.0
        %5063 = vmatpush1.msra.mxu0 0.0
        %5064 = vmatprep.subr.mxu0 0.0
        %5065 = vmatpush1.msra.mxu0 0.0
        %5066 = vmatprep.subr.mxu0 0.0
        %5067 = vmatpush1.msra.mxu0 0.0
        %5068 = vmatprep.subr.mxu0 0.0
        %5069 = vmatpush1.msra.mxu0 0.0
        %5070 = vmatprep.subr.mxu0 0.0
        %5071 = vmatpush1.msra.mxu0 0.0
        %5072 = vmatprep.subr.mxu0 0.0
        %5073 = vmatpush1.msra.mxu0 0.0
        %5074 = vmatprep.subr.mxu0 0.0
        %5075 = vmatpush1.msra.mxu0 0.0
        %5076 = vmatprep.subr.mxu0 0.0
        %5077 = vmatpush1.msra.mxu0 0.0
        %5078 = vmatprep.subr.mxu0 0.0
        %5079 = vmatpush1.msra.mxu0 0.0
        %5080 = vmatprep.subr.mxu0 0.0
        %5081 = vmatpush1.msra.mxu0 0.0
        %5082 = vmatprep.subr.mxu0 0.0
        %5083 = vmatpush1.msra.mxu0 0.0
        %5084 = vmatprep.subr.mxu0 0.0
        %5085 = vmatpush1.msra.mxu0 0.0
        %5086 = vmatprep.subr.mxu0 0.0
        %5087 = vmatpush1.msra.mxu0 %v5040
        %5088 = vmatprep.subr.mxu0 0.0
        %5089 = vmatpush1.msra.mxu0 %v5039
        %5090 = vmatprep.subr.mxu0 0.0
        %5091 = vmatpush1.msra.mxu0 %v5038
        %5092 = vmatprep.subr.mxu0 0.0
        %5093 = vmatpush1.msra.mxu0 %v5037
        %5094 = vmatprep.subr.mxu0 0.0
        %5095 = vmatpush2.msra.mxu0 0.0
        %5096 = vmatprep.subr.mxu0 0.0
        %5097 = vmatpush2.msra.mxu0 0.0
        %5098 = vmatprep.subr.mxu0 0.0
        %5099 = vmatpush2.msra.mxu0 0.0
        %5100 = vmatprep.subr.mxu0 0.0
        %5101 = vmatpush2.msra.mxu0 0.0
        %5102 = vmatprep.subr.mxu0 0.0
        %5103 = vmatpush2.msra.mxu0 0.0
        %5104 = vmatprep.subr.mxu0 0.0
        %5105 = vmatpush2.msra.mxu0 0.0
        %5106 = vmatprep.subr.mxu0 0.0
        %5107 = vmatpush2.msra.mxu0 0.0
        %5108 = vmatprep.subr.mxu0 0.0
        %5109 = vmatpush2.msra.mxu0 0.0
        %5110 = vmatprep.subr.mxu0 0.0
        %5111 = vmatpush2.msra.mxu0 0.0
        %5112 = vmatprep.subr.mxu0 0.0
        %5113 = vmatpush2.msra.mxu0 0.0
        %5114 = vmatprep.subr.mxu0 0.0
        %5115 = vmatpush2.msra.mxu0 0.0
        %5116 = vmatprep.subr.mxu0 0.0
        %5117 = vmatpush2.msra.mxu0 0.0
        %5118 = vmatprep.subr.mxu0 0.0
        %5119 = vmatpush2.msra.mxu0 0.0
        %5120 = vmatprep.subr.mxu0 0.0
        %5121 = vmatpush2.msra.mxu0 0.0
        %5122 = vmatprep.subr.mxu0 0.0
        %5123 = vmatpush2.msra.mxu0 0.0
        %5124 = vmatprep.subr.mxu0 0.0
        %5125 = vmatpush2.msra.mxu0 0.0
        %5126 = vmatprep.mubr.f32.mxu0 0.0
        %5127 = vmatmul.mubr.f32.gmra.mxu0 %v5042
        %v5128 = vpop.f32.mrf.mxu0
        %v5129 = vadd.f32 0.0, %v5128
        %v5130 = vpop.f32.mrf.mxu0
        %5131 = vmatprep.mubr.f32.mxu0 0.0
        %5132 = vmatmul.mubr.f32.gmra.mxu0 %v5045
        %v5133 = vpop.f32.mrf.mxu0
        %v5134 = vadd.f32 0.0, %v5133
        %v5135 = vpop.f32.mrf.mxu0
        %5136 = vmatprep.mubr.f32.mxu0 0.0
        %5137 = vmatmul.mubr.f32.gmra.mxu0 %v5048
        %v5138 = vpop.f32.mrf.mxu0
        %v5139 = vadd.f32 0.0, %v5138
        %v5140 = vpop.f32.mrf.mxu0
        %5141 = vmatprep.mubr.f32.mxu0 0.0
        %5142 = vmatmul.mubr.f32.gmra.mxu0 %v5051
        %v5143 = vpop.f32.mrf.mxu0
        %v5144 = vadd.f32 0.0, %v5143
        %v5145 = vpop.f32.mrf.mxu0
        %5146 = vmatprep.mubr.f32.mxu0 0.0
        %5147 = vmatmul.mubr.f32.gmra.mxu0 %v5054
        %v5148 = vpop.f32.mrf.mxu0
        %v5149 = vadd.f32 0.0, %v5148
        %v5150 = vpop.f32.mrf.mxu0
        %5151 = vmatprep.mubr.f32.mxu0 0.0
        %5152 = vmatmul.mubr.f32.gmra.mxu0 %v5057
        %v5153 = vpop.f32.mrf.mxu0
        %v5154 = vadd.f32 0.0, %v5153
        %v5155 = vpop.f32.mrf.mxu0
        %5156 = vmatprep.mubr.f32.mxu0 0.0
        %5157 = vmatmul.mubr.f32.gmra.mxu0 %v5060
        %v5158 = vpop.f32.mrf.mxu0
        %v5159 = vadd.f32 0.0, %v5158
        %v5160 = vpop.f32.mrf.mxu0
        %5161 = vdwg.mxu0
        %v5162 = vadd.f32 %v4900, %v5129
        %v5163 = vadd.f32 %v4901, %v5134
        %v5164 = vadd.f32 %v4902, %v5139
        %v5165 = vadd.f32 %v4903, %v5144
        %v5166 = vadd.f32 %v4904, %v5149
        %v5167 = vadd.f32 %v4905, %v5154
        %v5168 = vadd.f32 %v4906, %v5159
        %v5169 = vld [vmem:[%s14] sm:$0x1]
        %v5171 = vlaneseq
        %v5172 = vshrl.u32 %v5171, 7
        %v5173 = vsub.s32 0, %v5172
        %v5174 = vrot.slane %v5169, %v5173
        %v5176 = vadd.f32 %v5162, %v5174
        %v5177 = vadd.f32 %v5163, %v5174
        %v5178 = vadd.f32 %v5164, %v5174
        %v5179 = vadd.f32 %v5165, %v5174
        %v5180 = vadd.f32 %v5166, %v5174
        %v5181 = vadd.f32 %v5167, %v5174
        %v5182 = vadd.f32 %v5168, %v5174
        %v5183 = vmax.f32 %v5176, 0.0
        %v5184 = vmax.f32 %v5177, 0.0
        %v5185 = vmax.f32 %v5178, 0.0
        %v5186 = vmax.f32 %v5179, 0.0
        %v5187 = vmax.f32 %v5180, 0.0
        %v5188 = vmax.f32 %v5181, 0.0
        %v5189 = vmax.f32 %v5182, 0.0
        %5190 = vst.msk [vmem:[%s541] sm:$0xff] %vm561, %v5183
        %5191 = vst.msk [vmem:[%s541 + $0x8] sm:$0xff] %vm561, %v5184
        %5192 = vst.msk [vmem:[%s541 + $0x10] sm:$0xff] %vm561, %v5185
        %5193 = vst.msk [vmem:[%s541 + $0x18] sm:$0xff] %vm561, %v5186
        %5194 = vst.msk [vmem:[%s541 + $0x20] sm:$0xff] %vm561, %v5187
        %5195 = vst.msk [vmem:[%s541 + $0x28] sm:$0xff] %vm561, %v5188
        %5196 = vst.msk [vmem:[%s541 + $0x30] sm:$0x1] %vm2727, %v5189
        %p5197 = scmp.lt.s32.totalorder %s28, 1
        %s5198 = scalar_select %p5197, %s28, 1
        %s5199 = smul.addr %s5198, 7
        %s5200 = smul.addr %s5199, 8
        %s5201 = scalar_lea.vmem %s15, %s5200
        // Predicated region
        $region89: #{gate_forward.1} parent=79 // pred_check
          %p5202 = pneg %p371
        $region90: #{gate_forward.1} parent=79 // pred_check_branch
          %5204 = sbr.rel (%p5202) target = $region92
        $region91: #{gate_forward.1} parent=79 // pred_region
          _
        $region92: #{gate_forward.1} parent=79 // pred_fallthru
          _
      $region80: #{gate_forward.1} parent=5 // pred_fallthru
        _
      %p5205 = scmp.le.s32.totalorder 2, %s23
      // Predicated region
      $region93: #{gate_forward.1} parent=5 // pred_check
        %p5206 = pneg %p5205
      $region94: #{gate_forward.1} parent=5 // pred_check_branch
        %5208 = sbr.rel (%p5206) target = $region96
      $region95: #{gate_forward.1} parent=5 // pred_region
        %s5209 = ssub.s32 %s23, 2
        // Predicated region
        $region97: #{gate_forward.1} parent=95 // pred_check
          %p5210 = pneg %p377
        $region98: #{gate_forward.1} parent=95 // pred_check_branch
          %5212 = sbr.rel (%p5210) target = $region100
        $region99: #{gate_forward.1} parent=95 // pred_region
          %p5213 = scmp.lt.s32.totalorder %s29, 1
          %s5214 = scalar_select %p5213, %s29, 1
          %s5215 = smul.addr %s5214, 7
          %s5216 = smul.addr %s5215, 8
          %s5217 = scalar_lea.vmem %s15, %s5216
        $region100: #{gate_forward.1} parent=95 // pred_fallthru
          _
      $region96: #{gate_forward.1} parent=5 // pred_fallthru
        _
    $region6: #{gate_forward.1} parent=1 // loop_footer
      %s27 = sadd.s32 1, %s23
    $region7: #{gate_forward.1} parent=1 // loop_footer_branch
      %22 = sbr.rel target = $region3
    $region8: #{gate_forward.1} parent=1 // loop_exit
      _
    %5218 = vsyncpa [#allocation3], 1
    %s5219 = scalar_lea.sflag [#allocation3], 1
    %5220 = vsyncpa %s5219, 1
    %5221 = vsyncpa [#allocation5], 1

</llo_original>
